<compile_context>
chip_gen: v5e
topology: v5e:2x2
jax: 0.10.0
libtpu: 0.0.40
codegen_flags: <defaults>
</compile_context>

<pallas_src>
import math

import jax
import jax.numpy as jnp
from jax.experimental import pallas as pl
from jax.experimental.pallas import tpu as pltpu

_LN_EPS = 1e-5
_BN_EPS = 1e-5

_WINDOWS = (3, 5, 7)        # DwMlp window sizes
_DW_HEADS = (2, 3, 3)       # heads per dw-conv group
_HEAD_SPLITS = (2, 3, 3)    # attention heads per bucket group


def _gelu(x):
    # tanh approximation of GELU (PyTorch nn.GELU default is exact erf).
    c = math.sqrt(2.0 / math.pi)
    return 0.5 * x * (1.0 + jnp.tanh(c * (x + 0.044715 * x * x * x)))


def _layernorm(x, g, b):
    mu = jnp.mean(x, axis=-1, keepdims=True)
    xc = x - mu
    var = jnp.mean(xc * xc, axis=-1, keepdims=True)
    return xc * jax.lax.rsqrt(var + _LN_EPS) * g + b


def _z_layout(n_buckets):
    """Per-head (offset, size) of the z-projection columns."""
    bucket_list = (n_buckets * 2, n_buckets, n_buckets // 2)
    z_offsets, z_sizes = [], []
    off = 0
    for hn, nb in zip(_HEAD_SPLITS, bucket_list):
        for _ in range(hn):
            z_offsets.append(off)
            z_sizes.append(nb)
            off += nb
    return tuple(z_offsets), tuple(z_sizes)


# ------------------------- the single fused kernel ---------------------------
def _make_fused_kernel(*, N, C, Ndx, Cdx, H, W, num_heads, scale,
                       z_offsets, z_sizes, max_ksz):
    d = C // num_heads
    Z = sum(z_sizes)
    pad = max_ksz // 2
    Hp, Wp = H + 2 * pad, W + 2 * pad
    dn_t0 = (((0,), (0,)), ((), ()))   # contract axis 0 with axis 0 (lhs^T @ rhs)
    dn_t1 = (((1,), (1,)), ((), ()))   # contract axis 1 with axis 1 (lhs @ rhs^T)

    def kernel(x_ref, dx_ref, vc_ref, vd_ref, vh_ref, wq_ref, wkvz_ref,
               mask_ref, dww_ref, w1_ref, w2_ref, o_ref, xp_ref):
        f32 = jnp.float32
        bf16 = jnp.bfloat16

        # ---------- inputs for this batch element (transpose folded in) ------
        x_nc = jnp.transpose(x_ref[0])                 # (C, N) -> (N, C)
        dx_cn = dx_ref[0]                              # (Cdx, Ndx), channel-major

        # ---------- LN1 + q projection ----------
        xn1 = _layernorm(x_nc, vc_ref[0], vc_ref[1])
        q = jnp.dot(xn1.astype(bf16), wq_ref[...],
                    preferred_element_type=f32)        # (N, C)

        # ---------- LN1_1 (channel-major, transpose-free) + fused kv|z -------
        mu = jnp.mean(dx_cn, axis=0, keepdims=True)
        dc = dx_cn - mu
        var = jnp.mean(dc * dc, axis=0, keepdims=True)
        dxn = dc * jax.lax.rsqrt(var + _LN_EPS) * vd_ref[:, 0:1] + vd_ref[:, 1:2]
        kvz = jax.lax.dot_general(dxn.astype(bf16), wkvz_ref[...], dn_t0,
                                  preferred_element_type=f32)   # (Ndx, 2C+Z)

        kv = kvz[:, :2 * C]                            # (Ndx, 2C) = [k | v]
        zraw = kvz[:, 2 * C:]                          # (Ndx, Z)

        # ---------- z softmax over Ndx, full width, once ----------
        zm = jnp.max(zraw, axis=0, keepdims=True)
        ze = jnp.exp(zraw - zm)
        zp = ze / jnp.sum(ze, axis=0, keepdims=True)   # exact division

        # ---------- bucketed k/v for all heads in ONE matmul ----------
        kbvb = jax.lax.dot_general(zp.astype(bf16), kv.astype(bf16), dn_t0,
                                   preferred_element_type=f32)  # (Z, 2C)
        mask = mask_ref[...]                           # (Z, C) block-diagonal
        kb = (kbvb[:, :C] * mask).astype(bf16)         # (Z, C)
        vb = (kbvb[:, C:] * mask).astype(bf16)         # (Z, C)

        # ---------- scores for all heads in ONE matmul ----------
        s = jax.lax.dot_general(q.astype(bf16), kb, dn_t1,
                                preferred_element_type=f32) * scale  # (N, Z)

        # ---------- per-head bucket softmax; output via masked vb slabs ------
        attn_out = jnp.zeros((N, C), f32)
        for h in range(num_heads):
            zo, nb = z_offsets[h], z_sizes[h]
            sl = s[:, zo:zo + nb]
            smax = jnp.max(sl, axis=-1, keepdims=True)
            e = jnp.exp(sl - smax)
            p = e * pl.reciprocal(jnp.sum(e, axis=-1, keepdims=True), approx=True)
            # vb rows zo:zo+nb are nonzero only on head h's channels ->
            # summing over heads yields the concatenated (N, C) output.
            attn_out = attn_out + jnp.dot(p.astype(bf16), vb[zo:zo + nb, :],
                                          preferred_element_type=f32)

        # ---------- residual + LN2 ----------
        # TODO(synk): self.crpe is an externally injected module (default None)
        # and is not defined in the reference source; its additive term is
        # omitted.
        x1 = x_nc + attn_out
        xn2 = _layernorm(x1, vc_ref[2], vc_ref[3])

        # ---------- merged depthwise conv (halo padded in VMEM) + BN + GELU --
        xp_ref[...] = jnp.zeros((Hp, Wp, C), f32)
        xp_ref[pad:pad + H, pad:pad + W, :] = xn2.reshape(H, W, C)
        acc = jnp.zeros((H, W, C), f32)
        for ki in range(max_ksz):
            for kj in range(max_ksz):
                acc = acc + xp_ref[ki:ki + H, kj:kj + W, :] * dww_ref[ki * max_ksz + kj]
        conv = _gelu((acc + vc_ref[4]) * vc_ref[5] + vc_ref[6]).reshape(N, C)

        # ---------- fc1+BN+GELU -> fc2+BN+GELU -> residual ----------
        h1 = jnp.dot(conv.astype(bf16), w1_ref[...], preferred_element_type=f32)
        h1 = _gelu((h1 + vh_ref[0]) * vh_ref[1] + vh_ref[2])
        y = jnp.dot(h1.astype(bf16), w2_ref[...], preferred_element_type=f32)
        y = _gelu((y + vc_ref[7]) * vc_ref[8] + vc_ref[9])

        # transpose folded into the kernel: store channel-major (C, N)
        o_ref[0] = jnp.transpose(x1 + y)

    return kernel


# ------------------------------ parameter init --------------------------------
def init_params(key, dim, dedim, num_heads, n_buckets):
    head_dim = dim // num_heads
    z_offsets, z_sizes = _z_layout(n_buckets)
    Z = sum(z_sizes)
    hidden = 4 * dim
    ks = jax.random.split(key, 8)

    def w(k, shape):
        return jax.random.normal(k, shape, jnp.float32) * 0.05

    def bn_s(c):
        return jnp.ones((c,), jnp.float32) / jnp.sqrt(1.0 + _BN_EPS)

    ones_c = jnp.ones((dim,), jnp.float32)
    zeros_c = jnp.zeros((dim,), jnp.float32)

    # packed per-channel vectors (row index documented in the kernel)
    vec_c = jnp.stack([
        ones_c, zeros_c,                  # 0,1  ln2-norm1 gamma/beta (LN1)
        ones_c, zeros_c,                  # 2,3  LN2 gamma/beta
        zeros_c, bn_s(dim), zeros_c,      # 4,5,6 dwconv bias, BN scale, BN shift
        zeros_c, bn_s(dim), zeros_c,      # 7,8,9 fc2 bias, BN scale, BN shift
    ], axis=0)
    ln1d_gb = jnp.stack([jnp.ones((dedim,), jnp.float32),
                         jnp.zeros((dedim,), jnp.float32)], axis=1)  # (dedim, 2)
    vec_h = jnp.stack([jnp.zeros((hidden,), jnp.float32),
                       bn_s(hidden), jnp.zeros((hidden,), jnp.float32)], axis=0)

    # block-diagonal per-head channel mask for the bucketed k/v
    mask = jnp.zeros((Z, dim), jnp.float32)
    for h, (zo, nb) in enumerate(zip(z_offsets, z_sizes)):
        mask = mask.at[zo:zo + nb, h * head_dim:(h + 1) * head_dim].set(1.0)

    # combined kv | z projection weight (one widened matmul)
    wkv = w(ks[1], (dedim, 2 * dim))
    wz = w(ks[2], (dedim, Z))

    # merged depthwise weight table: each group's (ksz,ksz) kernel embedded
    # (zero-padded) at the center of a max_ksz x max_ksz tap grid.
    max_ksz = max(_WINDOWS)
    dw_w = jnp.zeros((max_ksz * max_ksz, dim), jnp.float32)
    dw_keys = jax.random.split(ks[5], len(_WINDOWS))
    coff = 0
    for gi, (ksz, hn) in enumerate(zip(_WINDOWS, _DW_HEADS)):
        cg = hn * head_dim
        wg = w(dw_keys[gi], (ksz, ksz, cg))
        off = (max_ksz - ksz) // 2
        wg_p = jnp.pad(wg, ((off, max_ksz - ksz - off),
                            (off, max_ksz - ksz - off), (0, 0)))
        dw_w = dw_w.at[:, coff:coff + cg].set(wg_p.reshape(max_ksz * max_ksz, cg))
        coff += cg

    return {
        'vec_c': vec_c, 'ln1d_gb': ln1d_gb, 'vec_h': vec_h,
        'wq': w(ks[0], (dim, dim)).astype(jnp.bfloat16),                    # no bias
        'w_kvz': jnp.concatenate([wkv, wz], axis=1).astype(jnp.bfloat16),   # no bias
        'mask_zc': mask,
        'dw_w': dw_w,
        'fc1_w': w(ks[3], (dim, hidden)).astype(jnp.bfloat16),
        'fc2_w': w(ks[4], (hidden, dim)).astype(jnp.bfloat16),
    }


# --------------------------------- forward ------------------------------------
def newde_block_forward(params, x_nchw, dx_nchw, num_heads=8, n_buckets=8):
    B, C, H, W = x_nchw.shape
    _, Cdx, Hdx, Wdx = dx_nchw.shape
    N, Ndx = H * W, Hdx * Wdx
    d = C // num_heads
    scale = d ** (-0.5)

    z_offsets, z_sizes = _z_layout(n_buckets)
    Z = sum(z_sizes)
    max_ksz = max(_WINDOWS)
    pad = max_ksz // 2
    Hp, Wp = H + 2 * pad, W + 2 * pad
    hidden = params['fc1_w'].shape[1]

    # channel-major views: pure reshapes, no XLA transpose (transposes are
    # folded into the kernel).
    x_cn = x_nchw.reshape(B, C, N)
    dx_cn = dx_nchw.reshape(B, Cdx, Ndx)

    kern = _make_fused_kernel(N=N, C=C, Ndx=Ndx, Cdx=Cdx, H=H, W=W,
                              num_heads=num_heads, scale=scale,
                              z_offsets=z_offsets, z_sizes=z_sizes,
                              max_ksz=max_ksz)

    out_cn = pl.pallas_call(
        kern,
        out_shape=jax.ShapeDtypeStruct((B, C, N), jnp.float32),
        grid=(B,),
        in_specs=[
            pl.BlockSpec((1, C, N), lambda i: (i, 0, 0)),          # x (channel-major)
            pl.BlockSpec((1, Cdx, Ndx), lambda i: (i, 0, 0)),      # dx (channel-major)
            pl.BlockSpec((10, C), lambda i: (0, 0)),               # packed per-C vectors
            pl.BlockSpec((Cdx, 2), lambda i: (0, 0)),              # ln1_1 gamma/beta cols
            pl.BlockSpec((3, hidden), lambda i: (0, 0)),           # fc1 bias/BN
            pl.BlockSpec((C, C), lambda i: (0, 0)),                # wq
            pl.BlockSpec((Cdx, 2 * C + Z), lambda i: (0, 0)),      # w_kv | w_z
            pl.BlockSpec((Z, C), lambda i: (0, 0)),                # head mask
            pl.BlockSpec((max_ksz * max_ksz, C), lambda i: (0, 0)),  # dw tap table
            pl.BlockSpec((C, hidden), lambda i: (0, 0)),           # fc1_w
            pl.BlockSpec((hidden, C), lambda i: (0, 0)),           # fc2_w
        ],
        out_specs=pl.BlockSpec((1, C, N), lambda i: (i, 0, 0)),
        scratch_shapes=[pltpu.VMEM((Hp, Wp, C), jnp.float32)],      # conv halo pad
        compiler_params=pltpu.CompilerParams(dimension_semantics=("parallel",)),
    )(x_cn, dx_cn, params['vec_c'], params['ln1d_gb'], params['vec_h'],
      params['wq'], params['w_kvz'], params['mask_zc'], params['dw_w'],
      params['fc1_w'], params['fc2_w'])

    x_out = out_cn.reshape(B, C, H, W)
    return [x_out, dx_nchw]


newde_block_forward_jit = jax.jit(newde_block_forward,
                                  static_argnames=("num_heads", "n_buckets"))


if __name__ == "__main__":
    key = jax.random.PRNGKey(0)
    dim, dedim, num_heads, n_buckets = 64, 32, 8, 8
    B, H, W = 2, 8, 8
    Hdx, Wdx = 4, 4

    kx, kdx, kp = jax.random.split(key, 3)
    x = jax.random.normal(kx, (B, dim, H, W), jnp.float32)
    dx = jax.random.normal(kdx, (B, dedim, Hdx, Wdx), jnp.float32)
    params = init_params(kp, dim, dedim, num_heads, n_buckets)

    out_x, out_dx = newde_block_forward_jit(params, x, dx,
                                            num_heads=num_heads, n_buckets=n_buckets)
    jax.block_until_ready(out_x)
    jax.block_until_ready(out_dx)

    assert out_x.shape == (B, dim, H, W)
    assert out_dx.shape == (B, dedim, Hdx, Wdx)
    assert bool(jnp.all(jnp.isfinite(out_x)))
    print("KERNEL_OK")
</pallas_src>

<mosaic_0001>
module attributes {stable_mosaic.version = 11 : i64} {
  func.func @kernel(%arg0: i32, %arg1: memref<1x64x64xf32, #tpu.memory_space<vmem>>, %arg2: memref<1x32x16xf32, #tpu.memory_space<vmem>>, %arg3: memref<10x64xf32, #tpu.memory_space<vmem>>, %arg4: memref<32x2xf32, #tpu.memory_space<vmem>>, %arg5: memref<3x256xf32, #tpu.memory_space<vmem>>, %arg6: memref<64x64xbf16, #tpu.memory_space<vmem>>, %arg7: memref<32x196xbf16, #tpu.memory_space<vmem>>, %arg8: memref<68x64xf32, #tpu.memory_space<vmem>>, %arg9: memref<49x64xf32, #tpu.memory_space<vmem>>, %arg10: memref<64x256xbf16, #tpu.memory_space<vmem>>, %arg11: memref<256x64xbf16, #tpu.memory_space<vmem>>, %arg12: memref<1x64x64xf32, #tpu.memory_space<vmem>>, %arg13: memref<14x14x64xf32, #tpu.memory_space<vmem>>) attributes {dimension_semantics = [#tpu.dimension_semantics<parallel>], iteration_bounds = array<i64: 2>, scalar_prefetch = 0 : i64, scratch_operands = 1 : i64, tpu.core_type = #tpu.core_type<tc>, window_params = [{transform_indices = @transform_0, window_bounds = array<i64: 1, 64, 64>}, {transform_indices = @transform_1, window_bounds = array<i64: 1, 32, 16>}, {pipeline_mode = #tpu.pipeline_mode<synchronous>, transform_indices = @transform_2, window_bounds = array<i64: 10, 64>}, {pipeline_mode = #tpu.pipeline_mode<synchronous>, transform_indices = @transform_3, window_bounds = array<i64: 32, 2>}, {pipeline_mode = #tpu.pipeline_mode<synchronous>, transform_indices = @transform_4, window_bounds = array<i64: 3, 256>}, {pipeline_mode = #tpu.pipeline_mode<synchronous>, transform_indices = @transform_5, window_bounds = array<i64: 64, 64>}, {pipeline_mode = #tpu.pipeline_mode<synchronous>, transform_indices = @transform_6, window_bounds = array<i64: 32, 196>}, {pipeline_mode = #tpu.pipeline_mode<synchronous>, transform_indices = @transform_7, window_bounds = array<i64: 68, 64>}, {pipeline_mode = #tpu.pipeline_mode<synchronous>, transform_indices = @transform_8, window_bounds = array<i64: 49, 64>}, {pipeline_mode = #tpu.pipeline_mode<synchronous>, transform_indices = @transform_9, window_bounds = array<i64: 64, 256>}, {pipeline_mode = #tpu.pipeline_mode<synchronous>, transform_indices = @transform_10, window_bounds = array<i64: 256, 64>}, {transform_indices = @transform_11, window_bounds = array<i64: 1, 64, 64>}]} {
    %c0 = arith.constant 0 : index
    %c0_0 = arith.constant 0 : index
    %c0_1 = arith.constant 0 : index
    %0 = vector.load %arg1[%c0, %c0_0, %c0_1] : memref<1x64x64xf32, #tpu.memory_space<vmem>>, vector<1x64x64xf32>
    %1 = vector.shape_cast %0 : vector<1x64x64xf32> to vector<64x64xf32>
    %2 = tpu.transpose %1, [1, 0] : vector<64x64xf32> -> vector<64x64xf32>
    %c0_2 = arith.constant 0 : index
    %c0_3 = arith.constant 0 : index
    %c0_4 = arith.constant 0 : index
    %3 = vector.load %arg2[%c0_2, %c0_3, %c0_4] : memref<1x32x16xf32, #tpu.memory_space<vmem>>, vector<1x32x16xf32>
    %4 = vector.shape_cast %3 : vector<1x32x16xf32> to vector<32x16xf32>
    %c0_5 = arith.constant 0 : index
    %c0_6 = arith.constant 0 : index
    %5 = vector.load %arg3[%c0_5, %c0_6] : memref<10x64xf32, #tpu.memory_space<vmem>>, vector<1x64xf32>
    %6 = vector.shape_cast %5 : vector<1x64xf32> to vector<64xf32>
    %c1 = arith.constant 1 : index
    %c0_7 = arith.constant 0 : index
    %7 = vector.load %arg3[%c1, %c0_7] : memref<10x64xf32, #tpu.memory_space<vmem>>, vector<1x64xf32>
    %8 = vector.shape_cast %7 : vector<1x64xf32> to vector<64xf32>
    %cst = arith.constant dense<0.000000e+00> : vector<64xf32>
    %9 = vector.multi_reduction <add>, %2, %cst [1] : vector<64x64xf32> to vector<64xf32>
    %10 = vector.shape_cast %9 : vector<64xf32> to vector<64x1xf32>
    %cst_8 = arith.constant 6.400000e+01 : f32
    %11 = vector.broadcast %cst_8 : f32 to vector<64x1xf32>
    %12 = arith.divf %10, %11 : vector<64x1xf32>
    %13 = vector.broadcast %12 : vector<64x1xf32> to vector<64x64xf32>
    %14 = arith.subf %2, %13 : vector<64x64xf32>
    %15 = arith.mulf %14, %14 : vector<64x64xf32>
    %cst_9 = arith.constant dense<0.000000e+00> : vector<64xf32>
    %16 = vector.multi_reduction <add>, %15, %cst_9 [1] : vector<64x64xf32> to vector<64xf32>
    %17 = vector.shape_cast %16 : vector<64xf32> to vector<64x1xf32>
    %cst_10 = arith.constant 6.400000e+01 : f32
    %18 = vector.broadcast %cst_10 : f32 to vector<64x1xf32>
    %19 = arith.divf %17, %18 : vector<64x1xf32>
    %cst_11 = arith.constant 9.99999974E-6 : f32
    %20 = vector.broadcast %cst_11 : f32 to vector<64x1xf32>
    %21 = arith.addf %19, %20 : vector<64x1xf32>
    %22 = math.rsqrt %21 : vector<64x1xf32>
    %23 = vector.broadcast %22 : vector<64x1xf32> to vector<64x64xf32>
    %24 = arith.mulf %14, %23 : vector<64x64xf32>
    %25 = vector.shape_cast %6 : vector<64xf32> to vector<1x64xf32>
    %26 = vector.broadcast %25 : vector<1x64xf32> to vector<64x64xf32>
    %27 = arith.mulf %24, %26 : vector<64x64xf32>
    %28 = vector.shape_cast %8 : vector<64xf32> to vector<1x64xf32>
    %29 = vector.broadcast %28 : vector<1x64xf32> to vector<64x64xf32>
    %30 = arith.addf %27, %29 : vector<64x64xf32>
    %31 = arith.truncf %30 : vector<64x64xf32> to vector<64x64xbf16>
    %c0_12 = arith.constant 0 : index
    %c0_13 = arith.constant 0 : index
    %32 = vector.load %arg6[%c0_12, %c0_13] : memref<64x64xbf16, #tpu.memory_space<vmem>>, vector<64x64xbf16>
    %cst_14 = arith.constant dense<0.000000e+00> : vector<64x64xf32>
    %33 = tpu.matmul %31, %32, %cst_14 {dimension_numbers = #tpu.dot_dimension_numbers<[1], [0], [0], [1], [0, 0, 1, 1], [], []>} : vector<64x64xbf16>, vector<64x64xbf16>, vector<64x64xf32> -> vector<64x64xf32>
    %cst_15 = arith.constant dense<0.000000e+00> : vector<16xf32>
    %34 = vector.multi_reduction <add>, %4, %cst_15 [0] : vector<32x16xf32> to vector<16xf32>
    %35 = vector.shape_cast %34 : vector<16xf32> to vector<1x16xf32>
    %cst_16 = arith.constant 3.200000e+01 : f32
    %36 = vector.broadcast %cst_16 : f32 to vector<1x16xf32>
    %37 = arith.divf %35, %36 : vector<1x16xf32>
    %38 = vector.broadcast %37 : vector<1x16xf32> to vector<32x16xf32>
    %39 = arith.subf %4, %38 : vector<32x16xf32>
    %40 = arith.mulf %39, %39 : vector<32x16xf32>
    %cst_17 = arith.constant dense<0.000000e+00> : vector<16xf32>
    %41 = vector.multi_reduction <add>, %40, %cst_17 [0] : vector<32x16xf32> to vector<16xf32>
    %42 = vector.shape_cast %41 : vector<16xf32> to vector<1x16xf32>
    %cst_18 = arith.constant 3.200000e+01 : f32
    %43 = vector.broadcast %cst_18 : f32 to vector<1x16xf32>
    %44 = arith.divf %42, %43 : vector<1x16xf32>
    %cst_19 = arith.constant 9.99999974E-6 : f32
    %45 = vector.broadcast %cst_19 : f32 to vector<1x16xf32>
    %46 = arith.addf %44, %45 : vector<1x16xf32>
    %47 = math.rsqrt %46 : vector<1x16xf32>
    %48 = vector.broadcast %47 : vector<1x16xf32> to vector<32x16xf32>
    %49 = arith.mulf %39, %48 : vector<32x16xf32>
    %c0_20 = arith.constant 0 : index
    %c0_21 = arith.constant 0 : index
    %50 = vector.load %arg4[%c0_20, %c0_21] : memref<32x2xf32, #tpu.memory_space<vmem>>, vector<32x1xf32>
    %51 = vector.broadcast %50 : vector<32x1xf32> to vector<32x16xf32>
    %52 = arith.mulf %49, %51 : vector<32x16xf32>
    %c0_22 = arith.constant 0 : index
    %c1_23 = arith.constant 1 : index
    %53 = vector.load %arg4[%c0_22, %c1_23] : memref<32x2xf32, #tpu.memory_space<vmem>>, vector<32x1xf32>
    %54 = vector.broadcast %53 : vector<32x1xf32> to vector<32x16xf32>
    %55 = arith.addf %52, %54 : vector<32x16xf32>
    %56 = arith.truncf %55 : vector<32x16xf32> to vector<32x16xbf16>
    %c0_24 = arith.constant 0 : index
    %c0_25 = arith.constant 0 : index
    %57 = vector.load %arg7[%c0_24, %c0_25] : memref<32x196xbf16, #tpu.memory_space<vmem>>, vector<32x196xbf16>
    %cst_26 = arith.constant dense<0.000000e+00> : vector<16x196xf32>
    %58 = tpu.matmul %56, %57, %cst_26 {dimension_numbers = #tpu.dot_dimension_numbers<[0], [0], [1], [1], [0, 1, 1, 1], [], []>} : vector<32x16xbf16>, vector<32x196xbf16>, vector<16x196xf32> -> vector<16x196xf32>
    %59 = vector.extract_strided_slice %58 {offsets = [0, 0], sizes = [16, 128], strides = [1, 1]} : vector<16x196xf32> to vector<16x128xf32>
    %60 = vector.extract_strided_slice %58 {offsets = [0, 128], sizes = [16, 68], strides = [1, 1]} : vector<16x196xf32> to vector<16x68xf32>
    %cst_27 = arith.constant dense<0xFF800000> : vector<68xf32>
    %61 = vector.multi_reduction <maximumf>, %60, %cst_27 [0] : vector<16x68xf32> to vector<68xf32>
    %62 = vector.shape_cast %61 : vector<68xf32> to vector<1x68xf32>
    %63 = vector.broadcast %62 : vector<1x68xf32> to vector<16x68xf32>
    %64 = arith.subf %60, %63 : vector<16x68xf32>
    %65 = math.exp %64 : vector<16x68xf32>
    %cst_28 = arith.constant dense<0.000000e+00> : vector<68xf32>
    %66 = vector.multi_reduction <add>, %65, %cst_28 [0] : vector<16x68xf32> to vector<68xf32>
    %67 = vector.shape_cast %66 : vector<68xf32> to vector<1x68xf32>
    %68 = vector.broadcast %67 : vector<1x68xf32> to vector<16x68xf32>
    %69 = arith.divf %65, %68 : vector<16x68xf32>
    %70 = arith.truncf %69 : vector<16x68xf32> to vector<16x68xbf16>
    %71 = arith.truncf %59 : vector<16x128xf32> to vector<16x128xbf16>
    %cst_29 = arith.constant dense<0.000000e+00> : vector<68x128xf32>
    %72 = tpu.matmul %70, %71, %cst_29 {dimension_numbers = #tpu.dot_dimension_numbers<[0], [0], [1], [1], [0, 1, 1, 1], [], []>} : vector<16x68xbf16>, vector<16x128xbf16>, vector<68x128xf32> -> vector<68x128xf32>
    %c0_30 = arith.constant 0 : index
    %c0_31 = arith.constant 0 : index
    %73 = vector.load %arg8[%c0_30, %c0_31] : memref<68x64xf32, #tpu.memory_space<vmem>>, vector<68x64xf32>
    %74 = vector.extract_strided_slice %72 {offsets = [0, 0], sizes = [68, 64], strides = [1, 1]} : vector<68x128xf32> to vector<68x64xf32>
    %75 = arith.mulf %74, %73 : vector<68x64xf32>
    %76 = arith.truncf %75 : vector<68x64xf32> to vector<68x64xbf16>
    %77 = vector.extract_strided_slice %72 {offsets = [0, 64], sizes = [68, 64], strides = [1, 1]} : vector<68x128xf32> to vector<68x64xf32>
    %78 = arith.mulf %77, %73 : vector<68x64xf32>
    %79 = arith.truncf %78 : vector<68x64xf32> to vector<68x64xbf16>
    %80 = arith.truncf %33 : vector<64x64xf32> to vector<64x64xbf16>
    %cst_32 = arith.constant dense<0.000000e+00> : vector<64x68xf32>
    %81 = tpu.matmul %80, %76, %cst_32 {dimension_numbers = #tpu.dot_dimension_numbers<[1], [1], [0], [0], [0, 0, 1, 0], [], []>} : vector<64x64xbf16>, vector<68x64xbf16>, vector<64x68xf32> -> vector<64x68xf32>
    %cst_33 = arith.constant 0.353553385 : f32
    %82 = vector.broadcast %cst_33 : f32 to vector<64x68xf32>
    %83 = arith.mulf %81, %82 : vector<64x68xf32>
    %cst_34 = arith.constant 0.000000e+00 : f32
    %84 = vector.broadcast %cst_34 : f32 to vector<64x64xf32>
    %85 = vector.extract_strided_slice %83 {offsets = [0, 0], sizes = [64, 16], strides = [1, 1]} : vector<64x68xf32> to vector<64x16xf32>
    %cst_35 = arith.constant dense<0xFF800000> : vector<64xf32>
    %86 = vector.multi_reduction <maximumf>, %85, %cst_35 [1] : vector<64x16xf32> to vector<64xf32>
    %87 = vector.shape_cast %86 : vector<64xf32> to vector<64x1xf32>
    %88 = vector.broadcast %87 : vector<64x1xf32> to vector<64x16xf32>
    %89 = arith.subf %85, %88 : vector<64x16xf32>
    %90 = math.exp %89 : vector<64x16xf32>
    %cst_36 = arith.constant dense<0.000000e+00> : vector<64xf32>
    %91 = vector.multi_reduction <add>, %90, %cst_36 [1] : vector<64x16xf32> to vector<64xf32>
    %92 = vector.shape_cast %91 : vector<64xf32> to vector<64x1xf32>
    %93 = tpu.reciprocal %92 {approx = true} : vector<64x1xf32> -> vector<64x1xf32>
    %94 = vector.broadcast %93 : vector<64x1xf32> to vector<64x16xf32>
    %95 = arith.mulf %90, %94 : vector<64x16xf32>
    %96 = arith.truncf %95 : vector<64x16xf32> to vector<64x16xbf16>
    %97 = vector.extract_strided_slice %79 {offsets = [0, 0], sizes = [16, 64], strides = [1, 1]} : vector<68x64xbf16> to vector<16x64xbf16>
    %cst_37 = arith.constant dense<0.000000e+00> : vector<64x64xf32>
    %98 = tpu.matmul %96, %97, %cst_37 {dimension_numbers = #tpu.dot_dimension_numbers<[1], [0], [0], [1], [0, 0, 1, 1], [], []>} : vector<64x16xbf16>, vector<16x64xbf16>, vector<64x64xf32> -> vector<64x64xf32>
    %99 = arith.addf %84, %98 : vector<64x64xf32>
    %100 = vector.extract_strided_slice %83 {offsets = [0, 16], sizes = [64, 16], strides = [1, 1]} : vector<64x68xf32> to vector<64x16xf32>
    %cst_38 = arith.constant dense<0xFF800000> : vector<64xf32>
    %101 = vector.multi_reduction <maximumf>, %100, %cst_38 [1] : vector<64x16xf32> to vector<64xf32>
    %102 = vector.shape_cast %101 : vector<64xf32> to vector<64x1xf32>
    %103 = vector.broadcast %102 : vector<64x1xf32> to vector<64x16xf32>
    %104 = arith.subf %100, %103 : vector<64x16xf32>
    %105 = math.exp %104 : vector<64x16xf32>
    %cst_39 = arith.constant dense<0.000000e+00> : vector<64xf32>
    %106 = vector.multi_reduction <add>, %105, %cst_39 [1] : vector<64x16xf32> to vector<64xf32>
    %107 = vector.shape_cast %106 : vector<64xf32> to vector<64x1xf32>
    %108 = tpu.reciprocal %107 {approx = true} : vector<64x1xf32> -> vector<64x1xf32>
    %109 = vector.broadcast %108 : vector<64x1xf32> to vector<64x16xf32>
    %110 = arith.mulf %105, %109 : vector<64x16xf32>
    %111 = arith.truncf %110 : vector<64x16xf32> to vector<64x16xbf16>
    %112 = vector.extract_strided_slice %79 {offsets = [16, 0], sizes = [16, 64], strides = [1, 1]} : vector<68x64xbf16> to vector<16x64xbf16>
    %cst_40 = arith.constant dense<0.000000e+00> : vector<64x64xf32>
    %113 = tpu.matmul %111, %112, %cst_40 {dimension_numbers = #tpu.dot_dimension_numbers<[1], [0], [0], [1], [0, 0, 1, 1], [], []>} : vector<64x16xbf16>, vector<16x64xbf16>, vector<64x64xf32> -> vector<64x64xf32>
    %114 = arith.addf %99, %113 : vector<64x64xf32>
    %115 = vector.extract_strided_slice %83 {offsets = [0, 32], sizes = [64, 8], strides = [1, 1]} : vector<64x68xf32> to vector<64x8xf32>
    %cst_41 = arith.constant dense<0xFF800000> : vector<64xf32>
    %116 = vector.multi_reduction <maximumf>, %115, %cst_41 [1] : vector<64x8xf32> to vector<64xf32>
    %117 = vector.shape_cast %116 : vector<64xf32> to vector<64x1xf32>
    %118 = vector.broadcast %117 : vector<64x1xf32> to vector<64x8xf32>
    %119 = arith.subf %115, %118 : vector<64x8xf32>
    %120 = math.exp %119 : vector<64x8xf32>
    %cst_42 = arith.constant dense<0.000000e+00> : vector<64xf32>
    %121 = vector.multi_reduction <add>, %120, %cst_42 [1] : vector<64x8xf32> to vector<64xf32>
    %122 = vector.shape_cast %121 : vector<64xf32> to vector<64x1xf32>
    %123 = tpu.reciprocal %122 {approx = true} : vector<64x1xf32> -> vector<64x1xf32>
    %124 = vector.broadcast %123 : vector<64x1xf32> to vector<64x8xf32>
    %125 = arith.mulf %120, %124 : vector<64x8xf32>
    %126 = arith.truncf %125 : vector<64x8xf32> to vector<64x8xbf16>
    %127 = vector.extract_strided_slice %79 {offsets = [32, 0], sizes = [8, 64], strides = [1, 1]} : vector<68x64xbf16> to vector<8x64xbf16>
    %cst_43 = arith.constant dense<0.000000e+00> : vector<64x64xf32>
    %128 = tpu.matmul %126, %127, %cst_43 {dimension_numbers = #tpu.dot_dimension_numbers<[1], [0], [0], [1], [0, 0, 1, 1], [], []>} : vector<64x8xbf16>, vector<8x64xbf16>, vector<64x64xf32> -> vector<64x64xf32>
    %129 = arith.addf %114, %128 : vector<64x64xf32>
    %130 = vector.extract_strided_slice %83 {offsets = [0, 40], sizes = [64, 8], strides = [1, 1]} : vector<64x68xf32> to vector<64x8xf32>
    %cst_44 = arith.constant dense<0xFF800000> : vector<64xf32>
    %131 = vector.multi_reduction <maximumf>, %130, %cst_44 [1] : vector<64x8xf32> to vector<64xf32>
    %132 = vector.shape_cast %131 : vector<64xf32> to vector<64x1xf32>
    %133 = vector.broadcast %132 : vector<64x1xf32> to vector<64x8xf32>
    %134 = arith.subf %130, %133 : vector<64x8xf32>
    %135 = math.exp %134 : vector<64x8xf32>
    %cst_45 = arith.constant dense<0.000000e+00> : vector<64xf32>
    %136 = vector.multi_reduction <add>, %135, %cst_45 [1] : vector<64x8xf32> to vector<64xf32>
    %137 = vector.shape_cast %136 : vector<64xf32> to vector<64x1xf32>
    %138 = tpu.reciprocal %137 {approx = true} : vector<64x1xf32> -> vector<64x1xf32>
    %139 = vector.broadcast %138 : vector<64x1xf32> to vector<64x8xf32>
    %140 = arith.mulf %135, %139 : vector<64x8xf32>
    %141 = arith.truncf %140 : vector<64x8xf32> to vector<64x8xbf16>
    %142 = vector.extract_strided_slice %79 {offsets = [40, 0], sizes = [8, 64], strides = [1, 1]} : vector<68x64xbf16> to vector<8x64xbf16>
    %cst_46 = arith.constant dense<0.000000e+00> : vector<64x64xf32>
    %143 = tpu.matmul %141, %142, %cst_46 {dimension_numbers = #tpu.dot_dimension_numbers<[1], [0], [0], [1], [0, 0, 1, 1], [], []>} : vector<64x8xbf16>, vector<8x64xbf16>, vector<64x64xf32> -> vector<64x64xf32>
    %144 = arith.addf %129, %143 : vector<64x64xf32>
    %145 = vector.extract_strided_slice %83 {offsets = [0, 48], sizes = [64, 8], strides = [1, 1]} : vector<64x68xf32> to vector<64x8xf32>
    %cst_47 = arith.constant dense<0xFF800000> : vector<64xf32>
    %146 = vector.multi_reduction <maximumf>, %145, %cst_47 [1] : vector<64x8xf32> to vector<64xf32>
    %147 = vector.shape_cast %146 : vector<64xf32> to vector<64x1xf32>
    %148 = vector.broadcast %147 : vector<64x1xf32> to vector<64x8xf32>
    %149 = arith.subf %145, %148 : vector<64x8xf32>
    %150 = math.exp %149 : vector<64x8xf32>
    %cst_48 = arith.constant dense<0.000000e+00> : vector<64xf32>
    %151 = vector.multi_reduction <add>, %150, %cst_48 [1] : vector<64x8xf32> to vector<64xf32>
    %152 = vector.shape_cast %151 : vector<64xf32> to vector<64x1xf32>
    %153 = tpu.reciprocal %152 {approx = true} : vector<64x1xf32> -> vector<64x1xf32>
    %154 = vector.broadcast %153 : vector<64x1xf32> to vector<64x8xf32>
    %155 = arith.mulf %150, %154 : vector<64x8xf32>
    %156 = arith.truncf %155 : vector<64x8xf32> to vector<64x8xbf16>
    %157 = vector.extract_strided_slice %79 {offsets = [48, 0], sizes = [8, 64], strides = [1, 1]} : vector<68x64xbf16> to vector<8x64xbf16>
    %cst_49 = arith.constant dense<0.000000e+00> : vector<64x64xf32>
    %158 = tpu.matmul %156, %157, %cst_49 {dimension_numbers = #tpu.dot_dimension_numbers<[1], [0], [0], [1], [0, 0, 1, 1], [], []>} : vector<64x8xbf16>, vector<8x64xbf16>, vector<64x64xf32> -> vector<64x64xf32>
    %159 = arith.addf %144, %158 : vector<64x64xf32>
    %160 = vector.extract_strided_slice %83 {offsets = [0, 56], sizes = [64, 4], strides = [1, 1]} : vector<64x68xf32> to vector<64x4xf32>
    %cst_50 = arith.constant dense<0xFF800000> : vector<64xf32>
    %161 = vector.multi_reduction <maximumf>, %160, %cst_50 [1] : vector<64x4xf32> to vector<64xf32>
    %162 = vector.shape_cast %161 : vector<64xf32> to vector<64x1xf32>
    %163 = vector.broadcast %162 : vector<64x1xf32> to vector<64x4xf32>
    %164 = arith.subf %160, %163 : vector<64x4xf32>
    %165 = math.exp %164 : vector<64x4xf32>
    %cst_51 = arith.constant dense<0.000000e+00> : vector<64xf32>
    %166 = vector.multi_reduction <add>, %165, %cst_51 [1] : vector<64x4xf32> to vector<64xf32>
    %167 = vector.shape_cast %166 : vector<64xf32> to vector<64x1xf32>
    %168 = tpu.reciprocal %167 {approx = true} : vector<64x1xf32> -> vector<64x1xf32>
    %169 = vector.broadcast %168 : vector<64x1xf32> to vector<64x4xf32>
    %170 = arith.mulf %165, %169 : vector<64x4xf32>
    %171 = arith.truncf %170 : vector<64x4xf32> to vector<64x4xbf16>
    %172 = vector.extract_strided_slice %79 {offsets = [56, 0], sizes = [4, 64], strides = [1, 1]} : vector<68x64xbf16> to vector<4x64xbf16>
    %cst_52 = arith.constant dense<0.000000e+00> : vector<64x64xf32>
    %173 = tpu.matmul %171, %172, %cst_52 {dimension_numbers = #tpu.dot_dimension_numbers<[1], [0], [0], [1], [0, 0, 1, 1], [], []>} : vector<64x4xbf16>, vector<4x64xbf16>, vector<64x64xf32> -> vector<64x64xf32>
    %174 = arith.addf %159, %173 : vector<64x64xf32>
    %175 = vector.extract_strided_slice %83 {offsets = [0, 60], sizes = [64, 4], strides = [1, 1]} : vector<64x68xf32> to vector<64x4xf32>
    %cst_53 = arith.constant dense<0xFF800000> : vector<64xf32>
    %176 = vector.multi_reduction <maximumf>, %175, %cst_53 [1] : vector<64x4xf32> to vector<64xf32>
    %177 = vector.shape_cast %176 : vector<64xf32> to vector<64x1xf32>
    %178 = vector.broadcast %177 : vector<64x1xf32> to vector<64x4xf32>
    %179 = arith.subf %175, %178 : vector<64x4xf32>
    %180 = math.exp %179 : vector<64x4xf32>
    %cst_54 = arith.constant dense<0.000000e+00> : vector<64xf32>
    %181 = vector.multi_reduction <add>, %180, %cst_54 [1] : vector<64x4xf32> to vector<64xf32>
    %182 = vector.shape_cast %181 : vector<64xf32> to vector<64x1xf32>
    %183 = tpu.reciprocal %182 {approx = true} : vector<64x1xf32> -> vector<64x1xf32>
    %184 = vector.broadcast %183 : vector<64x1xf32> to vector<64x4xf32>
    %185 = arith.mulf %180, %184 : vector<64x4xf32>
    %186 = arith.truncf %185 : vector<64x4xf32> to vector<64x4xbf16>
    %187 = vector.extract_strided_slice %79 {offsets = [60, 0], sizes = [4, 64], strides = [1, 1]} : vector<68x64xbf16> to vector<4x64xbf16>
    %cst_55 = arith.constant dense<0.000000e+00> : vector<64x64xf32>
    %188 = tpu.matmul %186, %187, %cst_55 {dimension_numbers = #tpu.dot_dimension_numbers<[1], [0], [0], [1], [0, 0, 1, 1], [], []>} : vector<64x4xbf16>, vector<4x64xbf16>, vector<64x64xf32> -> vector<64x64xf32>
    %189 = arith.addf %174, %188 : vector<64x64xf32>
    %190 = vector.extract_strided_slice %83 {offsets = [0, 64], sizes = [64, 4], strides = [1, 1]} : vector<64x68xf32> to vector<64x4xf32>
    %cst_56 = arith.constant dense<0xFF800000> : vector<64xf32>
    %191 = vector.multi_reduction <maximumf>, %190, %cst_56 [1] : vector<64x4xf32> to vector<64xf32>
    %192 = vector.shape_cast %191 : vector<64xf32> to vector<64x1xf32>
    %193 = vector.broadcast %192 : vector<64x1xf32> to vector<64x4xf32>
    %194 = arith.subf %190, %193 : vector<64x4xf32>
    %195 = math.exp %194 : vector<64x4xf32>
    %cst_57 = arith.constant dense<0.000000e+00> : vector<64xf32>
    %196 = vector.multi_reduction <add>, %195, %cst_57 [1] : vector<64x4xf32> to vector<64xf32>
    %197 = vector.shape_cast %196 : vector<64xf32> to vector<64x1xf32>
    %198 = tpu.reciprocal %197 {approx = true} : vector<64x1xf32> -> vector<64x1xf32>
    %199 = vector.broadcast %198 : vector<64x1xf32> to vector<64x4xf32>
    %200 = arith.mulf %195, %199 : vector<64x4xf32>
    %201 = arith.truncf %200 : vector<64x4xf32> to vector<64x4xbf16>
    %202 = vector.extract_strided_slice %79 {offsets = [64, 0], sizes = [4, 64], strides = [1, 1]} : vector<68x64xbf16> to vector<4x64xbf16>
    %cst_58 = arith.constant dense<0.000000e+00> : vector<64x64xf32>
    %203 = tpu.matmul %201, %202, %cst_58 {dimension_numbers = #tpu.dot_dimension_numbers<[1], [0], [0], [1], [0, 0, 1, 1], [], []>} : vector<64x4xbf16>, vector<4x64xbf16>, vector<64x64xf32> -> vector<64x64xf32>
    %204 = arith.addf %189, %203 : vector<64x64xf32>
    %205 = arith.addf %2, %204 : vector<64x64xf32>
    %c2 = arith.constant 2 : index
    %c0_59 = arith.constant 0 : index
    %206 = vector.load %arg3[%c2, %c0_59] : memref<10x64xf32, #tpu.memory_space<vmem>>, vector<1x64xf32>
    %207 = vector.shape_cast %206 : vector<1x64xf32> to vector<64xf32>
    %c3 = arith.constant 3 : index
    %c0_60 = arith.constant 0 : index
    %208 = vector.load %arg3[%c3, %c0_60] : memref<10x64xf32, #tpu.memory_space<vmem>>, vector<1x64xf32>
    %209 = vector.shape_cast %208 : vector<1x64xf32> to vector<64xf32>
    %cst_61 = arith.constant dense<0.000000e+00> : vector<64xf32>
    %210 = vector.multi_reduction <add>, %205, %cst_61 [1] : vector<64x64xf32> to vector<64xf32>
    %211 = vector.shape_cast %210 : vector<64xf32> to vector<64x1xf32>
    %cst_62 = arith.constant 6.400000e+01 : f32
    %212 = vector.broadcast %cst_62 : f32 to vector<64x1xf32>
    %213 = arith.divf %211, %212 : vector<64x1xf32>
    %214 = vector.broadcast %213 : vector<64x1xf32> to vector<64x64xf32>
    %215 = arith.subf %205, %214 : vector<64x64xf32>
    %216 = arith.mulf %215, %215 : vector<64x64xf32>
    %cst_63 = arith.constant dense<0.000000e+00> : vector<64xf32>
    %217 = vector.multi_reduction <add>, %216, %cst_63 [1] : vector<64x64xf32> to vector<64xf32>
    %218 = vector.shape_cast %217 : vector<64xf32> to vector<64x1xf32>
    %cst_64 = arith.constant 6.400000e+01 : f32
    %219 = vector.broadcast %cst_64 : f32 to vector<64x1xf32>
    %220 = arith.divf %218, %219 : vector<64x1xf32>
    %cst_65 = arith.constant 9.99999974E-6 : f32
    %221 = vector.broadcast %cst_65 : f32 to vector<64x1xf32>
    %222 = arith.addf %220, %221 : vector<64x1xf32>
    %223 = math.rsqrt %222 : vector<64x1xf32>
    %224 = vector.broadcast %223 : vector<64x1xf32> to vector<64x64xf32>
    %225 = arith.mulf %215, %224 : vector<64x64xf32>
    %226 = vector.shape_cast %207 : vector<64xf32> to vector<1x64xf32>
    %227 = vector.broadcast %226 : vector<1x64xf32> to vector<64x64xf32>
    %228 = arith.mulf %225, %227 : vector<64x64xf32>
    %229 = vector.shape_cast %209 : vector<64xf32> to vector<1x64xf32>
    %230 = vector.broadcast %229 : vector<1x64xf32> to vector<64x64xf32>
    %231 = arith.addf %228, %230 : vector<64x64xf32>
    %cst_66 = arith.constant 0.000000e+00 : f32
    %232 = vector.broadcast %cst_66 : f32 to vector<14x14x64xf32>
    %c0_67 = arith.constant 0 : index
    %c0_68 = arith.constant 0 : index
    %c0_69 = arith.constant 0 : index
    %233 = vector.load %arg13[%c0_67, %c0_68, %c0_69] : memref<14x14x64xf32, #tpu.memory_space<vmem>>, vector<14x14x64xf32>
    tpu.vector_store %arg13[%c0_67, %c0_68, %c0_69], %232 {strides = array<i32>} : memref<14x14x64xf32, #tpu.memory_space<vmem>>, vector<14x14x64xf32>,
    %234 = vector.shape_cast %231 : vector<64x64xf32> to vector<8x8x64xf32>
    %c3_70 = arith.constant 3 : index
    %c3_71 = arith.constant 3 : index
    %c0_72 = arith.constant 0 : index
    %235 = vector.load %arg13[%c3_70, %c3_71, %c0_72] : memref<14x14x64xf32, #tpu.memory_space<vmem>>, vector<8x8x64xf32>
    tpu.vector_store %arg13[%c3_70, %c3_71, %c0_72], %234 {strides = array<i32>} : memref<14x14x64xf32, #tpu.memory_space<vmem>>, vector<8x8x64xf32>,
    %cst_73 = arith.constant 0.000000e+00 : f32
    %236 = vector.broadcast %cst_73 : f32 to vector<8x8x64xf32>
    %c0_74 = arith.constant 0 : index
    %c0_75 = arith.constant 0 : index
    %c0_76 = arith.constant 0 : index
    %237 = vector.load %arg13[%c0_74, %c0_75, %c0_76] : memref<14x14x64xf32, #tpu.memory_space<vmem>>, vector<8x8x64xf32>
    %c0_77 = arith.constant 0 : index
    %c0_78 = arith.constant 0 : index
    %238 = vector.load %arg9[%c0_77, %c0_78] : memref<49x64xf32, #tpu.memory_space<vmem>>, vector<1x64xf32>
    %239 = vector.shape_cast %238 : vector<1x64xf32> to vector<64xf32>
    %240 = vector.shape_cast %239 : vector<64xf32> to vector<1x1x64xf32>
    %241 = vector.broadcast %240 : vector<1x1x64xf32> to vector<8x8x64xf32>
    %242 = arith.mulf %237, %241 : vector<8x8x64xf32>
    %243 = arith.addf %236, %242 : vector<8x8x64xf32>
    %c0_79 = arith.constant 0 : index
    %c1_80 = arith.constant 1 : index
    %c0_81 = arith.constant 0 : index
    %244 = vector.load %arg13[%c0_79, %c1_80, %c0_81] : memref<14x14x64xf32, #tpu.memory_space<vmem>>, vector<8x8x64xf32>
    %c1_82 = arith.constant 1 : index
    %c0_83 = arith.constant 0 : index
    %245 = vector.load %arg9[%c1_82, %c0_83] : memref<49x64xf32, #tpu.memory_space<vmem>>, vector<1x64xf32>
    %246 = vector.shape_cast %245 : vector<1x64xf32> to vector<64xf32>
    %247 = vector.shape_cast %246 : vector<64xf32> to vector<1x1x64xf32>
    %248 = vector.broadcast %247 : vector<1x1x64xf32> to vector<8x8x64xf32>
    %249 = arith.mulf %244, %248 : vector<8x8x64xf32>
    %250 = arith.addf %243, %249 : vector<8x8x64xf32>
    %c0_84 = arith.constant 0 : index
    %c2_85 = arith.constant 2 : index
    %c0_86 = arith.constant 0 : index
    %251 = vector.load %arg13[%c0_84, %c2_85, %c0_86] : memref<14x14x64xf32, #tpu.memory_space<vmem>>, vector<8x8x64xf32>
    %c2_87 = arith.constant 2 : index
    %c0_88 = arith.constant 0 : index
    %252 = vector.load %arg9[%c2_87, %c0_88] : memref<49x64xf32, #tpu.memory_space<vmem>>, vector<1x64xf32>
    %253 = vector.shape_cast %252 : vector<1x64xf32> to vector<64xf32>
    %254 = vector.shape_cast %253 : vector<64xf32> to vector<1x1x64xf32>
    %255 = vector.broadcast %254 : vector<1x1x64xf32> to vector<8x8x64xf32>
    %256 = arith.mulf %251, %255 : vector<8x8x64xf32>
    %257 = arith.addf %250, %256 : vector<8x8x64xf32>
    %c0_89 = arith.constant 0 : index
    %c3_90 = arith.constant 3 : index
    %c0_91 = arith.constant 0 : index
    %258 = vector.load %arg13[%c0_89, %c3_90, %c0_91] : memref<14x14x64xf32, #tpu.memory_space<vmem>>, vector<8x8x64xf32>
    %c3_92 = arith.constant 3 : index
    %c0_93 = arith.constant 0 : index
    %259 = vector.load %arg9[%c3_92, %c0_93] : memref<49x64xf32, #tpu.memory_space<vmem>>, vector<1x64xf32>
    %260 = vector.shape_cast %259 : vector<1x64xf32> to vector<64xf32>
    %261 = vector.shape_cast %260 : vector<64xf32> to vector<1x1x64xf32>
    %262 = vector.broadcast %261 : vector<1x1x64xf32> to vector<8x8x64xf32>
    %263 = arith.mulf %258, %262 : vector<8x8x64xf32>
    %264 = arith.addf %257, %263 : vector<8x8x64xf32>
    %c0_94 = arith.constant 0 : index
    %c4 = arith.constant 4 : index
    %c0_95 = arith.constant 0 : index
    %265 = vector.load %arg13[%c0_94, %c4, %c0_95] : memref<14x14x64xf32, #tpu.memory_space<vmem>>, vector<8x8x64xf32>
    %c4_96 = arith.constant 4 : index
    %c0_97 = arith.constant 0 : index
    %266 = vector.load %arg9[%c4_96, %c0_97] : memref<49x64xf32, #tpu.memory_space<vmem>>, vector<1x64xf32>
    %267 = vector.shape_cast %266 : vector<1x64xf32> to vector<64xf32>
    %268 = vector.shape_cast %267 : vector<64xf32> to vector<1x1x64xf32>
    %269 = vector.broadcast %268 : vector<1x1x64xf32> to vector<8x8x64xf32>
    %270 = arith.mulf %265, %269 : vector<8x8x64xf32>
    %271 = arith.addf %264, %270 : vector<8x8x64xf32>
    %c0_98 = arith.constant 0 : index
    %c5 = arith.constant 5 : index
    %c0_99 = arith.constant 0 : index
    %272 = vector.load %arg13[%c0_98, %c5, %c0_99] : memref<14x14x64xf32, #tpu.memory_space<vmem>>, vector<8x8x64xf32>
    %c5_100 = arith.constant 5 : index
    %c0_101 = arith.constant 0 : index
    %273 = vector.load %arg9[%c5_100, %c0_101] : memref<49x64xf32, #tpu.memory_space<vmem>>, vector<1x64xf32>
    %274 = vector.shape_cast %273 : vector<1x64xf32> to vector<64xf32>
    %275 = vector.shape_cast %274 : vector<64xf32> to vector<1x1x64xf32>
    %276 = vector.broadcast %275 : vector<1x1x64xf32> to vector<8x8x64xf32>
    %277 = arith.mulf %272, %276 : vector<8x8x64xf32>
    %278 = arith.addf %271, %277 : vector<8x8x64xf32>
    %c0_102 = arith.constant 0 : index
    %c6 = arith.constant 6 : index
    %c0_103 = arith.constant 0 : index
    %279 = vector.load %arg13[%c0_102, %c6, %c0_103] : memref<14x14x64xf32, #tpu.memory_space<vmem>>, vector<8x8x64xf32>
    %c6_104 = arith.constant 6 : index
    %c0_105 = arith.constant 0 : index
    %280 = vector.load %arg9[%c6_104, %c0_105] : memref<49x64xf32, #tpu.memory_space<vmem>>, vector<1x64xf32>
    %281 = vector.shape_cast %280 : vector<1x64xf32> to vector<64xf32>
    %282 = vector.shape_cast %281 : vector<64xf32> to vector<1x1x64xf32>
    %283 = vector.broadcast %282 : vector<1x1x64xf32> to vector<8x8x64xf32>
    %284 = arith.mulf %279, %283 : vector<8x8x64xf32>
    %285 = arith.addf %278, %284 : vector<8x8x64xf32>
    %c1_106 = arith.constant 1 : index
    %c0_107 = arith.constant 0 : index
    %c0_108 = arith.constant 0 : index
    %286 = vector.load %arg13[%c1_106, %c0_107, %c0_108] : memref<14x14x64xf32, #tpu.memory_space<vmem>>, vector<8x8x64xf32>
    %c7 = arith.constant 7 : index
    %c0_109 = arith.constant 0 : index
    %287 = vector.load %arg9[%c7, %c0_109] : memref<49x64xf32, #tpu.memory_space<vmem>>, vector<1x64xf32>
    %288 = vector.shape_cast %287 : vector<1x64xf32> to vector<64xf32>
    %289 = vector.shape_cast %288 : vector<64xf32> to vector<1x1x64xf32>
    %290 = vector.broadcast %289 : vector<1x1x64xf32> to vector<8x8x64xf32>
    %291 = arith.mulf %286, %290 : vector<8x8x64xf32>
    %292 = arith.addf %285, %291 : vector<8x8x64xf32>
    %c1_110 = arith.constant 1 : index
    %c1_111 = arith.constant 1 : index
    %c0_112 = arith.constant 0 : index
    %293 = vector.load %arg13[%c1_110, %c1_111, %c0_112] : memref<14x14x64xf32, #tpu.memory_space<vmem>>, vector<8x8x64xf32>
    %c8 = arith.constant 8 : index
    %c0_113 = arith.constant 0 : index
    %294 = vector.load %arg9[%c8, %c0_113] : memref<49x64xf32, #tpu.memory_space<vmem>>, vector<1x64xf32>
    %295 = vector.shape_cast %294 : vector<1x64xf32> to vector<64xf32>
    %296 = vector.shape_cast %295 : vector<64xf32> to vector<1x1x64xf32>
    %297 = vector.broadcast %296 : vector<1x1x64xf32> to vector<8x8x64xf32>
    %298 = arith.mulf %293, %297 : vector<8x8x64xf32>
    %299 = arith.addf %292, %298 : vector<8x8x64xf32>
    %c1_114 = arith.constant 1 : index
    %c2_115 = arith.constant 2 : index
    %c0_116 = arith.constant 0 : index
    %300 = vector.load %arg13[%c1_114, %c2_115, %c0_116] : memref<14x14x64xf32, #tpu.memory_space<vmem>>, vector<8x8x64xf32>
    %c9 = arith.constant 9 : index
    %c0_117 = arith.constant 0 : index
    %301 = vector.load %arg9[%c9, %c0_117] : memref<49x64xf32, #tpu.memory_space<vmem>>, vector<1x64xf32>
    %302 = vector.shape_cast %301 : vector<1x64xf32> to vector<64xf32>
    %303 = vector.shape_cast %302 : vector<64xf32> to vector<1x1x64xf32>
    %304 = vector.broadcast %303 : vector<1x1x64xf32> to vector<8x8x64xf32>
    %305 = arith.mulf %300, %304 : vector<8x8x64xf32>
    %306 = arith.addf %299, %305 : vector<8x8x64xf32>
    %c1_118 = arith.constant 1 : index
    %c3_119 = arith.constant 3 : index
    %c0_120 = arith.constant 0 : index
    %307 = vector.load %arg13[%c1_118, %c3_119, %c0_120] : memref<14x14x64xf32, #tpu.memory_space<vmem>>, vector<8x8x64xf32>
    %c10 = arith.constant 10 : index
    %c0_121 = arith.constant 0 : index
    %308 = vector.load %arg9[%c10, %c0_121] : memref<49x64xf32, #tpu.memory_space<vmem>>, vector<1x64xf32>
    %309 = vector.shape_cast %308 : vector<1x64xf32> to vector<64xf32>
    %310 = vector.shape_cast %309 : vector<64xf32> to vector<1x1x64xf32>
    %311 = vector.broadcast %310 : vector<1x1x64xf32> to vector<8x8x64xf32>
    %312 = arith.mulf %307, %311 : vector<8x8x64xf32>
    %313 = arith.addf %306, %312 : vector<8x8x64xf32>
    %c1_122 = arith.constant 1 : index
    %c4_123 = arith.constant 4 : index
    %c0_124 = arith.constant 0 : index
    %314 = vector.load %arg13[%c1_122, %c4_123, %c0_124] : memref<14x14x64xf32, #tpu.memory_space<vmem>>, vector<8x8x64xf32>
    %c11 = arith.constant 11 : index
    %c0_125 = arith.constant 0 : index
    %315 = vector.load %arg9[%c11, %c0_125] : memref<49x64xf32, #tpu.memory_space<vmem>>, vector<1x64xf32>
    %316 = vector.shape_cast %315 : vector<1x64xf32> to vector<64xf32>
    %317 = vector.shape_cast %316 : vector<64xf32> to vector<1x1x64xf32>
    %318 = vector.broadcast %317 : vector<1x1x64xf32> to vector<8x8x64xf32>
    %319 = arith.mulf %314, %318 : vector<8x8x64xf32>
    %320 = arith.addf %313, %319 : vector<8x8x64xf32>
    %c1_126 = arith.constant 1 : index
    %c5_127 = arith.constant 5 : index
    %c0_128 = arith.constant 0 : index
    %321 = vector.load %arg13[%c1_126, %c5_127, %c0_128] : memref<14x14x64xf32, #tpu.memory_space<vmem>>, vector<8x8x64xf32>
    %c12 = arith.constant 12 : index
    %c0_129 = arith.constant 0 : index
    %322 = vector.load %arg9[%c12, %c0_129] : memref<49x64xf32, #tpu.memory_space<vmem>>, vector<1x64xf32>
    %323 = vector.shape_cast %322 : vector<1x64xf32> to vector<64xf32>
    %324 = vector.shape_cast %323 : vector<64xf32> to vector<1x1x64xf32>
    %325 = vector.broadcast %324 : vector<1x1x64xf32> to vector<8x8x64xf32>
    %326 = arith.mulf %321, %325 : vector<8x8x64xf32>
    %327 = arith.addf %320, %326 : vector<8x8x64xf32>
    %c1_130 = arith.constant 1 : index
    %c6_131 = arith.constant 6 : index
    %c0_132 = arith.constant 0 : index
    %328 = vector.load %arg13[%c1_130, %c6_131, %c0_132] : memref<14x14x64xf32, #tpu.memory_space<vmem>>, vector<8x8x64xf32>
    %c13 = arith.constant 13 : index
    %c0_133 = arith.constant 0 : index
    %329 = vector.load %arg9[%c13, %c0_133] : memref<49x64xf32, #tpu.memory_space<vmem>>, vector<1x64xf32>
    %330 = vector.shape_cast %329 : vector<1x64xf32> to vector<64xf32>
    %331 = vector.shape_cast %330 : vector<64xf32> to vector<1x1x64xf32>
    %332 = vector.broadcast %331 : vector<1x1x64xf32> to vector<8x8x64xf32>
    %333 = arith.mulf %328, %332 : vector<8x8x64xf32>
    %334 = arith.addf %327, %333 : vector<8x8x64xf32>
    %c2_134 = arith.constant 2 : index
    %c0_135 = arith.constant 0 : index
    %c0_136 = arith.constant 0 : index
    %335 = vector.load %arg13[%c2_134, %c0_135, %c0_136] : memref<14x14x64xf32, #tpu.memory_space<vmem>>, vector<8x8x64xf32>
    %c14 = arith.constant 14 : index
    %c0_137 = arith.constant 0 : index
    %336 = vector.load %arg9[%c14, %c0_137] : memref<49x64xf32, #tpu.memory_space<vmem>>, vector<1x64xf32>
    %337 = vector.shape_cast %336 : vector<1x64xf32> to vector<64xf32>
    %338 = vector.shape_cast %337 : vector<64xf32> to vector<1x1x64xf32>
    %339 = vector.broadcast %338 : vector<1x1x64xf32> to vector<8x8x64xf32>
    %340 = arith.mulf %335, %339 : vector<8x8x64xf32>
    %341 = arith.addf %334, %340 : vector<8x8x64xf32>
    %c2_138 = arith.constant 2 : index
    %c1_139 = arith.constant 1 : index
    %c0_140 = arith.constant 0 : index
    %342 = vector.load %arg13[%c2_138, %c1_139, %c0_140] : memref<14x14x64xf32, #tpu.memory_space<vmem>>, vector<8x8x64xf32>
    %c15 = arith.constant 15 : index
    %c0_141 = arith.constant 0 : index
    %343 = vector.load %arg9[%c15, %c0_141] : memref<49x64xf32, #tpu.memory_space<vmem>>, vector<1x64xf32>
    %344 = vector.shape_cast %343 : vector<1x64xf32> to vector<64xf32>
    %345 = vector.shape_cast %344 : vector<64xf32> to vector<1x1x64xf32>
    %346 = vector.broadcast %345 : vector<1x1x64xf32> to vector<8x8x64xf32>
    %347 = arith.mulf %342, %346 : vector<8x8x64xf32>
    %348 = arith.addf %341, %347 : vector<8x8x64xf32>
    %c2_142 = arith.constant 2 : index
    %c2_143 = arith.constant 2 : index
    %c0_144 = arith.constant 0 : index
    %349 = vector.load %arg13[%c2_142, %c2_143, %c0_144] : memref<14x14x64xf32, #tpu.memory_space<vmem>>, vector<8x8x64xf32>
    %c16 = arith.constant 16 : index
    %c0_145 = arith.constant 0 : index
    %350 = vector.load %arg9[%c16, %c0_145] : memref<49x64xf32, #tpu.memory_space<vmem>>, vector<1x64xf32>
    %351 = vector.shape_cast %350 : vector<1x64xf32> to vector<64xf32>
    %352 = vector.shape_cast %351 : vector<64xf32> to vector<1x1x64xf32>
    %353 = vector.broadcast %352 : vector<1x1x64xf32> to vector<8x8x64xf32>
    %354 = arith.mulf %349, %353 : vector<8x8x64xf32>
    %355 = arith.addf %348, %354 : vector<8x8x64xf32>
    %c2_146 = arith.constant 2 : index
    %c3_147 = arith.constant 3 : index
    %c0_148 = arith.constant 0 : index
    %356 = vector.load %arg13[%c2_146, %c3_147, %c0_148] : memref<14x14x64xf32, #tpu.memory_space<vmem>>, vector<8x8x64xf32>
    %c17 = arith.constant 17 : index
    %c0_149 = arith.constant 0 : index
    %357 = vector.load %arg9[%c17, %c0_149] : memref<49x64xf32, #tpu.memory_space<vmem>>, vector<1x64xf32>
    %358 = vector.shape_cast %357 : vector<1x64xf32> to vector<64xf32>
    %359 = vector.shape_cast %358 : vector<64xf32> to vector<1x1x64xf32>
    %360 = vector.broadcast %359 : vector<1x1x64xf32> to vector<8x8x64xf32>
    %361 = arith.mulf %356, %360 : vector<8x8x64xf32>
    %362 = arith.addf %355, %361 : vector<8x8x64xf32>
    %c2_150 = arith.constant 2 : index
    %c4_151 = arith.constant 4 : index
    %c0_152 = arith.constant 0 : index
    %363 = vector.load %arg13[%c2_150, %c4_151, %c0_152] : memref<14x14x64xf32, #tpu.memory_space<vmem>>, vector<8x8x64xf32>
    %c18 = arith.constant 18 : index
    %c0_153 = arith.constant 0 : index
    %364 = vector.load %arg9[%c18, %c0_153] : memref<49x64xf32, #tpu.memory_space<vmem>>, vector<1x64xf32>
    %365 = vector.shape_cast %364 : vector<1x64xf32> to vector<64xf32>
    %366 = vector.shape_cast %365 : vector<64xf32> to vector<1x1x64xf32>
    %367 = vector.broadcast %366 : vector<1x1x64xf32> to vector<8x8x64xf32>
    %368 = arith.mulf %363, %367 : vector<8x8x64xf32>
    %369 = arith.addf %362, %368 : vector<8x8x64xf32>
    %c2_154 = arith.constant 2 : index
    %c5_155 = arith.constant 5 : index
    %c0_156 = arith.constant 0 : index
    %370 = vector.load %arg13[%c2_154, %c5_155, %c0_156] : memref<14x14x64xf32, #tpu.memory_space<vmem>>, vector<8x8x64xf32>
    %c19 = arith.constant 19 : index
    %c0_157 = arith.constant 0 : index
    %371 = vector.load %arg9[%c19, %c0_157] : memref<49x64xf32, #tpu.memory_space<vmem>>, vector<1x64xf32>
    %372 = vector.shape_cast %371 : vector<1x64xf32> to vector<64xf32>
    %373 = vector.shape_cast %372 : vector<64xf32> to vector<1x1x64xf32>
    %374 = vector.broadcast %373 : vector<1x1x64xf32> to vector<8x8x64xf32>
    %375 = arith.mulf %370, %374 : vector<8x8x64xf32>
    %376 = arith.addf %369, %375 : vector<8x8x64xf32>
    %c2_158 = arith.constant 2 : index
    %c6_159 = arith.constant 6 : index
    %c0_160 = arith.constant 0 : index
    %377 = vector.load %arg13[%c2_158, %c6_159, %c0_160] : memref<14x14x64xf32, #tpu.memory_space<vmem>>, vector<8x8x64xf32>
    %c20 = arith.constant 20 : index
    %c0_161 = arith.constant 0 : index
    %378 = vector.load %arg9[%c20, %c0_161] : memref<49x64xf32, #tpu.memory_space<vmem>>, vector<1x64xf32>
    %379 = vector.shape_cast %378 : vector<1x64xf32> to vector<64xf32>
    %380 = vector.shape_cast %379 : vector<64xf32> to vector<1x1x64xf32>
    %381 = vector.broadcast %380 : vector<1x1x64xf32> to vector<8x8x64xf32>
    %382 = arith.mulf %377, %381 : vector<8x8x64xf32>
    %383 = arith.addf %376, %382 : vector<8x8x64xf32>
    %c3_162 = arith.constant 3 : index
    %c0_163 = arith.constant 0 : index
    %c0_164 = arith.constant 0 : index
    %384 = vector.load %arg13[%c3_162, %c0_163, %c0_164] : memref<14x14x64xf32, #tpu.memory_space<vmem>>, vector<8x8x64xf32>
    %c21 = arith.constant 21 : index
    %c0_165 = arith.constant 0 : index
    %385 = vector.load %arg9[%c21, %c0_165] : memref<49x64xf32, #tpu.memory_space<vmem>>, vector<1x64xf32>
    %386 = vector.shape_cast %385 : vector<1x64xf32> to vector<64xf32>
    %387 = vector.shape_cast %386 : vector<64xf32> to vector<1x1x64xf32>
    %388 = vector.broadcast %387 : vector<1x1x64xf32> to vector<8x8x64xf32>
    %389 = arith.mulf %384, %388 : vector<8x8x64xf32>
    %390 = arith.addf %383, %389 : vector<8x8x64xf32>
    %c3_166 = arith.constant 3 : index
    %c1_167 = arith.constant 1 : index
    %c0_168 = arith.constant 0 : index
    %391 = vector.load %arg13[%c3_166, %c1_167, %c0_168] : memref<14x14x64xf32, #tpu.memory_space<vmem>>, vector<8x8x64xf32>
    %c22 = arith.constant 22 : index
    %c0_169 = arith.constant 0 : index
    %392 = vector.load %arg9[%c22, %c0_169] : memref<49x64xf32, #tpu.memory_space<vmem>>, vector<1x64xf32>
    %393 = vector.shape_cast %392 : vector<1x64xf32> to vector<64xf32>
    %394 = vector.shape_cast %393 : vector<64xf32> to vector<1x1x64xf32>
    %395 = vector.broadcast %394 : vector<1x1x64xf32> to vector<8x8x64xf32>
    %396 = arith.mulf %391, %395 : vector<8x8x64xf32>
    %397 = arith.addf %390, %396 : vector<8x8x64xf32>
    %c3_170 = arith.constant 3 : index
    %c2_171 = arith.constant 2 : index
    %c0_172 = arith.constant 0 : index
    %398 = vector.load %arg13[%c3_170, %c2_171, %c0_172] : memref<14x14x64xf32, #tpu.memory_space<vmem>>, vector<8x8x64xf32>
    %c23 = arith.constant 23 : index
    %c0_173 = arith.constant 0 : index
    %399 = vector.load %arg9[%c23, %c0_173] : memref<49x64xf32, #tpu.memory_space<vmem>>, vector<1x64xf32>
    %400 = vector.shape_cast %399 : vector<1x64xf32> to vector<64xf32>
    %401 = vector.shape_cast %400 : vector<64xf32> to vector<1x1x64xf32>
    %402 = vector.broadcast %401 : vector<1x1x64xf32> to vector<8x8x64xf32>
    %403 = arith.mulf %398, %402 : vector<8x8x64xf32>
    %404 = arith.addf %397, %403 : vector<8x8x64xf32>
    %c3_174 = arith.constant 3 : index
    %c3_175 = arith.constant 3 : index
    %c0_176 = arith.constant 0 : index
    %405 = vector.load %arg13[%c3_174, %c3_175, %c0_176] : memref<14x14x64xf32, #tpu.memory_space<vmem>>, vector<8x8x64xf32>
    %c24 = arith.constant 24 : index
    %c0_177 = arith.constant 0 : index
    %406 = vector.load %arg9[%c24, %c0_177] : memref<49x64xf32, #tpu.memory_space<vmem>>, vector<1x64xf32>
    %407 = vector.shape_cast %406 : vector<1x64xf32> to vector<64xf32>
    %408 = vector.shape_cast %407 : vector<64xf32> to vector<1x1x64xf32>
    %409 = vector.broadcast %408 : vector<1x1x64xf32> to vector<8x8x64xf32>
    %410 = arith.mulf %405, %409 : vector<8x8x64xf32>
    %411 = arith.addf %404, %410 : vector<8x8x64xf32>
    %c3_178 = arith.constant 3 : index
    %c4_179 = arith.constant 4 : index
    %c0_180 = arith.constant 0 : index
    %412 = vector.load %arg13[%c3_178, %c4_179, %c0_180] : memref<14x14x64xf32, #tpu.memory_space<vmem>>, vector<8x8x64xf32>
    %c25 = arith.constant 25 : index
    %c0_181 = arith.constant 0 : index
    %413 = vector.load %arg9[%c25, %c0_181] : memref<49x64xf32, #tpu.memory_space<vmem>>, vector<1x64xf32>
    %414 = vector.shape_cast %413 : vector<1x64xf32> to vector<64xf32>
    %415 = vector.shape_cast %414 : vector<64xf32> to vector<1x1x64xf32>
    %416 = vector.broadcast %415 : vector<1x1x64xf32> to vector<8x8x64xf32>
    %417 = arith.mulf %412, %416 : vector<8x8x64xf32>
    %418 = arith.addf %411, %417 : vector<8x8x64xf32>
    %c3_182 = arith.constant 3 : index
    %c5_183 = arith.constant 5 : index
    %c0_184 = arith.constant 0 : index
    %419 = vector.load %arg13[%c3_182, %c5_183, %c0_184] : memref<14x14x64xf32, #tpu.memory_space<vmem>>, vector<8x8x64xf32>
    %c26 = arith.constant 26 : index
    %c0_185 = arith.constant 0 : index
    %420 = vector.load %arg9[%c26, %c0_185] : memref<49x64xf32, #tpu.memory_space<vmem>>, vector<1x64xf32>
    %421 = vector.shape_cast %420 : vector<1x64xf32> to vector<64xf32>
    %422 = vector.shape_cast %421 : vector<64xf32> to vector<1x1x64xf32>
    %423 = vector.broadcast %422 : vector<1x1x64xf32> to vector<8x8x64xf32>
    %424 = arith.mulf %419, %423 : vector<8x8x64xf32>
    %425 = arith.addf %418, %424 : vector<8x8x64xf32>
    %c3_186 = arith.constant 3 : index
    %c6_187 = arith.constant 6 : index
    %c0_188 = arith.constant 0 : index
    %426 = vector.load %arg13[%c3_186, %c6_187, %c0_188] : memref<14x14x64xf32, #tpu.memory_space<vmem>>, vector<8x8x64xf32>
    %c27 = arith.constant 27 : index
    %c0_189 = arith.constant 0 : index
    %427 = vector.load %arg9[%c27, %c0_189] : memref<49x64xf32, #tpu.memory_space<vmem>>, vector<1x64xf32>
    %428 = vector.shape_cast %427 : vector<1x64xf32> to vector<64xf32>
    %429 = vector.shape_cast %428 : vector<64xf32> to vector<1x1x64xf32>
    %430 = vector.broadcast %429 : vector<1x1x64xf32> to vector<8x8x64xf32>
    %431 = arith.mulf %426, %430 : vector<8x8x64xf32>
    %432 = arith.addf %425, %431 : vector<8x8x64xf32>
    %c4_190 = arith.constant 4 : index
    %c0_191 = arith.constant 0 : index
    %c0_192 = arith.constant 0 : index
    %433 = vector.load %arg13[%c4_190, %c0_191, %c0_192] : memref<14x14x64xf32, #tpu.memory_space<vmem>>, vector<8x8x64xf32>
    %c28 = arith.constant 28 : index
    %c0_193 = arith.constant 0 : index
    %434 = vector.load %arg9[%c28, %c0_193] : memref<49x64xf32, #tpu.memory_space<vmem>>, vector<1x64xf32>
    %435 = vector.shape_cast %434 : vector<1x64xf32> to vector<64xf32>
    %436 = vector.shape_cast %435 : vector<64xf32> to vector<1x1x64xf32>
    %437 = vector.broadcast %436 : vector<1x1x64xf32> to vector<8x8x64xf32>
    %438 = arith.mulf %433, %437 : vector<8x8x64xf32>
    %439 = arith.addf %432, %438 : vector<8x8x64xf32>
    %c4_194 = arith.constant 4 : index
    %c1_195 = arith.constant 1 : index
    %c0_196 = arith.constant 0 : index
    %440 = vector.load %arg13[%c4_194, %c1_195, %c0_196] : memref<14x14x64xf32, #tpu.memory_space<vmem>>, vector<8x8x64xf32>
    %c29 = arith.constant 29 : index
    %c0_197 = arith.constant 0 : index
    %441 = vector.load %arg9[%c29, %c0_197] : memref<49x64xf32, #tpu.memory_space<vmem>>, vector<1x64xf32>
    %442 = vector.shape_cast %441 : vector<1x64xf32> to vector<64xf32>
    %443 = vector.shape_cast %442 : vector<64xf32> to vector<1x1x64xf32>
    %444 = vector.broadcast %443 : vector<1x1x64xf32> to vector<8x8x64xf32>
    %445 = arith.mulf %440, %444 : vector<8x8x64xf32>
    %446 = arith.addf %439, %445 : vector<8x8x64xf32>
    %c4_198 = arith.constant 4 : index
    %c2_199 = arith.constant 2 : index
    %c0_200 = arith.constant 0 : index
    %447 = vector.load %arg13[%c4_198, %c2_199, %c0_200] : memref<14x14x64xf32, #tpu.memory_space<vmem>>, vector<8x8x64xf32>
    %c30 = arith.constant 30 : index
    %c0_201 = arith.constant 0 : index
    %448 = vector.load %arg9[%c30, %c0_201] : memref<49x64xf32, #tpu.memory_space<vmem>>, vector<1x64xf32>
    %449 = vector.shape_cast %448 : vector<1x64xf32> to vector<64xf32>
    %450 = vector.shape_cast %449 : vector<64xf32> to vector<1x1x64xf32>
    %451 = vector.broadcast %450 : vector<1x1x64xf32> to vector<8x8x64xf32>
    %452 = arith.mulf %447, %451 : vector<8x8x64xf32>
    %453 = arith.addf %446, %452 : vector<8x8x64xf32>
    %c4_202 = arith.constant 4 : index
    %c3_203 = arith.constant 3 : index
    %c0_204 = arith.constant 0 : index
    %454 = vector.load %arg13[%c4_202, %c3_203, %c0_204] : memref<14x14x64xf32, #tpu.memory_space<vmem>>, vector<8x8x64xf32>
    %c31 = arith.constant 31 : index
    %c0_205 = arith.constant 0 : index
    %455 = vector.load %arg9[%c31, %c0_205] : memref<49x64xf32, #tpu.memory_space<vmem>>, vector<1x64xf32>
    %456 = vector.shape_cast %455 : vector<1x64xf32> to vector<64xf32>
    %457 = vector.shape_cast %456 : vector<64xf32> to vector<1x1x64xf32>
    %458 = vector.broadcast %457 : vector<1x1x64xf32> to vector<8x8x64xf32>
    %459 = arith.mulf %454, %458 : vector<8x8x64xf32>
    %460 = arith.addf %453, %459 : vector<8x8x64xf32>
    %c4_206 = arith.constant 4 : index
    %c4_207 = arith.constant 4 : index
    %c0_208 = arith.constant 0 : index
    %461 = vector.load %arg13[%c4_206, %c4_207, %c0_208] : memref<14x14x64xf32, #tpu.memory_space<vmem>>, vector<8x8x64xf32>
    %c32 = arith.constant 32 : index
    %c0_209 = arith.constant 0 : index
    %462 = vector.load %arg9[%c32, %c0_209] : memref<49x64xf32, #tpu.memory_space<vmem>>, vector<1x64xf32>
    %463 = vector.shape_cast %462 : vector<1x64xf32> to vector<64xf32>
    %464 = vector.shape_cast %463 : vector<64xf32> to vector<1x1x64xf32>
    %465 = vector.broadcast %464 : vector<1x1x64xf32> to vector<8x8x64xf32>
    %466 = arith.mulf %461, %465 : vector<8x8x64xf32>
    %467 = arith.addf %460, %466 : vector<8x8x64xf32>
    %c4_210 = arith.constant 4 : index
    %c5_211 = arith.constant 5 : index
    %c0_212 = arith.constant 0 : index
    %468 = vector.load %arg13[%c4_210, %c5_211, %c0_212] : memref<14x14x64xf32, #tpu.memory_space<vmem>>, vector<8x8x64xf32>
    %c33 = arith.constant 33 : index
    %c0_213 = arith.constant 0 : index
    %469 = vector.load %arg9[%c33, %c0_213] : memref<49x64xf32, #tpu.memory_space<vmem>>, vector<1x64xf32>
    %470 = vector.shape_cast %469 : vector<1x64xf32> to vector<64xf32>
    %471 = vector.shape_cast %470 : vector<64xf32> to vector<1x1x64xf32>
    %472 = vector.broadcast %471 : vector<1x1x64xf32> to vector<8x8x64xf32>
    %473 = arith.mulf %468, %472 : vector<8x8x64xf32>
    %474 = arith.addf %467, %473 : vector<8x8x64xf32>
    %c4_214 = arith.constant 4 : index
    %c6_215 = arith.constant 6 : index
    %c0_216 = arith.constant 0 : index
    %475 = vector.load %arg13[%c4_214, %c6_215, %c0_216] : memref<14x14x64xf32, #tpu.memory_space<vmem>>, vector<8x8x64xf32>
    %c34 = arith.constant 34 : index
    %c0_217 = arith.constant 0 : index
    %476 = vector.load %arg9[%c34, %c0_217] : memref<49x64xf32, #tpu.memory_space<vmem>>, vector<1x64xf32>
    %477 = vector.shape_cast %476 : vector<1x64xf32> to vector<64xf32>
    %478 = vector.shape_cast %477 : vector<64xf32> to vector<1x1x64xf32>
    %479 = vector.broadcast %478 : vector<1x1x64xf32> to vector<8x8x64xf32>
    %480 = arith.mulf %475, %479 : vector<8x8x64xf32>
    %481 = arith.addf %474, %480 : vector<8x8x64xf32>
    %c5_218 = arith.constant 5 : index
    %c0_219 = arith.constant 0 : index
    %c0_220 = arith.constant 0 : index
    %482 = vector.load %arg13[%c5_218, %c0_219, %c0_220] : memref<14x14x64xf32, #tpu.memory_space<vmem>>, vector<8x8x64xf32>
    %c35 = arith.constant 35 : index
    %c0_221 = arith.constant 0 : index
    %483 = vector.load %arg9[%c35, %c0_221] : memref<49x64xf32, #tpu.memory_space<vmem>>, vector<1x64xf32>
    %484 = vector.shape_cast %483 : vector<1x64xf32> to vector<64xf32>
    %485 = vector.shape_cast %484 : vector<64xf32> to vector<1x1x64xf32>
    %486 = vector.broadcast %485 : vector<1x1x64xf32> to vector<8x8x64xf32>
    %487 = arith.mulf %482, %486 : vector<8x8x64xf32>
    %488 = arith.addf %481, %487 : vector<8x8x64xf32>
    %c5_222 = arith.constant 5 : index
    %c1_223 = arith.constant 1 : index
    %c0_224 = arith.constant 0 : index
    %489 = vector.load %arg13[%c5_222, %c1_223, %c0_224] : memref<14x14x64xf32, #tpu.memory_space<vmem>>, vector<8x8x64xf32>
    %c36 = arith.constant 36 : index
    %c0_225 = arith.constant 0 : index
    %490 = vector.load %arg9[%c36, %c0_225] : memref<49x64xf32, #tpu.memory_space<vmem>>, vector<1x64xf32>
    %491 = vector.shape_cast %490 : vector<1x64xf32> to vector<64xf32>
    %492 = vector.shape_cast %491 : vector<64xf32> to vector<1x1x64xf32>
    %493 = vector.broadcast %492 : vector<1x1x64xf32> to vector<8x8x64xf32>
    %494 = arith.mulf %489, %493 : vector<8x8x64xf32>
    %495 = arith.addf %488, %494 : vector<8x8x64xf32>
    %c5_226 = arith.constant 5 : index
    %c2_227 = arith.constant 2 : index
    %c0_228 = arith.constant 0 : index
    %496 = vector.load %arg13[%c5_226, %c2_227, %c0_228] : memref<14x14x64xf32, #tpu.memory_space<vmem>>, vector<8x8x64xf32>
    %c37 = arith.constant 37 : index
    %c0_229 = arith.constant 0 : index
    %497 = vector.load %arg9[%c37, %c0_229] : memref<49x64xf32, #tpu.memory_space<vmem>>, vector<1x64xf32>
    %498 = vector.shape_cast %497 : vector<1x64xf32> to vector<64xf32>
    %499 = vector.shape_cast %498 : vector<64xf32> to vector<1x1x64xf32>
    %500 = vector.broadcast %499 : vector<1x1x64xf32> to vector<8x8x64xf32>
    %501 = arith.mulf %496, %500 : vector<8x8x64xf32>
    %502 = arith.addf %495, %501 : vector<8x8x64xf32>
    %c5_230 = arith.constant 5 : index
    %c3_231 = arith.constant 3 : index
    %c0_232 = arith.constant 0 : index
    %503 = vector.load %arg13[%c5_230, %c3_231, %c0_232] : memref<14x14x64xf32, #tpu.memory_space<vmem>>, vector<8x8x64xf32>
    %c38 = arith.constant 38 : index
    %c0_233 = arith.constant 0 : index
    %504 = vector.load %arg9[%c38, %c0_233] : memref<49x64xf32, #tpu.memory_space<vmem>>, vector<1x64xf32>
    %505 = vector.shape_cast %504 : vector<1x64xf32> to vector<64xf32>
    %506 = vector.shape_cast %505 : vector<64xf32> to vector<1x1x64xf32>
    %507 = vector.broadcast %506 : vector<1x1x64xf32> to vector<8x8x64xf32>
    %508 = arith.mulf %503, %507 : vector<8x8x64xf32>
    %509 = arith.addf %502, %508 : vector<8x8x64xf32>
    %c5_234 = arith.constant 5 : index
    %c4_235 = arith.constant 4 : index
    %c0_236 = arith.constant 0 : index
    %510 = vector.load %arg13[%c5_234, %c4_235, %c0_236] : memref<14x14x64xf32, #tpu.memory_space<vmem>>, vector<8x8x64xf32>
    %c39 = arith.constant 39 : index
    %c0_237 = arith.constant 0 : index
    %511 = vector.load %arg9[%c39, %c0_237] : memref<49x64xf32, #tpu.memory_space<vmem>>, vector<1x64xf32>
    %512 = vector.shape_cast %511 : vector<1x64xf32> to vector<64xf32>
    %513 = vector.shape_cast %512 : vector<64xf32> to vector<1x1x64xf32>
    %514 = vector.broadcast %513 : vector<1x1x64xf32> to vector<8x8x64xf32>
    %515 = arith.mulf %510, %514 : vector<8x8x64xf32>
    %516 = arith.addf %509, %515 : vector<8x8x64xf32>
    %c5_238 = arith.constant 5 : index
    %c5_239 = arith.constant 5 : index
    %c0_240 = arith.constant 0 : index
    %517 = vector.load %arg13[%c5_238, %c5_239, %c0_240] : memref<14x14x64xf32, #tpu.memory_space<vmem>>, vector<8x8x64xf32>
    %c40 = arith.constant 40 : index
    %c0_241 = arith.constant 0 : index
    %518 = vector.load %arg9[%c40, %c0_241] : memref<49x64xf32, #tpu.memory_space<vmem>>, vector<1x64xf32>
    %519 = vector.shape_cast %518 : vector<1x64xf32> to vector<64xf32>
    %520 = vector.shape_cast %519 : vector<64xf32> to vector<1x1x64xf32>
    %521 = vector.broadcast %520 : vector<1x1x64xf32> to vector<8x8x64xf32>
    %522 = arith.mulf %517, %521 : vector<8x8x64xf32>
    %523 = arith.addf %516, %522 : vector<8x8x64xf32>
    %c5_242 = arith.constant 5 : index
    %c6_243 = arith.constant 6 : index
    %c0_244 = arith.constant 0 : index
    %524 = vector.load %arg13[%c5_242, %c6_243, %c0_244] : memref<14x14x64xf32, #tpu.memory_space<vmem>>, vector<8x8x64xf32>
    %c41 = arith.constant 41 : index
    %c0_245 = arith.constant 0 : index
    %525 = vector.load %arg9[%c41, %c0_245] : memref<49x64xf32, #tpu.memory_space<vmem>>, vector<1x64xf32>
    %526 = vector.shape_cast %525 : vector<1x64xf32> to vector<64xf32>
    %527 = vector.shape_cast %526 : vector<64xf32> to vector<1x1x64xf32>
    %528 = vector.broadcast %527 : vector<1x1x64xf32> to vector<8x8x64xf32>
    %529 = arith.mulf %524, %528 : vector<8x8x64xf32>
    %530 = arith.addf %523, %529 : vector<8x8x64xf32>
    %c6_246 = arith.constant 6 : index
    %c0_247 = arith.constant 0 : index
    %c0_248 = arith.constant 0 : index
    %531 = vector.load %arg13[%c6_246, %c0_247, %c0_248] : memref<14x14x64xf32, #tpu.memory_space<vmem>>, vector<8x8x64xf32>
    %c42 = arith.constant 42 : index
    %c0_249 = arith.constant 0 : index
    %532 = vector.load %arg9[%c42, %c0_249] : memref<49x64xf32, #tpu.memory_space<vmem>>, vector<1x64xf32>
    %533 = vector.shape_cast %532 : vector<1x64xf32> to vector<64xf32>
    %534 = vector.shape_cast %533 : vector<64xf32> to vector<1x1x64xf32>
    %535 = vector.broadcast %534 : vector<1x1x64xf32> to vector<8x8x64xf32>
    %536 = arith.mulf %531, %535 : vector<8x8x64xf32>
    %537 = arith.addf %530, %536 : vector<8x8x64xf32>
    %c6_250 = arith.constant 6 : index
    %c1_251 = arith.constant 1 : index
    %c0_252 = arith.constant 0 : index
    %538 = vector.load %arg13[%c6_250, %c1_251, %c0_252] : memref<14x14x64xf32, #tpu.memory_space<vmem>>, vector<8x8x64xf32>
    %c43 = arith.constant 43 : index
    %c0_253 = arith.constant 0 : index
    %539 = vector.load %arg9[%c43, %c0_253] : memref<49x64xf32, #tpu.memory_space<vmem>>, vector<1x64xf32>
    %540 = vector.shape_cast %539 : vector<1x64xf32> to vector<64xf32>
    %541 = vector.shape_cast %540 : vector<64xf32> to vector<1x1x64xf32>
    %542 = vector.broadcast %541 : vector<1x1x64xf32> to vector<8x8x64xf32>
    %543 = arith.mulf %538, %542 : vector<8x8x64xf32>
    %544 = arith.addf %537, %543 : vector<8x8x64xf32>
    %c6_254 = arith.constant 6 : index
    %c2_255 = arith.constant 2 : index
    %c0_256 = arith.constant 0 : index
    %545 = vector.load %arg13[%c6_254, %c2_255, %c0_256] : memref<14x14x64xf32, #tpu.memory_space<vmem>>, vector<8x8x64xf32>
    %c44 = arith.constant 44 : index
    %c0_257 = arith.constant 0 : index
    %546 = vector.load %arg9[%c44, %c0_257] : memref<49x64xf32, #tpu.memory_space<vmem>>, vector<1x64xf32>
    %547 = vector.shape_cast %546 : vector<1x64xf32> to vector<64xf32>
    %548 = vector.shape_cast %547 : vector<64xf32> to vector<1x1x64xf32>
    %549 = vector.broadcast %548 : vector<1x1x64xf32> to vector<8x8x64xf32>
    %550 = arith.mulf %545, %549 : vector<8x8x64xf32>
    %551 = arith.addf %544, %550 : vector<8x8x64xf32>
    %c6_258 = arith.constant 6 : index
    %c3_259 = arith.constant 3 : index
    %c0_260 = arith.constant 0 : index
    %552 = vector.load %arg13[%c6_258, %c3_259, %c0_260] : memref<14x14x64xf32, #tpu.memory_space<vmem>>, vector<8x8x64xf32>
    %c45 = arith.constant 45 : index
    %c0_261 = arith.constant 0 : index
    %553 = vector.load %arg9[%c45, %c0_261] : memref<49x64xf32, #tpu.memory_space<vmem>>, vector<1x64xf32>
    %554 = vector.shape_cast %553 : vector<1x64xf32> to vector<64xf32>
    %555 = vector.shape_cast %554 : vector<64xf32> to vector<1x1x64xf32>
    %556 = vector.broadcast %555 : vector<1x1x64xf32> to vector<8x8x64xf32>
    %557 = arith.mulf %552, %556 : vector<8x8x64xf32>
    %558 = arith.addf %551, %557 : vector<8x8x64xf32>
    %c6_262 = arith.constant 6 : index
    %c4_263 = arith.constant 4 : index
    %c0_264 = arith.constant 0 : index
    %559 = vector.load %arg13[%c6_262, %c4_263, %c0_264] : memref<14x14x64xf32, #tpu.memory_space<vmem>>, vector<8x8x64xf32>
    %c46 = arith.constant 46 : index
    %c0_265 = arith.constant 0 : index
    %560 = vector.load %arg9[%c46, %c0_265] : memref<49x64xf32, #tpu.memory_space<vmem>>, vector<1x64xf32>
    %561 = vector.shape_cast %560 : vector<1x64xf32> to vector<64xf32>
    %562 = vector.shape_cast %561 : vector<64xf32> to vector<1x1x64xf32>
    %563 = vector.broadcast %562 : vector<1x1x64xf32> to vector<8x8x64xf32>
    %564 = arith.mulf %559, %563 : vector<8x8x64xf32>
    %565 = arith.addf %558, %564 : vector<8x8x64xf32>
    %c6_266 = arith.constant 6 : index
    %c5_267 = arith.constant 5 : index
    %c0_268 = arith.constant 0 : index
    %566 = vector.load %arg13[%c6_266, %c5_267, %c0_268] : memref<14x14x64xf32, #tpu.memory_space<vmem>>, vector<8x8x64xf32>
    %c47 = arith.constant 47 : index
    %c0_269 = arith.constant 0 : index
    %567 = vector.load %arg9[%c47, %c0_269] : memref<49x64xf32, #tpu.memory_space<vmem>>, vector<1x64xf32>
    %568 = vector.shape_cast %567 : vector<1x64xf32> to vector<64xf32>
    %569 = vector.shape_cast %568 : vector<64xf32> to vector<1x1x64xf32>
    %570 = vector.broadcast %569 : vector<1x1x64xf32> to vector<8x8x64xf32>
    %571 = arith.mulf %566, %570 : vector<8x8x64xf32>
    %572 = arith.addf %565, %571 : vector<8x8x64xf32>
    %c6_270 = arith.constant 6 : index
    %c6_271 = arith.constant 6 : index
    %c0_272 = arith.constant 0 : index
    %573 = vector.load %arg13[%c6_270, %c6_271, %c0_272] : memref<14x14x64xf32, #tpu.memory_space<vmem>>, vector<8x8x64xf32>
    %c48 = arith.constant 48 : index
    %c0_273 = arith.constant 0 : index
    %574 = vector.load %arg9[%c48, %c0_273] : memref<49x64xf32, #tpu.memory_space<vmem>>, vector<1x64xf32>
    %575 = vector.shape_cast %574 : vector<1x64xf32> to vector<64xf32>
    %576 = vector.shape_cast %575 : vector<64xf32> to vector<1x1x64xf32>
    %577 = vector.broadcast %576 : vector<1x1x64xf32> to vector<8x8x64xf32>
    %578 = arith.mulf %573, %577 : vector<8x8x64xf32>
    %579 = arith.addf %572, %578 : vector<8x8x64xf32>
    %c4_274 = arith.constant 4 : index
    %c0_275 = arith.constant 0 : index
    %580 = vector.load %arg3[%c4_274, %c0_275] : memref<10x64xf32, #tpu.memory_space<vmem>>, vector<1x64xf32>
    %581 = vector.shape_cast %580 : vector<1x64xf32> to vector<64xf32>
    %582 = vector.shape_cast %581 : vector<64xf32> to vector<1x1x64xf32>
    %583 = vector.broadcast %582 : vector<1x1x64xf32> to vector<8x8x64xf32>
    %584 = arith.addf %579, %583 : vector<8x8x64xf32>
    %c5_276 = arith.constant 5 : index
    %c0_277 = arith.constant 0 : index
    %585 = vector.load %arg3[%c5_276, %c0_277] : memref<10x64xf32, #tpu.memory_space<vmem>>, vector<1x64xf32>
    %586 = vector.shape_cast %585 : vector<1x64xf32> to vector<64xf32>
    %587 = vector.shape_cast %586 : vector<64xf32> to vector<1x1x64xf32>
    %588 = vector.broadcast %587 : vector<1x1x64xf32> to vector<8x8x64xf32>
    %589 = arith.mulf %584, %588 : vector<8x8x64xf32>
    %c6_278 = arith.constant 6 : index
    %c0_279 = arith.constant 0 : index
    %590 = vector.load %arg3[%c6_278, %c0_279] : memref<10x64xf32, #tpu.memory_space<vmem>>, vector<1x64xf32>
    %591 = vector.shape_cast %590 : vector<1x64xf32> to vector<64xf32>
    %592 = vector.shape_cast %591 : vector<64xf32> to vector<1x1x64xf32>
    %593 = vector.broadcast %592 : vector<1x1x64xf32> to vector<8x8x64xf32>
    %594 = arith.addf %589, %593 : vector<8x8x64xf32>
    %cst_280 = arith.constant 5.000000e-01 : f32
    %595 = vector.broadcast %cst_280 : f32 to vector<8x8x64xf32>
    %596 = arith.mulf %595, %594 : vector<8x8x64xf32>
    %cst_281 = arith.constant 4.471500e-02 : f32
    %597 = vector.broadcast %cst_281 : f32 to vector<8x8x64xf32>
    %598 = arith.mulf %597, %594 : vector<8x8x64xf32>
    %599 = arith.mulf %598, %594 : vector<8x8x64xf32>
    %600 = arith.mulf %599, %594 : vector<8x8x64xf32>
    %601 = arith.addf %594, %600 : vector<8x8x64xf32>
    %cst_282 = arith.constant 0.797884583 : f32
    %602 = vector.broadcast %cst_282 : f32 to vector<8x8x64xf32>
    %603 = arith.mulf %602, %601 : vector<8x8x64xf32>
    %604 = math.tanh %603 : vector<8x8x64xf32>
    %cst_283 = arith.constant 1.000000e+00 : f32
    %605 = vector.broadcast %cst_283 : f32 to vector<8x8x64xf32>
    %606 = arith.addf %605, %604 : vector<8x8x64xf32>
    %607 = arith.mulf %596, %606 : vector<8x8x64xf32>
    %608 = vector.shape_cast %607 : vector<8x8x64xf32> to vector<64x64xf32>
    %609 = arith.truncf %608 : vector<64x64xf32> to vector<64x64xbf16>
    %c0_284 = arith.constant 0 : index
    %c0_285 = arith.constant 0 : index
    %610 = vector.load %arg10[%c0_284, %c0_285] : memref<64x256xbf16, #tpu.memory_space<vmem>>, vector<64x256xbf16>
    %cst_286 = arith.constant dense<0.000000e+00> : vector<64x256xf32>
    %611 = tpu.matmul %609, %610, %cst_286 {dimension_numbers = #tpu.dot_dimension_numbers<[1], [0], [0], [1], [0, 0, 1, 1], [], []>} : vector<64x64xbf16>, vector<64x256xbf16>, vector<64x256xf32> -> vector<64x256xf32>
    %c0_287 = arith.constant 0 : index
    %c0_288 = arith.constant 0 : index
    %612 = vector.load %arg5[%c0_287, %c0_288] : memref<3x256xf32, #tpu.memory_space<vmem>>, vector<1x256xf32>
    %613 = vector.shape_cast %612 : vector<1x256xf32> to vector<256xf32>
    %614 = vector.shape_cast %613 : vector<256xf32> to vector<1x256xf32>
    %615 = vector.broadcast %614 : vector<1x256xf32> to vector<64x256xf32>
    %616 = arith.addf %611, %615 : vector<64x256xf32>
    %c1_289 = arith.constant 1 : index
    %c0_290 = arith.constant 0 : index
    %617 = vector.load %arg5[%c1_289, %c0_290] : memref<3x256xf32, #tpu.memory_space<vmem>>, vector<1x256xf32>
    %618 = vector.shape_cast %617 : vector<1x256xf32> to vector<256xf32>
    %619 = vector.shape_cast %618 : vector<256xf32> to vector<1x256xf32>
    %620 = vector.broadcast %619 : vector<1x256xf32> to vector<64x256xf32>
    %621 = arith.mulf %616, %620 : vector<64x256xf32>
    %c2_291 = arith.constant 2 : index
    %c0_292 = arith.constant 0 : index
    %622 = vector.load %arg5[%c2_291, %c0_292] : memref<3x256xf32, #tpu.memory_space<vmem>>, vector<1x256xf32>
    %623 = vector.shape_cast %622 : vector<1x256xf32> to vector<256xf32>
    %624 = vector.shape_cast %623 : vector<256xf32> to vector<1x256xf32>
    %625 = vector.broadcast %624 : vector<1x256xf32> to vector<64x256xf32>
    %626 = arith.addf %621, %625 : vector<64x256xf32>
    %cst_293 = arith.constant 5.000000e-01 : f32
    %627 = vector.broadcast %cst_293 : f32 to vector<64x256xf32>
    %628 = arith.mulf %627, %626 : vector<64x256xf32>
    %cst_294 = arith.constant 4.471500e-02 : f32
    %629 = vector.broadcast %cst_294 : f32 to vector<64x256xf32>
    %630 = arith.mulf %629, %626 : vector<64x256xf32>
    %631 = arith.mulf %630, %626 : vector<64x256xf32>
    %632 = arith.mulf %631, %626 : vector<64x256xf32>
    %633 = arith.addf %626, %632 : vector<64x256xf32>
    %cst_295 = arith.constant 0.797884583 : f32
    %634 = vector.broadcast %cst_295 : f32 to vector<64x256xf32>
    %635 = arith.mulf %634, %633 : vector<64x256xf32>
    %636 = math.tanh %635 : vector<64x256xf32>
    %cst_296 = arith.constant 1.000000e+00 : f32
    %637 = vector.broadcast %cst_296 : f32 to vector<64x256xf32>
    %638 = arith.addf %637, %636 : vector<64x256xf32>
    %639 = arith.mulf %628, %638 : vector<64x256xf32>
    %640 = arith.truncf %639 : vector<64x256xf32> to vector<64x256xbf16>
    %c0_297 = arith.constant 0 : index
    %c0_298 = arith.constant 0 : index
    %641 = vector.load %arg11[%c0_297, %c0_298] : memref<256x64xbf16, #tpu.memory_space<vmem>>, vector<256x64xbf16>
    %cst_299 = arith.constant dense<0.000000e+00> : vector<64x64xf32>
    %642 = tpu.matmul %640, %641, %cst_299 {dimension_numbers = #tpu.dot_dimension_numbers<[1], [0], [0], [1], [0, 0, 1, 1], [], []>} : vector<64x256xbf16>, vector<256x64xbf16>, vector<64x64xf32> -> vector<64x64xf32>
    %c7_300 = arith.constant 7 : index
    %c0_301 = arith.constant 0 : index
    %643 = vector.load %arg3[%c7_300, %c0_301] : memref<10x64xf32, #tpu.memory_space<vmem>>, vector<1x64xf32>
    %644 = vector.shape_cast %643 : vector<1x64xf32> to vector<64xf32>
    %645 = vector.shape_cast %644 : vector<64xf32> to vector<1x64xf32>
    %646 = vector.broadcast %645 : vector<1x64xf32> to vector<64x64xf32>
    %647 = arith.addf %642, %646 : vector<64x64xf32>
    %c8_302 = arith.constant 8 : index
    %c0_303 = arith.constant 0 : index
    %648 = vector.load %arg3[%c8_302, %c0_303] : memref<10x64xf32, #tpu.memory_space<vmem>>, vector<1x64xf32>
    %649 = vector.shape_cast %648 : vector<1x64xf32> to vector<64xf32>
    %650 = vector.shape_cast %649 : vector<64xf32> to vector<1x64xf32>
    %651 = vector.broadcast %650 : vector<1x64xf32> to vector<64x64xf32>
    %652 = arith.mulf %647, %651 : vector<64x64xf32>
    %c9_304 = arith.constant 9 : index
    %c0_305 = arith.constant 0 : index
    %653 = vector.load %arg3[%c9_304, %c0_305] : memref<10x64xf32, #tpu.memory_space<vmem>>, vector<1x64xf32>
    %654 = vector.shape_cast %653 : vector<1x64xf32> to vector<64xf32>
    %655 = vector.shape_cast %654 : vector<64xf32> to vector<1x64xf32>
    %656 = vector.broadcast %655 : vector<1x64xf32> to vector<64x64xf32>
    %657 = arith.addf %652, %656 : vector<64x64xf32>
    %cst_306 = arith.constant 5.000000e-01 : f32
    %658 = vector.broadcast %cst_306 : f32 to vector<64x64xf32>
    %659 = arith.mulf %658, %657 : vector<64x64xf32>
    %cst_307 = arith.constant 4.471500e-02 : f32
    %660 = vector.broadcast %cst_307 : f32 to vector<64x64xf32>
    %661 = arith.mulf %660, %657 : vector<64x64xf32>
    %662 = arith.mulf %661, %657 : vector<64x64xf32>
    %663 = arith.mulf %662, %657 : vector<64x64xf32>
    %664 = arith.addf %657, %663 : vector<64x64xf32>
    %cst_308 = arith.constant 0.797884583 : f32
    %665 = vector.broadcast %cst_308 : f32 to vector<64x64xf32>
    %666 = arith.mulf %665, %664 : vector<64x64xf32>
    %667 = math.tanh %666 : vector<64x64xf32>
    %cst_309 = arith.constant 1.000000e+00 : f32
    %668 = vector.broadcast %cst_309 : f32 to vector<64x64xf32>
    %669 = arith.addf %668, %667 : vector<64x64xf32>
    %670 = arith.mulf %659, %669 : vector<64x64xf32>
    %671 = arith.addf %205, %670 : vector<64x64xf32>
    %672 = tpu.transpose %671, [1, 0] : vector<64x64xf32> -> vector<64x64xf32>
    %c0_310 = arith.constant 0 : index
    %c0_311 = arith.constant 0 : index
    %c0_312 = arith.constant 0 : index
    %673 = vector.load %arg12[%c0_310, %c0_311, %c0_312] : memref<1x64x64xf32, #tpu.memory_space<vmem>>, vector<1x64x64xf32>
    %674 = vector.shape_cast %673 : vector<1x64x64xf32> to vector<64x64xf32>
    %675 = vector.shape_cast %672 : vector<64x64xf32> to vector<1x64x64xf32>
    tpu.vector_store %arg12[%c0_310, %c0_311, %c0_312], %675 {strides = array<i32>} : memref<1x64x64xf32, #tpu.memory_space<vmem>>, vector<1x64x64xf32>,
    return
  }
  func.func @transform_0(%arg0: i32) -> (i32, i32, i32) {
    %c0_i32 = arith.constant 0 : i32
    %c0_i32_0 = arith.constant 0 : i32
    %c0_i32_1 = arith.constant 0 : i32
    return %arg0, %c0_i32, %c0_i32_0 : i32, i32, i32
  }
  func.func @transform_1(%arg0: i32) -> (i32, i32, i32) {
    %c0_i32 = arith.constant 0 : i32
    %c0_i32_0 = arith.constant 0 : i32
    %c0_i32_1 = arith.constant 0 : i32
    return %arg0, %c0_i32, %c0_i32_0 : i32, i32, i32
  }
  func.func @transform_2(%arg0: i32) -> (i32, i32) {
    %c0_i32 = arith.constant 0 : i32
    %c0_i32_0 = arith.constant 0 : i32
    %c0_i32_1 = arith.constant 0 : i32
    return %c0_i32, %c0_i32_0 : i32, i32
  }
  func.func @transform_3(%arg0: i32) -> (i32, i32) {
    %c0_i32 = arith.constant 0 : i32
    %c0_i32_0 = arith.constant 0 : i32
    %c0_i32_1 = arith.constant 0 : i32
    return %c0_i32, %c0_i32_0 : i32, i32
  }
  func.func @transform_4(%arg0: i32) -> (i32, i32) {
    %c0_i32 = arith.constant 0 : i32
    %c0_i32_0 = arith.constant 0 : i32
    %c0_i32_1 = arith.constant 0 : i32
    return %c0_i32, %c0_i32_0 : i32, i32
  }
  func.func @transform_5(%arg0: i32) -> (i32, i32) {
    %c0_i32 = arith.constant 0 : i32
    %c0_i32_0 = arith.constant 0 : i32
    %c0_i32_1 = arith.constant 0 : i32
    return %c0_i32, %c0_i32_0 : i32, i32
  }
  func.func @transform_6(%arg0: i32) -> (i32, i32) {
    %c0_i32 = arith.constant 0 : i32
    %c0_i32_0 = arith.constant 0 : i32
    %c0_i32_1 = arith.constant 0 : i32
    return %c0_i32, %c0_i32_0 : i32, i32
  }
  func.func @transform_7(%arg0: i32) -> (i32, i32) {
    %c0_i32 = arith.constant 0 : i32
    %c0_i32_0 = arith.constant 0 : i32
    %c0_i32_1 = arith.constant 0 : i32
    return %c0_i32, %c0_i32_0 : i32, i32
  }
  func.func @transform_8(%arg0: i32) -> (i32, i32) {
    %c0_i32 = arith.constant 0 : i32
    %c0_i32_0 = arith.constant 0 : i32
    %c0_i32_1 = arith.constant 0 : i32
    return %c0_i32, %c0_i32_0 : i32, i32
  }
  func.func @transform_9(%arg0: i32) -> (i32, i32) {
    %c0_i32 = arith.constant 0 : i32
    %c0_i32_0 = arith.constant 0 : i32
    %c0_i32_1 = arith.constant 0 : i32
    return %c0_i32, %c0_i32_0 : i32, i32
  }
  func.func @transform_10(%arg0: i32) -> (i32, i32) {
    %c0_i32 = arith.constant 0 : i32
    %c0_i32_0 = arith.constant 0 : i32
    %c0_i32_1 = arith.constant 0 : i32
    return %c0_i32, %c0_i32_0 : i32, i32
  }
  func.func @transform_11(%arg0: i32) -> (i32, i32, i32) {
    %c0_i32 = arith.constant 0 : i32
    %c0_i32_0 = arith.constant 0 : i32
    %c0_i32_1 = arith.constant 0 : i32
    return %arg0, %c0_i32, %c0_i32_0 : i32, i32, i32
  }
}

</mosaic_0001>

<llo_original>
// kernel: newde_block_forward.1
$region0: #{newde_block_forward.1}
  #allocation0 [shape = 'u32[]', space=smem, size = 0x4, offset = 0x4, fixed_abs, tag = 'smem constant byte address 0x4 - core index']
  #allocation1 [shape = 'u32[72,128]{1,0:T(1,128)}', space=vmem, size = 0x9000, scoped, tag = 'internal scratch']
  #allocation2 [shape = 'f32[14,14,64]{2,1,0:T(8,128)}', space=vmem, size = 0x1c000, scoped, tag = 'scratch operand']
  %s0 = inlined_call_operand.vmem [shape: f32[2,64,64], index: 0, kind: input, shape index: {}]
  %s1 = inlined_call_operand.vmem [shape: f32[2,32,16], index: 1, kind: input, shape index: {}]
  %s2 = inlined_call_operand.vmem [shape: f32[10,64], index: 2, kind: input, shape index: {}]
  %s3 = inlined_call_operand.vmem [shape: f32[32,2], index: 3, kind: input, shape index: {}]
  %s4 = inlined_call_operand.vmem [shape: f32[3,256], index: 4, kind: input, shape index: {}]
  %s5 = inlined_call_operand.vmem [shape: bf16[64,64], index: 5, kind: input, shape index: {}]
  %s6 = inlined_call_operand.vmem [shape: bf16[32,196], index: 6, kind: input, shape index: {}]
  %s7 = inlined_call_operand.vmem [shape: f32[68,64], index: 7, kind: input, shape index: {}]
  %s8 = inlined_call_operand.vmem [shape: f32[49,64], index: 8, kind: input, shape index: {}]
  %s9 = inlined_call_operand.vmem [shape: bf16[64,256], index: 9, kind: input, shape index: {}]
  %s10 = inlined_call_operand.vmem [shape: bf16[256,64], index: 10, kind: input, shape index: {}]
  %s11 = inlined_call_operand.vmem [shape: f32[2,64,64], index: 11, kind: output, shape index: {}]
  %s12 = sld [smem:[#allocation0]]
  $region77: #{newde_block_forward.1} parent=0
    _
  %s14 = ssub.s32 1, %s12
  %s15 = scalar_select 0, %s14, %s12
  loop: start=0, step=1, limit=4
  $region2: #{newde_block_forward.1} parent=0 // loop_pre_header
    _
  $region3: #{newde_block_forward.1} parent=0 // loop_header
    %s17 = sphi 0, %s21
    %p18 = scmp.ge.s32.totalorder %s17, 4
    %s27 = sphi 0, %s29
    %s30 = sphi 0, %s27
    %s31 = sphi 0, %s30
    %s47 = sphi 0, %s31
    %s53 = sphi 0, %s55
    %s56 = sphi 0, %s53
    %s57 = sphi 0, %s56
    %s73 = sphi 0, %s57
    %s77 = sphi 0, %s77
    %s79 = sphi 0, %s77
    %s80 = sphi 0, %s79
    %s94 = sphi 0, %s80
    %s98 = sphi 0, %s98
    %s100 = sphi 0, %s98
    %s101 = sphi 0, %s100
    %s115 = sphi 0, %s101
    %s119 = sphi 0, %s119
    %s121 = sphi 0, %s119
    %s122 = sphi 0, %s121
    %s136 = sphi 0, %s122
    %s140 = sphi 0, %s140
    %s142 = sphi 0, %s140
    %s143 = sphi 0, %s142
    %s157 = sphi 0, %s143
    %s161 = sphi 0, %s161
    %s163 = sphi 0, %s161
    %s164 = sphi 0, %s163
    %s178 = sphi 0, %s164
    %s182 = sphi 0, %s182
    %s184 = sphi 0, %s182
    %s185 = sphi 0, %s184
    %s199 = sphi 0, %s185
    %s203 = sphi 0, %s203
    %s205 = sphi 0, %s203
    %s206 = sphi 0, %s205
    %s220 = sphi 0, %s206
    %s224 = sphi 0, %s224
    %s226 = sphi 0, %s224
    %s227 = sphi 0, %s226
    %s241 = sphi 0, %s227
    %s245 = sphi 0, %s245
    %s247 = sphi 0, %s245
    %s248 = sphi 0, %s247
    %s262 = sphi 0, %s248
    %s268 = sphi 0, %s270
    %s271 = sphi 0, %s268
    %s272 = sphi 0, %s271
    %s288 = sphi 0, %s272
  $region4: #{newde_block_forward.1} parent=0 // loop_header_branch
    %20 = sbr.rel (%p18) target = $region8
  $region5: #{newde_block_forward.1} parent=0 // loop_body
    %s22 = ssub.s32 %s17, 1
    %s23 = ssub.s32 %s17, 2
    %s24 = sadd.s32 %s17, 1
    %s25 = ssub.s32 %s17, %s24
    %p26 = scmp.eq.s32.totalorder %s25, 0
    %s28 = sadd.s32 %s27, 1
    %s29 = scalar_select %p26, %s27, %s28
    %p32 = pneg %p26
    %p33 = scmp.eq.s32.totalorder %s17, 1
    %p34 = por %p32, %p33
    %p35 = scmp.ne.s32.totalorder %s27, %s30
    %p36 = scmp.eq.s32.totalorder %s17, 0
    %p37 = por %p35, %p36
    %p38 = scmp.ne.s32.totalorder %s27, %s30
    %p39 = scmp.eq.s32.totalorder %s22, 1
    %p40 = por %p38, %p39
    %p41 = scmp.ne.s32.totalorder %s30, %s31
    %p42 = scmp.eq.s32.totalorder %s22, 0
    %p43 = por %p41, %p42
    %p44 = scmp.ne.s32.totalorder %s30, %s31
    %p45 = scmp.eq.s32.totalorder %s23, 1
    %p46 = por %p44, %p45
    %p48 = scmp.ne.s32.totalorder %s31, %s47
    %p49 = scmp.eq.s32.totalorder %s23, 0
    %p50 = por %p48, %p49
    %s51 = ssub.s32 %s17, %s24
    %p52 = scmp.eq.s32.totalorder %s51, 0
    %s54 = sadd.s32 %s53, 1
    %s55 = scalar_select %p52, %s53, %s54
    %p58 = pneg %p52
    %p59 = scmp.eq.s32.totalorder %s17, 1
    %p60 = por %p58, %p59
    %p61 = scmp.ne.s32.totalorder %s53, %s56
    %p62 = scmp.eq.s32.totalorder %s17, 0
    %p63 = por %p61, %p62
    %p64 = scmp.ne.s32.totalorder %s53, %s56
    %p65 = scmp.eq.s32.totalorder %s22, 1
    %p66 = por %p64, %p65
    %p67 = scmp.ne.s32.totalorder %s56, %s57
    %p68 = scmp.eq.s32.totalorder %s22, 0
    %p69 = por %p67, %p68
    %p70 = scmp.ne.s32.totalorder %s56, %s57
    %p71 = scmp.eq.s32.totalorder %s23, 1
    %p72 = por %p70, %p71
    %p74 = scmp.ne.s32.totalorder %s57, %s73
    %p75 = scmp.eq.s32.totalorder %s23, 0
    %p76 = por %p74, %p75
    %s78 = sadd.s32 %s77, 1
    %p81 = scmp.eq.s32.totalorder %s17, 1
    %p82 = scmp.ne.s32.totalorder %s77, %s79
    %p83 = scmp.eq.s32.totalorder %s17, 0
    %p84 = por %p82, %p83
    %p85 = scmp.ne.s32.totalorder %s77, %s79
    %p86 = scmp.eq.s32.totalorder %s22, 1
    %p87 = por %p85, %p86
    %p88 = scmp.ne.s32.totalorder %s79, %s80
    %p89 = scmp.eq.s32.totalorder %s22, 0
    %p90 = por %p88, %p89
    %p91 = scmp.ne.s32.totalorder %s79, %s80
    %p92 = scmp.eq.s32.totalorder %s23, 1
    %p93 = por %p91, %p92
    %p95 = scmp.ne.s32.totalorder %s80, %s94
    %p96 = scmp.eq.s32.totalorder %s23, 0
    %p97 = por %p95, %p96
    %s99 = sadd.s32 %s98, 1
    %p102 = scmp.eq.s32.totalorder %s17, 1
    %p103 = scmp.ne.s32.totalorder %s98, %s100
    %p104 = scmp.eq.s32.totalorder %s17, 0
    %p105 = por %p103, %p104
    %p106 = scmp.ne.s32.totalorder %s98, %s100
    %p107 = scmp.eq.s32.totalorder %s22, 1
    %p108 = por %p106, %p107
    %p109 = scmp.ne.s32.totalorder %s100, %s101
    %p110 = scmp.eq.s32.totalorder %s22, 0
    %p111 = por %p109, %p110
    %p112 = scmp.ne.s32.totalorder %s100, %s101
    %p113 = scmp.eq.s32.totalorder %s23, 1
    %p114 = por %p112, %p113
    %p116 = scmp.ne.s32.totalorder %s101, %s115
    %p117 = scmp.eq.s32.totalorder %s23, 0
    %p118 = por %p116, %p117
    %s120 = sadd.s32 %s119, 1
    %p123 = scmp.eq.s32.totalorder %s17, 1
    %p124 = scmp.ne.s32.totalorder %s119, %s121
    %p125 = scmp.eq.s32.totalorder %s17, 0
    %p126 = por %p124, %p125
    %p127 = scmp.ne.s32.totalorder %s119, %s121
    %p128 = scmp.eq.s32.totalorder %s22, 1
    %p129 = por %p127, %p128
    %p130 = scmp.ne.s32.totalorder %s121, %s122
    %p131 = scmp.eq.s32.totalorder %s22, 0
    %p132 = por %p130, %p131
    %p133 = scmp.ne.s32.totalorder %s121, %s122
    %p134 = scmp.eq.s32.totalorder %s23, 1
    %p135 = por %p133, %p134
    %p137 = scmp.ne.s32.totalorder %s122, %s136
    %p138 = scmp.eq.s32.totalorder %s23, 0
    %p139 = por %p137, %p138
    %s141 = sadd.s32 %s140, 1
    %p144 = scmp.eq.s32.totalorder %s17, 1
    %p145 = scmp.ne.s32.totalorder %s140, %s142
    %p146 = scmp.eq.s32.totalorder %s17, 0
    %p147 = por %p145, %p146
    %p148 = scmp.ne.s32.totalorder %s140, %s142
    %p149 = scmp.eq.s32.totalorder %s22, 1
    %p150 = por %p148, %p149
    %p151 = scmp.ne.s32.totalorder %s142, %s143
    %p152 = scmp.eq.s32.totalorder %s22, 0
    %p153 = por %p151, %p152
    %p154 = scmp.ne.s32.totalorder %s142, %s143
    %p155 = scmp.eq.s32.totalorder %s23, 1
    %p156 = por %p154, %p155
    %p158 = scmp.ne.s32.totalorder %s143, %s157
    %p159 = scmp.eq.s32.totalorder %s23, 0
    %p160 = por %p158, %p159
    %s162 = sadd.s32 %s161, 1
    %p165 = scmp.eq.s32.totalorder %s17, 1
    %p166 = scmp.ne.s32.totalorder %s161, %s163
    %p167 = scmp.eq.s32.totalorder %s17, 0
    %p168 = por %p166, %p167
    %p169 = scmp.ne.s32.totalorder %s161, %s163
    %p170 = scmp.eq.s32.totalorder %s22, 1
    %p171 = por %p169, %p170
    %p172 = scmp.ne.s32.totalorder %s163, %s164
    %p173 = scmp.eq.s32.totalorder %s22, 0
    %p174 = por %p172, %p173
    %p175 = scmp.ne.s32.totalorder %s163, %s164
    %p176 = scmp.eq.s32.totalorder %s23, 1
    %p177 = por %p175, %p176
    %p179 = scmp.ne.s32.totalorder %s164, %s178
    %p180 = scmp.eq.s32.totalorder %s23, 0
    %p181 = por %p179, %p180
    %s183 = sadd.s32 %s182, 1
    %p186 = scmp.eq.s32.totalorder %s17, 1
    %p187 = scmp.ne.s32.totalorder %s182, %s184
    %p188 = scmp.eq.s32.totalorder %s17, 0
    %p189 = por %p187, %p188
    %p190 = scmp.ne.s32.totalorder %s182, %s184
    %p191 = scmp.eq.s32.totalorder %s22, 1
    %p192 = por %p190, %p191
    %p193 = scmp.ne.s32.totalorder %s184, %s185
    %p194 = scmp.eq.s32.totalorder %s22, 0
    %p195 = por %p193, %p194
    %p196 = scmp.ne.s32.totalorder %s184, %s185
    %p197 = scmp.eq.s32.totalorder %s23, 1
    %p198 = por %p196, %p197
    %p200 = scmp.ne.s32.totalorder %s185, %s199
    %p201 = scmp.eq.s32.totalorder %s23, 0
    %p202 = por %p200, %p201
    %s204 = sadd.s32 %s203, 1
    %p207 = scmp.eq.s32.totalorder %s17, 1
    %p208 = scmp.ne.s32.totalorder %s203, %s205
    %p209 = scmp.eq.s32.totalorder %s17, 0
    %p210 = por %p208, %p209
    %p211 = scmp.ne.s32.totalorder %s203, %s205
    %p212 = scmp.eq.s32.totalorder %s22, 1
    %p213 = por %p211, %p212
    %p214 = scmp.ne.s32.totalorder %s205, %s206
    %p215 = scmp.eq.s32.totalorder %s22, 0
    %p216 = por %p214, %p215
    %p217 = scmp.ne.s32.totalorder %s205, %s206
    %p218 = scmp.eq.s32.totalorder %s23, 1
    %p219 = por %p217, %p218
    %p221 = scmp.ne.s32.totalorder %s206, %s220
    %p222 = scmp.eq.s32.totalorder %s23, 0
    %p223 = por %p221, %p222
    %s225 = sadd.s32 %s224, 1
    %p228 = scmp.eq.s32.totalorder %s17, 1
    %p229 = scmp.ne.s32.totalorder %s224, %s226
    %p230 = scmp.eq.s32.totalorder %s17, 0
    %p231 = por %p229, %p230
    %p232 = scmp.ne.s32.totalorder %s224, %s226
    %p233 = scmp.eq.s32.totalorder %s22, 1
    %p234 = por %p232, %p233
    %p235 = scmp.ne.s32.totalorder %s226, %s227
    %p236 = scmp.eq.s32.totalorder %s22, 0
    %p237 = por %p235, %p236
    %p238 = scmp.ne.s32.totalorder %s226, %s227
    %p239 = scmp.eq.s32.totalorder %s23, 1
    %p240 = por %p238, %p239
    %p242 = scmp.ne.s32.totalorder %s227, %s241
    %p243 = scmp.eq.s32.totalorder %s23, 0
    %p244 = por %p242, %p243
    %s246 = sadd.s32 %s245, 1
    %p249 = scmp.eq.s32.totalorder %s17, 1
    %p250 = scmp.ne.s32.totalorder %s245, %s247
    %p251 = scmp.eq.s32.totalorder %s17, 0
    %p252 = por %p250, %p251
    %p253 = scmp.ne.s32.totalorder %s245, %s247
    %p254 = scmp.eq.s32.totalorder %s22, 1
    %p255 = por %p253, %p254
    %p256 = scmp.ne.s32.totalorder %s247, %s248
    %p257 = scmp.eq.s32.totalorder %s22, 0
    %p258 = por %p256, %p257
    %p259 = scmp.ne.s32.totalorder %s247, %s248
    %p260 = scmp.eq.s32.totalorder %s23, 1
    %p261 = por %p259, %p260
    %p263 = scmp.ne.s32.totalorder %s248, %s262
    %p264 = scmp.eq.s32.totalorder %s23, 0
    %p265 = por %p263, %p264
    %s266 = ssub.s32 %s17, %s24
    %p267 = scmp.eq.s32.totalorder %s266, 0
    %s269 = sadd.s32 %s268, 1
    %s270 = scalar_select %p267, %s268, %s269
    %p273 = pneg %p267
    %p274 = scmp.eq.s32.totalorder %s17, 1
    %p275 = por %p273, %p274
    %p276 = scmp.ne.s32.totalorder %s268, %s271
    %p277 = scmp.eq.s32.totalorder %s17, 0
    %p278 = por %p276, %p277
    %p279 = scmp.ne.s32.totalorder %s268, %s271
    %p280 = scmp.eq.s32.totalorder %s22, 1
    %p281 = por %p279, %p280
    %p282 = scmp.ne.s32.totalorder %s271, %s272
    %p283 = scmp.eq.s32.totalorder %s22, 0
    %p284 = por %p282, %p283
    %p285 = scmp.ne.s32.totalorder %s271, %s272
    %p286 = scmp.eq.s32.totalorder %s23, 1
    %p287 = por %p285, %p286
    %p289 = scmp.ne.s32.totalorder %s272, %s288
    %p290 = scmp.eq.s32.totalorder %s23, 0
    %p291 = por %p289, %p290
    %p292 = scmp.le.s32.totalorder 1, %s17
    %p293 = scmp.lt.s32.totalorder %s17, 3
    %p294 = pnand %p292, %p293
    %p295 = pneg %p294
    // Predicated region
    $region9: #{newde_block_forward.1} parent=5 // pred_check
      _
    $region10: #{newde_block_forward.1} parent=5 // pred_check_branch
      %297 = sbr.rel (%p294) target = $region12
    $region11: #{newde_block_forward.1} parent=5 // pred_region
      %s298 = ssub.s32 %s17, 1
      // Predicated region
      $region13: #{newde_block_forward.1} parent=11 // pred_check
        %p299 = pneg %p90
      $region14: #{newde_block_forward.1} parent=11 // pred_check_branch
        %301 = sbr.rel (%p299) target = $region16
      $region15: #{newde_block_forward.1} parent=11 // pred_region
        _
      $region16: #{newde_block_forward.1} parent=11 // pred_fallthru
        _
      // Predicated region
      $region17: #{newde_block_forward.1} parent=11 // pred_check
        %p302 = pneg %p111
      $region18: #{newde_block_forward.1} parent=11 // pred_check_branch
        %304 = sbr.rel (%p302) target = $region20
      $region19: #{newde_block_forward.1} parent=11 // pred_region
        _
      $region20: #{newde_block_forward.1} parent=11 // pred_fallthru
        _
      // Predicated region
      $region21: #{newde_block_forward.1} parent=11 // pred_check
        %p305 = pneg %p132
      $region22: #{newde_block_forward.1} parent=11 // pred_check_branch
        %307 = sbr.rel (%p305) target = $region24
      $region23: #{newde_block_forward.1} parent=11 // pred_region
        _
      $region24: #{newde_block_forward.1} parent=11 // pred_fallthru
        _
      // Predicated region
      $region25: #{newde_block_forward.1} parent=11 // pred_check
        %p308 = pneg %p153
      $region26: #{newde_block_forward.1} parent=11 // pred_check_branch
        %310 = sbr.rel (%p308) target = $region28
      $region27: #{newde_block_forward.1} parent=11 // pred_region
        _
      $region28: #{newde_block_forward.1} parent=11 // pred_fallthru
        _
      // Predicated region
      $region29: #{newde_block_forward.1} parent=11 // pred_check
        %p311 = pneg %p174
      $region30: #{newde_block_forward.1} parent=11 // pred_check_branch
        %313 = sbr.rel (%p311) target = $region32
      $region31: #{newde_block_forward.1} parent=11 // pred_region
        _
      $region32: #{newde_block_forward.1} parent=11 // pred_fallthru
        _
      // Predicated region
      $region33: #{newde_block_forward.1} parent=11 // pred_check
        %p314 = pneg %p195
      $region34: #{newde_block_forward.1} parent=11 // pred_check_branch
        %316 = sbr.rel (%p314) target = $region36
      $region35: #{newde_block_forward.1} parent=11 // pred_region
        _
      $region36: #{newde_block_forward.1} parent=11 // pred_fallthru
        _
      // Predicated region
      $region37: #{newde_block_forward.1} parent=11 // pred_check
        %p317 = pneg %p216
      $region38: #{newde_block_forward.1} parent=11 // pred_check_branch
        %319 = sbr.rel (%p317) target = $region40
      $region39: #{newde_block_forward.1} parent=11 // pred_region
        _
      $region40: #{newde_block_forward.1} parent=11 // pred_fallthru
        _
      // Predicated region
      $region41: #{newde_block_forward.1} parent=11 // pred_check
        %p320 = pneg %p237
      $region42: #{newde_block_forward.1} parent=11 // pred_check_branch
        %322 = sbr.rel (%p320) target = $region44
      $region43: #{newde_block_forward.1} parent=11 // pred_region
        _
      $region44: #{newde_block_forward.1} parent=11 // pred_fallthru
        _
      // Predicated region
      $region45: #{newde_block_forward.1} parent=11 // pred_check
        %p323 = pneg %p258
      $region46: #{newde_block_forward.1} parent=11 // pred_check_branch
        %325 = sbr.rel (%p323) target = $region48
      $region47: #{newde_block_forward.1} parent=11 // pred_region
        _
      $region48: #{newde_block_forward.1} parent=11 // pred_fallthru
        _
    $region12: #{newde_block_forward.1} parent=5 // pred_fallthru
      _
    %p326 = scmp.lt.s32.totalorder %s17, 2
    // Predicated region
    $region49: #{newde_block_forward.1} parent=5 // pred_check
      %p327 = pneg %p326
    $region50: #{newde_block_forward.1} parent=5 // pred_check_branch
      %329 = sbr.rel (%p327) target = $region52
    $region51: #{newde_block_forward.1} parent=5 // pred_region
      // Predicated region
      $region53: #{newde_block_forward.1} parent=51 // pred_check
        %p330 = pneg %p37
      $region54: #{newde_block_forward.1} parent=51 // pred_check_branch
        %332 = sbr.rel (%p330) target = $region56
      $region55: #{newde_block_forward.1} parent=51 // pred_region
        %p333 = scmp.lt.s32.totalorder %s17, 1
        %s334 = scalar_select %p333, %s17, 1
        %s335 = smul.addr %s334, 8
        %s336 = smul.addr %s335, 8
        %s337 = scalar_lea.vmem %s0, %s336
      $region56: #{newde_block_forward.1} parent=51 // pred_fallthru
        _
      // Predicated region
      $region57: #{newde_block_forward.1} parent=51 // pred_check
        %p338 = pneg %p63
      $region58: #{newde_block_forward.1} parent=51 // pred_check_branch
        %340 = sbr.rel (%p338) target = $region60
      $region59: #{newde_block_forward.1} parent=51 // pred_region
        %p341 = scmp.lt.s32.totalorder %s17, 1
        %s342 = scalar_select %p341, %s17, 1
        %s343 = smul.addr %s342, 4
        %s344 = smul.addr %s343, 8
        %s345 = scalar_lea.vmem %s1, %s344
      $region60: #{newde_block_forward.1} parent=51 // pred_fallthru
        _
    $region52: #{newde_block_forward.1} parent=5 // pred_fallthru
      _
    %p346 = scmp.le.s32.totalorder 1, %s17
    %p347 = scmp.lt.s32.totalorder %s17, 3
    %p348 = pnand %p346, %p347
    %p349 = pneg %p348
    // Predicated region
    $region61: #{newde_block_forward.1} parent=5 // pred_check
      _
    $region62: #{newde_block_forward.1} parent=5 // pred_check_branch
      %351 = sbr.rel (%p348) target = $region64
    $region63: #{newde_block_forward.1} parent=5 // pred_region
      %s352 = ssub.s32 %s17, 1
      %p353 = scmp.lt.s32.totalorder %s22, 1
      %s354 = scalar_select %p353, %s22, 1
      %s355 = smul.addr %s354, 8
      %s356 = smul.addr %s355, 8
      %s357 = scalar_lea.vmem %s0, %s356
      %p358 = pneg %p43
      %p359 = pneg %p40
      %p360 = scmp.lt.s32.totalorder %s22, 1
      %s361 = scalar_select %p360, %s22, 1
      %s362 = smul.addr %s361, 4
      %s363 = smul.addr %s362, 8
      %s364 = scalar_lea.vmem %s1, %s363
      %p365 = pneg %p69
      %p366 = pneg %p66
      %p367 = pneg %p90
      %p368 = pneg %p87
      %p369 = pneg %p111
      %p370 = pneg %p108
      %p371 = pneg %p132
      %p372 = pneg %p129
      %p373 = pneg %p153
      %p374 = pneg %p150
      %p375 = pneg %p174
      %p376 = pneg %p171
      %p377 = pneg %p195
      %p378 = pneg %p192
      %p379 = pneg %p216
      %p380 = pneg %p213
      %p381 = pneg %p237
      %p382 = pneg %p234
      %p383 = pneg %p258
      %p384 = pneg %p255
      %p385 = pneg %p284
      %p386 = pneg %p281
      %p387 = scmp.lt.s32.totalorder %s22, 1
      %s388 = scalar_select %p387, %s22, 1
      %s389 = smul.addr %s388, 8
      %s390 = smul.addr %s389, 8
      %s391 = scalar_lea.vmem %s11, %s390
      %p392 = scmp.lt.s32.totalorder %s22, 1
      %s393 = scalar_select %p392, %s22, 1
      %s394 = smul.addr %s393, 8
      %s395 = smul.addr %s394, 8
      %s396 = scalar_lea.vmem %s0, %s395
      %p397 = scmp.lt.s32.totalorder %s22, 1
      %s398 = scalar_select %p397, %s22, 1
      %s399 = smul.addr %s398, 4
      %s400 = smul.addr %s399, 8
      %s401 = scalar_lea.vmem %s1, %s400
      %p402 = scmp.lt.s32.totalorder %s22, 1
      %s403 = scalar_select %p402, %s22, 1
      %s404 = smul.addr %s403, 8
      %s405 = smul.addr %s404, 8
      %s406 = scalar_lea.vmem %s11, %s405
      %v408 = vld [vmem:[%s396] sm:$0xff]
      %v409 = vld [vmem:[%s396 + $0x8] sm:$0xff]
      %v410 = vld [vmem:[%s396 + $0x10] sm:$0xff]
      %v411 = vld [vmem:[%s396 + $0x18] sm:$0xff]
      %v412 = vld [vmem:[%s396 + $0x20] sm:$0xff]
      %v413 = vld [vmem:[%s396 + $0x28] sm:$0xff]
      %v414 = vld [vmem:[%s396 + $0x30] sm:$0xff]
      %v415 = vld [vmem:[%s396 + $0x38] sm:$0xff]
      %416 = vxpose.xlu0.b32.start [1/16] %v408, 128
      %417 = vxpose.xlu0.b32.cont [2/16] %v409, 128
      %418 = vxpose.xlu0.b32.cont [3/16] %v410, 128
      %419 = vxpose.xlu0.b32.cont [4/16] %v411, 128
      %420 = vxpose.xlu0.b32.cont [5/16] %v412, 128
      %421 = vxpose.xlu0.b32.cont [6/16] %v413, 128
      %422 = vxpose.xlu0.b32.cont [7/16] %v414, 128
      %423 = vxpose.xlu0.b32.cont [8/16] %v415, 128
      %424 = vxpose.xlu0.b32.cont [9/16] 0.0, 128
      %425 = vxpose.xlu0.b32.cont [10/16] 0.0, 128
      %426 = vxpose.xlu0.b32.cont [11/16] 0.0, 128
      %427 = vxpose.xlu0.b32.cont [12/16] 0.0, 128
      %428 = vxpose.xlu0.b32.cont [13/16] 0.0, 128
      %429 = vxpose.xlu0.b32.cont [14/16] 0.0, 128
      %430 = vxpose.xlu0.b32.cont [15/16] 0.0, 128
      %431 = vxpose.xlu0.b32.end [16/16] 0.0, 128
      %v432 = vpop.trf.xlu0
      %v433 = vpop.trf.xlu0
      %v434 = vpop.trf.xlu0
      %v435 = vpop.trf.xlu0
      %v436 = vpop.trf.xlu0
      %v437 = vpop.trf.xlu0
      %v438 = vpop.trf.xlu0
      %v439 = vpop.trf.xlu0
      %v440 = vpop.trf.xlu0
      %v441 = vpop.trf.xlu0
      %v442 = vpop.trf.xlu0
      %v443 = vpop.trf.xlu0
      %v444 = vpop.trf.xlu0
      %v445 = vpop.trf.xlu0
      %v446 = vpop.trf.xlu0
      %v447 = vpop.trf.xlu0
      %v448 = vld [vmem:[%s401] sm:$0xff]
      %v449 = vld [vmem:[%s401 + $0x8] sm:$0xff]
      %v450 = vld [vmem:[%s401 + $0x10] sm:$0xff]
      %v451 = vld [vmem:[%s401 + $0x18] sm:$0xff]
      %v452 = vld [vmem:[%s2] sm:$0x1]
      %v453 = vld [vmem:[%s2 + $0x1] sm:$0x1]
      %vm454 = vcmask 523264
      %v455 = vsel %vm454, %v432, 0.0
      %456 = vadd.xlane.f32.xlu0 %v455
      %v457 = vpop.xlane.xlu0 %456
      %v458 = vsel %vm454, %v433, 0.0
      %459 = vadd.xlane.f32.xlu0 %v458
      %v460 = vpop.xlane.xlu0 %459
      %v461 = vsel %vm454, %v434, 0.0
      %462 = vadd.xlane.f32.xlu0 %v461
      %v463 = vpop.xlane.xlu0 %462
      %v464 = vsel %vm454, %v435, 0.0
      %465 = vadd.xlane.f32.xlu0 %v464
      %v466 = vpop.xlane.xlu0 %465
      %v467 = vsel %vm454, %v436, 0.0
      %468 = vadd.xlane.f32.xlu0 %v467
      %v469 = vpop.xlane.xlu0 %468
      %v470 = vsel %vm454, %v437, 0.0
      %471 = vadd.xlane.f32.xlu0 %v470
      %v472 = vpop.xlane.xlu0 %471
      %v473 = vsel %vm454, %v438, 0.0
      %474 = vadd.xlane.f32.xlu0 %v473
      %v475 = vpop.xlane.xlu0 %474
      %v476 = vsel %vm454, %v439, 0.0
      %477 = vadd.xlane.f32.xlu0 %v476
      %v478 = vpop.xlane.xlu0 %477
      %v479 = vrcp.pop 64.0
      %v480 = vmul.f32 64.0, %v479
      %v481 = vsub.f32 1.0, %v480
      %v482 = vmul.f32 %v479, %v481
      %v483 = vadd.f32 %v479, %v482
      %vm484 = vweird.f32 %v479
      %v485 = vsel %vm484, %v479, %v483
      %v486 = vmul.f32 %v457, %v485
      %v487 = vmul.f32 %v460, %v485
      %v488 = vmul.f32 %v463, %v485
      %v489 = vmul.f32 %v466, %v485
      %v490 = vmul.f32 %v469, %v485
      %v491 = vmul.f32 %v472, %v485
      %v492 = vmul.f32 %v475, %v485
      %v493 = vmul.f32 %v478, %v485
      %v494 = vsub.f32 %v432, %v486
      %v495 = vsub.f32 %v433, %v487
      %v496 = vsub.f32 %v434, %v488
      %v497 = vsub.f32 %v435, %v489
      %v498 = vsub.f32 %v436, %v490
      %v499 = vsub.f32 %v437, %v491
      %v500 = vsub.f32 %v438, %v492
      %v501 = vsub.f32 %v439, %v493
      %v502 = vmul.f32 %v494, %v494
      %v503 = vmul.f32 %v495, %v495
      %v504 = vmul.f32 %v496, %v496
      %v505 = vmul.f32 %v497, %v497
      %v506 = vmul.f32 %v498, %v498
      %v507 = vmul.f32 %v499, %v499
      %v508 = vmul.f32 %v500, %v500
      %v509 = vmul.f32 %v501, %v501
      %v510 = vsel %vm454, %v502, 0.0
      %511 = vadd.xlane.f32.xlu0 %v510
      %v512 = vpop.xlane.xlu0 %511
      %v513 = vsel %vm454, %v503, 0.0
      %514 = vadd.xlane.f32.xlu0 %v513
      %v515 = vpop.xlane.xlu0 %514
      %v516 = vsel %vm454, %v504, 0.0
      %517 = vadd.xlane.f32.xlu0 %v516
      %v518 = vpop.xlane.xlu0 %517
      %v519 = vsel %vm454, %v505, 0.0
      %520 = vadd.xlane.f32.xlu0 %v519
      %v521 = vpop.xlane.xlu0 %520
      %v522 = vsel %vm454, %v506, 0.0
      %523 = vadd.xlane.f32.xlu0 %v522
      %v524 = vpop.xlane.xlu0 %523
      %v525 = vsel %vm454, %v507, 0.0
      %526 = vadd.xlane.f32.xlu0 %v525
      %v527 = vpop.xlane.xlu0 %526
      %v528 = vsel %vm454, %v508, 0.0
      %529 = vadd.xlane.f32.xlu0 %v528
      %v530 = vpop.xlane.xlu0 %529
      %v531 = vsel %vm454, %v509, 0.0
      %532 = vadd.xlane.f32.xlu0 %v531
      %v533 = vpop.xlane.xlu0 %532
      %v534 = vmul.f32 %v512, %v485
      %v535 = vmul.f32 %v515, %v485
      %v536 = vmul.f32 %v518, %v485
      %v537 = vmul.f32 %v521, %v485
      %v538 = vmul.f32 %v524, %v485
      %v539 = vmul.f32 %v527, %v485
      %v540 = vmul.f32 %v530, %v485
      %v541 = vmul.f32 %v533, %v485
      %v542 = vadd.f32 %v534, 1e-05
      %v543 = vadd.f32 %v535, 1e-05
      %v544 = vadd.f32 %v536, 1e-05
      %v545 = vadd.f32 %v537, 1e-05
      %v546 = vadd.f32 %v538, 1e-05
      %v547 = vadd.f32 %v539, 1e-05
      %v548 = vadd.f32 %v540, 1e-05
      %v549 = vadd.f32 %v541, 1e-05
      %v550 = vrsqrt.pop %v542
      %v551 = vmul.f32 %v550, %v542
      %v552 = vmul.f32 %v551, %v550
      %v553 = vmul.f32 0.5, %v552
      %v554 = vsub.f32 1.5, %v553
      %v555 = vmul.f32 %v550, %v554
      %vm556 = vweird.f32 %v542
      %vm557 = vweird.f32 %v550
      %vm558 = vmor %vm556, %vm557
      %v559 = vsel %vm558, %v550, %v555
      %v560 = vrsqrt.pop %v543
      %v561 = vmul.f32 %v560, %v543
      %v562 = vmul.f32 %v561, %v560
      %v563 = vmul.f32 0.5, %v562
      %v564 = vsub.f32 1.5, %v563
      %v565 = vmul.f32 %v560, %v564
      %vm566 = vweird.f32 %v543
      %vm567 = vweird.f32 %v560
      %vm568 = vmor %vm566, %vm567
      %v569 = vsel %vm568, %v560, %v565
      %v570 = vrsqrt.pop %v544
      %v571 = vmul.f32 %v570, %v544
      %v572 = vmul.f32 %v571, %v570
      %v573 = vmul.f32 0.5, %v572
      %v574 = vsub.f32 1.5, %v573
      %v575 = vmul.f32 %v570, %v574
      %vm576 = vweird.f32 %v544
      %vm577 = vweird.f32 %v570
      %vm578 = vmor %vm576, %vm577
      %v579 = vsel %vm578, %v570, %v575
      %v580 = vrsqrt.pop %v545
      %v581 = vmul.f32 %v580, %v545
      %v582 = vmul.f32 %v581, %v580
      %v583 = vmul.f32 0.5, %v582
      %v584 = vsub.f32 1.5, %v583
      %v585 = vmul.f32 %v580, %v584
      %vm586 = vweird.f32 %v545
      %vm587 = vweird.f32 %v580
      %vm588 = vmor %vm586, %vm587
      %v589 = vsel %vm588, %v580, %v585
      %v590 = vrsqrt.pop %v546
      %v591 = vmul.f32 %v590, %v546
      %v592 = vmul.f32 %v591, %v590
      %v593 = vmul.f32 0.5, %v592
      %v594 = vsub.f32 1.5, %v593
      %v595 = vmul.f32 %v590, %v594
      %vm596 = vweird.f32 %v546
      %vm597 = vweird.f32 %v590
      %vm598 = vmor %vm596, %vm597
      %v599 = vsel %vm598, %v590, %v595
      %v600 = vrsqrt.pop %v547
      %v601 = vmul.f32 %v600, %v547
      %v602 = vmul.f32 %v601, %v600
      %v603 = vmul.f32 0.5, %v602
      %v604 = vsub.f32 1.5, %v603
      %v605 = vmul.f32 %v600, %v604
      %vm606 = vweird.f32 %v547
      %vm607 = vweird.f32 %v600
      %vm608 = vmor %vm606, %vm607
      %v609 = vsel %vm608, %v600, %v605
      %v610 = vrsqrt.pop %v548
      %v611 = vmul.f32 %v610, %v548
      %v612 = vmul.f32 %v611, %v610
      %v613 = vmul.f32 0.5, %v612
      %v614 = vsub.f32 1.5, %v613
      %v615 = vmul.f32 %v610, %v614
      %vm616 = vweird.f32 %v548
      %vm617 = vweird.f32 %v610
      %vm618 = vmor %vm616, %vm617
      %v619 = vsel %vm618, %v610, %v615
      %v620 = vrsqrt.pop %v549
      %v621 = vmul.f32 %v620, %v549
      %v622 = vmul.f32 %v621, %v620
      %v623 = vmul.f32 0.5, %v622
      %v624 = vsub.f32 1.5, %v623
      %v625 = vmul.f32 %v620, %v624
      %vm626 = vweird.f32 %v549
      %vm627 = vweird.f32 %v620
      %vm628 = vmor %vm626, %vm627
      %v629 = vsel %vm628, %v620, %v625
      %v630 = vmul.f32 %v494, %v559
      %v631 = vmul.f32 %v495, %v569
      %v632 = vmul.f32 %v496, %v579
      %v633 = vmul.f32 %v497, %v589
      %v634 = vmul.f32 %v498, %v599
      %v635 = vmul.f32 %v499, %v609
      %v636 = vmul.f32 %v500, %v619
      %v637 = vmul.f32 %v501, %v629
      %v638 = vperm.slane %v452, 0
      %v639 = vmul.f32 %v630, %v638
      %v640 = vmul.f32 %v631, %v638
      %v641 = vmul.f32 %v632, %v638
      %v642 = vmul.f32 %v633, %v638
      %v643 = vmul.f32 %v634, %v638
      %v644 = vmul.f32 %v635, %v638
      %v645 = vmul.f32 %v636, %v638
      %v646 = vmul.f32 %v637, %v638
      %v647 = vperm.slane %v453, 0
      %v648 = vadd.f32 %v639, %v647
      %v649 = vadd.f32 %v640, %v647
      %v650 = vadd.f32 %v641, %v647
      %v651 = vadd.f32 %v642, %v647
      %v652 = vadd.f32 %v643, %v647
      %v653 = vadd.f32 %v644, %v647
      %v654 = vadd.f32 %v645, %v647
      %v655 = vadd.f32 %v646, %v647
      %v656 = vpack.c.bf16 %v649, %v648
      %v657 = vpack.c.bf16 %v651, %v650
      %v658 = vpack.c.bf16 %v653, %v652
      %v659 = vpack.c.bf16 %v655, %v654
      %v660 = vld [vmem:[%s5] sm:$0xf]
      %v661 = vld [vmem:[%s5 + $0x4] sm:$0xf]
      %v662 = vld [vmem:[%s5 + $0x8] sm:$0xf]
      %v663 = vld [vmem:[%s5 + $0xc] sm:$0xf]
      %v664 = vld [vmem:[%s5 + $0x10] sm:$0xf]
      %v665 = vld [vmem:[%s5 + $0x14] sm:$0xf]
      %v666 = vld [vmem:[%s5 + $0x18] sm:$0xf]
      %v667 = vld [vmem:[%s5 + $0x1c] sm:$0xf]
      %v676 = vunpack.c.l.b16 %v660
      %v677 = vunpack.c.l.b16 %v661
      %v678 = vunpack.c.l.b16 %v662
      %v679 = vunpack.c.l.b16 %v663
      %v680 = vunpack.c.l.b16 %v664
      %v681 = vunpack.c.l.b16 %v665
      %v682 = vunpack.c.l.b16 %v666
      %v683 = vunpack.c.l.b16 %v667
      %v684 = vpack.c.b16 %v677, %v676
      %v685 = vpack.c.b16 %v679, %v678
      %v686 = vpack.c.b16 %v681, %v680
      %v687 = vpack.c.b16 %v683, %v682
      %v693 = vsel %vm454, %v656, 0
      %v696 = vsel %vm454, %v657, 0
      %v699 = vsel %vm454, %v658, 0
      %v702 = vsel %vm454, %v659, 0
      %704 = vmatpush.bf16.msra.mxu0 0
      %705 = vmatpush.bf16.msra.mxu0 0
      %706 = vmatpush.bf16.msra.mxu0 0
      %707 = vmatpush.bf16.msra.mxu0 0
      %708 = vmatpush.bf16.msra.mxu0 %v687
      %709 = vmatpush.bf16.msra.mxu0 %v686
      %710 = vmatpush.bf16.msra.mxu0 %v685
      %711 = vmatpush.bf16.msra.mxu0 %v684
      %712 = vmatmul.bf16.gmra.mxu0 %v693
      %v713 = vpop.f32.mrf.mxu0
      %v714 = vadd.f32 0.0, %v713
      %v715 = vpop.f32.mrf.mxu0
      %v716 = vadd.f32 0.0, %v715
      %717 = vmatmul.bf16.gmra.mxu0 %v696
      %v718 = vpop.f32.mrf.mxu0
      %v719 = vadd.f32 0.0, %v718
      %v720 = vpop.f32.mrf.mxu0
      %v721 = vadd.f32 0.0, %v720
      %722 = vmatmul.bf16.gmra.mxu0 %v699
      %v723 = vpop.f32.mrf.mxu0
      %v724 = vadd.f32 0.0, %v723
      %v725 = vpop.f32.mrf.mxu0
      %v726 = vadd.f32 0.0, %v725
      %727 = vmatmul.bf16.gmra.mxu0 %v702
      %v728 = vpop.f32.mrf.mxu0
      %v729 = vadd.f32 0.0, %v728
      %v730 = vpop.f32.mrf.mxu0
      %v731 = vadd.f32 0.0, %v730
      %732 = vdwg.mxu0
      %vm733 = vcmask 130048
      %v734 = vsel %vm733, %v448, 0.0
      %v735 = vsel %vm733, %v449, 0.0
      %v736 = vadd.f32 %v734, %v735
      %v737 = vsel %vm733, %v450, 0.0
      %v738 = vadd.f32 %v736, %v737
      %v739 = vsel %vm733, %v451, 0.0
      %v740 = vadd.f32 %v738, %v739
      %v741 = vrot.slane %v740, 4
      %v742 = vadd.f32 %v740, %v741
      %v743 = vrot.slane %v742, 2
      %v744 = vadd.f32 %v742, %v743
      %v745 = vrot.slane %v744, 1
      %v746 = vadd.f32 %v744, %v745
      %v747 = vrcp.pop 32.0
      %v748 = vmul.f32 32.0, %v747
      %v749 = vsub.f32 1.0, %v748
      %v750 = vmul.f32 %v747, %v749
      %v751 = vadd.f32 %v747, %v750
      %vm752 = vweird.f32 %v747
      %v753 = vsel %vm752, %v747, %v751
      %v754 = vmul.f32 %v746, %v753
      %v755 = vsub.f32 %v448, %v754
      %v756 = vsub.f32 %v449, %v754
      %v757 = vsub.f32 %v450, %v754
      %v758 = vsub.f32 %v451, %v754
      %v759 = vmul.f32 %v755, %v755
      %v760 = vmul.f32 %v756, %v756
      %v761 = vmul.f32 %v757, %v757
      %v762 = vmul.f32 %v758, %v758
      %v763 = vsel %vm733, %v759, 0.0
      %v764 = vsel %vm733, %v760, 0.0
      %v765 = vadd.f32 %v763, %v764
      %v766 = vsel %vm733, %v761, 0.0
      %v767 = vadd.f32 %v765, %v766
      %v768 = vsel %vm733, %v762, 0.0
      %v769 = vadd.f32 %v767, %v768
      %v770 = vrot.slane %v769, 4
      %v771 = vadd.f32 %v769, %v770
      %v772 = vrot.slane %v771, 2
      %v773 = vadd.f32 %v771, %v772
      %v774 = vrot.slane %v773, 1
      %v775 = vadd.f32 %v773, %v774
      %v776 = vmul.f32 %v775, %v753
      %v777 = vadd.f32 %v776, 1e-05
      %v778 = vrsqrt.pop %v777
      %v779 = vmul.f32 %v778, %v777
      %v780 = vmul.f32 %v779, %v778
      %v781 = vmul.f32 0.5, %v780
      %v782 = vsub.f32 1.5, %v781
      %v783 = vmul.f32 %v778, %v782
      %vm784 = vweird.f32 %v777
      %vm785 = vweird.f32 %v778
      %vm786 = vmor %vm784, %vm785
      %v787 = vsel %vm786, %v778, %v783
      %v788 = vmul.f32 %v755, %v787
      %v789 = vmul.f32 %v756, %v787
      %v790 = vmul.f32 %v757, %v787
      %v791 = vmul.f32 %v758, %v787
      %v792 = vld [vmem:[%s3] sm:$0xff]
      %v793 = vld [vmem:[%s3 + $0x8] sm:$0xff]
      %v794 = vld [vmem:[%s3 + $0x10] sm:$0xff]
      %v795 = vld [vmem:[%s3 + $0x18] sm:$0xff]
      %797 = vset.pattern.permute.xlu0 0
      %798 = vperm.xlu0 %797, %v792
      %v799 = vpop.permute.xlu0 %798
      %802 = vset.pattern.permute.xlu0 0
      %803 = vperm.xlu0 %802, %v793
      %v804 = vpop.permute.xlu0 %803
      %807 = vset.pattern.permute.xlu0 0
      %808 = vperm.xlu0 %807, %v794
      %v809 = vpop.permute.xlu0 %808
      %812 = vset.pattern.permute.xlu0 0
      %813 = vperm.xlu0 %812, %v795
      %v814 = vpop.permute.xlu0 %813
      %v816 = vmul.f32 %v788, %v799
      %v817 = vmul.f32 %v789, %v804
      %v818 = vmul.f32 %v790, %v809
      %v819 = vmul.f32 %v791, %v814
      %820 = vset.pattern.permute.xlu0 1
      %821 = vperm.xlu0 %820, %v792
      %v822 = vpop.permute.xlu0 %821
      %824 = vset.pattern.permute.xlu0 1
      %825 = vperm.xlu0 %824, %v793
      %v826 = vpop.permute.xlu0 %825
      %828 = vset.pattern.permute.xlu0 1
      %829 = vperm.xlu0 %828, %v794
      %v830 = vpop.permute.xlu0 %829
      %832 = vset.pattern.permute.xlu0 1
      %833 = vperm.xlu0 %832, %v795
      %v834 = vpop.permute.xlu0 %833
      %v836 = vadd.f32 %v816, %v822
      %v837 = vadd.f32 %v817, %v826
      %v838 = vadd.f32 %v818, %v830
      %v839 = vadd.f32 %v819, %v834
      %v840 = vpack.c.bf16 %v837, %v836
      %v841 = vpack.c.bf16 %v839, %v838
      %v842 = vld [vmem:[%s6] sm:$0xff]
      %v843 = vld [vmem:[%s6 + $0x8] sm:$0xff]
      %v844 = vld [vmem:[%s6 + $0x10] sm:$0xff]
      %v845 = vld [vmem:[%s6 + $0x18] sm:$0xff]
      %846 = vxpose.xlu0.c.b16.start [1/8] %v840, 128
      %847 = vxpose.xlu0.c.b16.cont [2/8] %v841, 128
      %848 = vxpose.xlu0.c.b16.cont [3/8] 0, 128
      %849 = vxpose.xlu0.c.b16.cont [4/8] 0, 128
      %850 = vxpose.xlu0.c.b16.cont [5/8] 0, 128
      %851 = vxpose.xlu0.c.b16.cont [6/8] 0, 128
      %852 = vxpose.xlu0.c.b16.cont [7/8] 0, 128
      %853 = vxpose.xlu0.c.b16.end [8/8] 0, 128
      %v854 = vpop.trf.xlu0
      %v855 = vpop.trf.xlu0
      %v856 = vpop.trf.xlu0
      %v857 = vpop.trf.xlu0
      %v858 = vpop.trf.xlu0
      %v859 = vpop.trf.xlu0
      %v860 = vpop.trf.xlu0
      %v861 = vpop.trf.xlu0
      %v866 = vunpack.c.l.b16 %v842
      %v867 = vunpack.c.h.b16 %v842
      %v868 = vunpack.c.l.b16 %v843
      %v869 = vunpack.c.h.b16 %v843
      %v870 = vunpack.c.l.b16 %v844
      %v871 = vunpack.c.h.b16 %v844
      %v872 = vunpack.c.l.b16 %v845
      %v873 = vunpack.c.h.b16 %v845
      %v874 = vpack.c.b16 %v868, %v866
      %v875 = vpack.c.b16 %v869, %v867
      %v876 = vpack.c.b16 %v872, %v870
      %v877 = vpack.c.b16 %v873, %v871
      %vm882 = vcmask 261120
      %v884 = vsel %vm882, %v854, 0
      %886 = vmatpush.bf16.msra.mxu0 0
      %887 = vmatpush.bf16.msra.mxu0 0
      %888 = vmatpush.bf16.msra.mxu0 0
      %889 = vmatpush.bf16.msra.mxu0 0
      %890 = vmatpush.bf16.msra.mxu0 0
      %891 = vmatpush.bf16.msra.mxu0 0
      %892 = vmatpush.bf16.msra.mxu0 %v876
      %893 = vmatpush.bf16.msra.mxu0 %v874
      %894 = vmatmul.bf16.gmra.mxu0 %v884
      %v895 = vpop.f32.mrf.mxu0
      %v896 = vadd.f32 0.0, %v895
      %v897 = vpop.f32.mrf.mxu0
      %v898 = vadd.f32 0.0, %v897
      %899 = vdwg.mxu0
      %900 = vmatpush.bf16.msra.mxu0 0
      %901 = vmatpush.bf16.msra.mxu0 0
      %902 = vmatpush.bf16.msra.mxu0 0
      %903 = vmatpush.bf16.msra.mxu0 0
      %904 = vmatpush.bf16.msra.mxu0 0
      %905 = vmatpush.bf16.msra.mxu0 0
      %906 = vmatpush.bf16.msra.mxu0 %v877
      %907 = vmatpush.bf16.msra.mxu0 %v875
      %908 = vmatmul.bf16.gmra.mxu0 %v884
      %v909 = vpop.f32.mrf.mxu0
      %v910 = vadd.f32 0.0, %v909
      %v911 = vpop.f32.mrf.mxu0
      %v912 = vadd.f32 0.0, %v911
      %913 = vdwg.mxu0
      %vm914 = vcmask 556032
      %v915 = vsel %vm914, %v910, -inf
      %v916 = vsel %vm914, %v912, -inf
      %v917 = vmax.f32 %v915, %v916
      %v918 = vrot.slane %v917, 4
      %v919 = vmax.f32 %v917, %v918
      %v920 = vrot.slane %v919, 2
      %v921 = vmax.f32 %v919, %v920
      %v922 = vrot.slane %v921, 1
      %v923 = vmax.f32 %v921, %v922
      %v924 = vsub.f32 %v910, %v923
      %v925 = vsub.f32 %v912, %v923
      %v926 = vmul.f32 %v924, 1.442695
      %v927 = vpow.pop %v926
      %v928 = vmul.f32 %v925, 1.442695
      %v929 = vpow.pop %v928
      %v930 = vsel %vm914, %v927, 0.0
      %v931 = vsel %vm914, %v929, 0.0
      %v932 = vadd.f32 %v930, %v931
      %v933 = vrot.slane %v932, 4
      %v934 = vadd.f32 %v932, %v933
      %v935 = vrot.slane %v934, 2
      %v936 = vadd.f32 %v934, %v935
      %v937 = vrot.slane %v936, 1
      %v938 = vadd.f32 %v936, %v937
      %v939 = vrcp.pop %v938
      %v940 = vmul.f32 %v938, %v939
      %v941 = vsub.f32 1.0, %v940
      %v942 = vmul.f32 %v939, %v941
      %v943 = vadd.f32 %v939, %v942
      %vm944 = vweird.f32 %v938
      %vm945 = vweird.f32 %v939
      %vm946 = vmor %vm944, %vm945
      %v947 = vsel %vm946, %v939, %v943
      %v948 = vand.u32 2147483647, %v938
      %vm949 = vcmp.eq.f32.partialorder %v948, 8.507059e+37
      %v950 = vand.u32 %v938, 2147483648
      %v951 = vor.u32 1.1754944e-38, %v950
      %v952 = vsel %vm949, %v951, %v947
      %v953 = vmul.f32 %v927, %v952
      %v954 = vmul.f32 %v929, %v952
      %v955 = vpack.c.bf16 %v954, %v953
      %v956 = vpack.c.bf16 %v898, %v896
      %957 = vxpose.xlu0.c.b16.start [1/8] %v955, 128
      %958 = vxpose.xlu0.c.b16.cont [2/8] 0, 128
      %959 = vxpose.xlu0.c.b16.cont [3/8] 0, 128
      %960 = vxpose.xlu0.c.b16.cont [4/8] 0, 128
      %961 = vxpose.xlu0.c.b16.cont [5/8] 0, 128
      %962 = vxpose.xlu0.c.b16.cont [6/8] 0, 128
      %963 = vxpose.xlu0.c.b16.cont [7/8] 0, 128
      %964 = vxpose.xlu0.c.b16.end [8/8] 0, 128
      %v965 = vpop.trf.xlu0
      %v966 = vpop.trf.xlu0
      %v967 = vpop.trf.xlu0
      %v968 = vpop.trf.xlu0
      %v969 = vpop.trf.xlu0
      %v970 = vpop.trf.xlu0
      %v971 = vpop.trf.xlu0
      %v972 = vpop.trf.xlu0
      %v974 = vsel %vm733, %v965, 0
      %v977 = vsel %vm733, %v966, 0
      %v980 = vsel %vm733, %v967, 0
      %v983 = vsel %vm733, %v968, 0
      %v986 = vsel %vm733, %v969, 0
      %988 = vmatpush.bf16.msra.mxu0 0
      %989 = vmatpush.bf16.msra.mxu0 0
      %990 = vmatpush.bf16.msra.mxu0 0
      %991 = vmatpush.bf16.msra.mxu0 0
      %992 = vmatpush.bf16.msra.mxu0 0
      %993 = vmatpush.bf16.msra.mxu0 0
      %994 = vmatpush.bf16.msra.mxu0 0
      %995 = vmatpush.bf16.msra.mxu0 %v956
      %996 = vmatmul.bf16.gmra.mxu0 %v974
      %v997 = vpop.f32.mrf.mxu0
      %v998 = vadd.f32 0.0, %v997
      %v999 = vpop.f32.mrf.mxu0
      %v1000 = vadd.f32 0.0, %v999
      %1001 = vmatmul.bf16.gmra.mxu0 %v977
      %v1002 = vpop.f32.mrf.mxu0
      %v1003 = vadd.f32 0.0, %v1002
      %v1004 = vpop.f32.mrf.mxu0
      %v1005 = vadd.f32 0.0, %v1004
      %1006 = vmatmul.bf16.gmra.mxu0 %v980
      %v1007 = vpop.f32.mrf.mxu0
      %v1008 = vadd.f32 0.0, %v1007
      %v1009 = vpop.f32.mrf.mxu0
      %v1010 = vadd.f32 0.0, %v1009
      %1011 = vmatmul.bf16.gmra.mxu0 %v983
      %v1012 = vpop.f32.mrf.mxu0
      %v1013 = vadd.f32 0.0, %v1012
      %v1014 = vpop.f32.mrf.mxu0
      %v1015 = vadd.f32 0.0, %v1014
      %1016 = vmatmul.bf16.gmra.mxu0 %v986
      %v1017 = vpop.f32.mrf.mxu0
      %v1018 = vadd.f32 0.0, %v1017
      %v1019 = vpop.f32.mrf.mxu0
      %1020 = vdwg.mxu0
      %v1021 = vld [vmem:[%s7] sm:$0xff]
      %v1022 = vld [vmem:[%s7 + $0x8] sm:$0xff]
      %v1023 = vld [vmem:[%s7 + $0x10] sm:$0xff]
      %v1024 = vld [vmem:[%s7 + $0x18] sm:$0xff]
      %v1025 = vld [vmem:[%s7 + $0x20] sm:$0xff]
      %v1026 = vld [vmem:[%s7 + $0x28] sm:$0xff]
      %v1027 = vld [vmem:[%s7 + $0x30] sm:$0xff]
      %v1028 = vld [vmem:[%s7 + $0x38] sm:$0xff]
      %v1029 = vld [vmem:[%s7 + $0x40] sm:$0xf]
      %v1030 = vmul.f32 %v998, %v1021
      %v1031 = vmul.f32 %v1000, %v1022
      %v1032 = vmul.f32 %v1003, %v1023
      %v1033 = vmul.f32 %v1005, %v1024
      %v1034 = vmul.f32 %v1008, %v1025
      %v1035 = vmul.f32 %v1010, %v1026
      %v1036 = vmul.f32 %v1013, %v1027
      %v1037 = vmul.f32 %v1015, %v1028
      %v1038 = vmul.f32 %v1018, %v1029
      %v1039 = vpack.c.bf16 %v1031, %v1030
      %v1040 = vpack.c.bf16 %v1033, %v1032
      %v1041 = vpack.c.bf16 %v1035, %v1034
      %v1042 = vpack.c.bf16 %v1037, %v1036
      %v1043 = vpack.c.bf16 %v1038, %v1038
      %1053 = vrot.lane.b32.xlu0 %v1021, 64
      %v1054 = vpop.permute.xlu0 %1053
      %1055 = vrot.lane.b32.xlu0 %v1022, 64
      %v1056 = vpop.permute.xlu0 %1055
      %1057 = vrot.lane.b32.xlu0 %v1023, 64
      %v1058 = vpop.permute.xlu0 %1057
      %1059 = vrot.lane.b32.xlu0 %v1024, 64
      %v1060 = vpop.permute.xlu0 %1059
      %1061 = vrot.lane.b32.xlu0 %v1025, 64
      %v1062 = vpop.permute.xlu0 %1061
      %1063 = vrot.lane.b32.xlu0 %v1026, 64
      %v1064 = vpop.permute.xlu0 %1063
      %1065 = vrot.lane.b32.xlu0 %v1027, 64
      %v1066 = vpop.permute.xlu0 %1065
      %1067 = vrot.lane.b32.xlu0 %v1028, 64
      %v1068 = vpop.permute.xlu0 %1067
      %1069 = vrot.lane.b32.xlu0 %v1029, 64
      %v1070 = vpop.permute.xlu0 %1069
      %v1080 = vmul.f32 %v998, %v1054
      %v1081 = vmul.f32 %v1000, %v1056
      %v1082 = vmul.f32 %v1003, %v1058
      %v1083 = vmul.f32 %v1005, %v1060
      %v1084 = vmul.f32 %v1008, %v1062
      %v1085 = vmul.f32 %v1010, %v1064
      %v1086 = vmul.f32 %v1013, %v1066
      %v1087 = vmul.f32 %v1015, %v1068
      %v1088 = vmul.f32 %v1018, %v1070
      %v1089 = vpack.c.bf16 %v1080, %v1080
      %v1090 = vpack.c.bf16 %v1081, %v1081
      %v1091 = vpack.c.bf16 %v1082, %v1082
      %v1092 = vpack.c.bf16 %v1083, %v1083
      %v1093 = vpack.c.bf16 %v1084, %v1084
      %v1094 = vpack.c.bf16 %v1085, %v1085
      %v1095 = vpack.c.bf16 %v1086, %v1086
      %v1096 = vpack.c.bf16 %v1087, %v1087
      %v1097 = vpack.c.bf16 %v1088, %v1088
      %v1098 = vpack.c.bf16 %v716, %v714
      %v1099 = vpack.c.bf16 %v721, %v719
      %v1100 = vpack.c.bf16 %v726, %v724
      %v1101 = vpack.c.bf16 %v731, %v729
      %v1103 = vsel %vm454, %v1098, 0
      %v1106 = vsel %vm454, %v1099, 0
      %v1109 = vsel %vm454, %v1100, 0
      %v1112 = vsel %vm454, %v1101, 0
      %v1115 = vsel %vm454, %v1039, 0
      %v1118 = vsel %vm454, %v1040, 0
      %v1121 = vsel %vm454, %v1041, 0
      %v1124 = vsel %vm454, %v1042, 0
      %v1127 = vsel %vm454, %v1043, 0
      %1129 = vmatpush.bf16.xpose.msra.mxu0 0
      %1130 = vmatpush.bf16.xpose.msra.mxu0 0
      %1131 = vmatpush.bf16.xpose.msra.mxu0 0
      %1132 = vmatpush.bf16.xpose.msra.mxu0 %v1127
      %1133 = vmatpush.bf16.xpose.msra.mxu0 %v1124
      %1134 = vmatpush.bf16.xpose.msra.mxu0 %v1121
      %1135 = vmatpush.bf16.xpose.msra.mxu0 %v1118
      %1136 = vmatpush.bf16.xpose.msra.mxu0 %v1115
      %1137 = vmatmul.bf16.gmra.mxu0 %v1103
      %v1138 = vpop.f32.mrf.mxu0
      %v1139 = vadd.f32 0.0, %v1138
      %v1140 = vpop.f32.mrf.mxu0
      %v1141 = vadd.f32 0.0, %v1140
      %1142 = vmatmul.bf16.gmra.mxu0 %v1106
      %v1143 = vpop.f32.mrf.mxu0
      %v1144 = vadd.f32 0.0, %v1143
      %v1145 = vpop.f32.mrf.mxu0
      %v1146 = vadd.f32 0.0, %v1145
      %1147 = vmatmul.bf16.gmra.mxu0 %v1109
      %v1148 = vpop.f32.mrf.mxu0
      %v1149 = vadd.f32 0.0, %v1148
      %v1150 = vpop.f32.mrf.mxu0
      %v1151 = vadd.f32 0.0, %v1150
      %1152 = vmatmul.bf16.gmra.mxu0 %v1112
      %v1153 = vpop.f32.mrf.mxu0
      %v1154 = vadd.f32 0.0, %v1153
      %v1155 = vpop.f32.mrf.mxu0
      %v1156 = vadd.f32 0.0, %v1155
      %1157 = vdwg.mxu0
      %v1158 = vmul.f32 %v1139, 0.35355338
      %v1159 = vmul.f32 %v1141, 0.35355338
      %v1160 = vmul.f32 %v1144, 0.35355338
      %v1161 = vmul.f32 %v1146, 0.35355338
      %v1162 = vmul.f32 %v1149, 0.35355338
      %v1163 = vmul.f32 %v1151, 0.35355338
      %v1164 = vmul.f32 %v1154, 0.35355338
      %v1165 = vmul.f32 %v1156, 0.35355338
      %v1166 = vsel %vm733, %v1158, -inf
      %1167 = vmax.xlane.f32.xlu0 %v1166
      %v1168 = vpop.xlane.xlu0 %1167
      %v1169 = vsel %vm733, %v1159, -inf
      %1170 = vmax.xlane.f32.xlu0 %v1169
      %v1171 = vpop.xlane.xlu0 %1170
      %v1172 = vsel %vm733, %v1160, -inf
      %1173 = vmax.xlane.f32.xlu0 %v1172
      %v1174 = vpop.xlane.xlu0 %1173
      %v1175 = vsel %vm733, %v1161, -inf
      %1176 = vmax.xlane.f32.xlu0 %v1175
      %v1177 = vpop.xlane.xlu0 %1176
      %v1178 = vsel %vm733, %v1162, -inf
      %1179 = vmax.xlane.f32.xlu0 %v1178
      %v1180 = vpop.xlane.xlu0 %1179
      %v1181 = vsel %vm733, %v1163, -inf
      %1182 = vmax.xlane.f32.xlu0 %v1181
      %v1183 = vpop.xlane.xlu0 %1182
      %v1184 = vsel %vm733, %v1164, -inf
      %1185 = vmax.xlane.f32.xlu0 %v1184
      %v1186 = vpop.xlane.xlu0 %1185
      %v1187 = vsel %vm733, %v1165, -inf
      %1188 = vmax.xlane.f32.xlu0 %v1187
      %v1189 = vpop.xlane.xlu0 %1188
      %v1190 = vsub.f32 %v1158, %v1168
      %v1191 = vsub.f32 %v1159, %v1171
      %v1192 = vsub.f32 %v1160, %v1174
      %v1193 = vsub.f32 %v1161, %v1177
      %v1194 = vsub.f32 %v1162, %v1180
      %v1195 = vsub.f32 %v1163, %v1183
      %v1196 = vsub.f32 %v1164, %v1186
      %v1197 = vsub.f32 %v1165, %v1189
      %v1198 = vmul.f32 %v1190, 1.442695
      %v1199 = vpow.pop %v1198
      %v1200 = vmul.f32 %v1191, 1.442695
      %v1201 = vpow.pop %v1200
      %v1202 = vmul.f32 %v1192, 1.442695
      %v1203 = vpow.pop %v1202
      %v1204 = vmul.f32 %v1193, 1.442695
      %v1205 = vpow.pop %v1204
      %v1206 = vmul.f32 %v1194, 1.442695
      %v1207 = vpow.pop %v1206
      %v1208 = vmul.f32 %v1195, 1.442695
      %v1209 = vpow.pop %v1208
      %v1210 = vmul.f32 %v1196, 1.442695
      %v1211 = vpow.pop %v1210
      %v1212 = vmul.f32 %v1197, 1.442695
      %v1213 = vpow.pop %v1212
      %v1214 = vsel %vm733, %v1199, 0.0
      %1215 = vadd.xlane.f32.xlu0 %v1214
      %v1216 = vpop.xlane.xlu0 %1215
      %v1217 = vsel %vm733, %v1201, 0.0
      %1218 = vadd.xlane.f32.xlu0 %v1217
      %v1219 = vpop.xlane.xlu0 %1218
      %v1220 = vsel %vm733, %v1203, 0.0
      %1221 = vadd.xlane.f32.xlu0 %v1220
      %v1222 = vpop.xlane.xlu0 %1221
      %v1223 = vsel %vm733, %v1205, 0.0
      %1224 = vadd.xlane.f32.xlu0 %v1223
      %v1225 = vpop.xlane.xlu0 %1224
      %v1226 = vsel %vm733, %v1207, 0.0
      %1227 = vadd.xlane.f32.xlu0 %v1226
      %v1228 = vpop.xlane.xlu0 %1227
      %v1229 = vsel %vm733, %v1209, 0.0
      %1230 = vadd.xlane.f32.xlu0 %v1229
      %v1231 = vpop.xlane.xlu0 %1230
      %v1232 = vsel %vm733, %v1211, 0.0
      %1233 = vadd.xlane.f32.xlu0 %v1232
      %v1234 = vpop.xlane.xlu0 %1233
      %v1235 = vsel %vm733, %v1213, 0.0
      %1236 = vadd.xlane.f32.xlu0 %v1235
      %v1237 = vpop.xlane.xlu0 %1236
      %v1238 = vrcp.pop %v1216
      %v1239 = vrcp.pop %v1219
      %v1240 = vrcp.pop %v1222
      %v1241 = vrcp.pop %v1225
      %v1242 = vrcp.pop %v1228
      %v1243 = vrcp.pop %v1231
      %v1244 = vrcp.pop %v1234
      %v1245 = vrcp.pop %v1237
      %v1246 = vmul.f32 %v1199, %v1238
      %v1247 = vmul.f32 %v1201, %v1239
      %v1248 = vmul.f32 %v1203, %v1240
      %v1249 = vmul.f32 %v1205, %v1241
      %v1250 = vmul.f32 %v1207, %v1242
      %v1251 = vmul.f32 %v1209, %v1243
      %v1252 = vmul.f32 %v1211, %v1244
      %v1253 = vmul.f32 %v1213, %v1245
      %v1254 = vpack.c.bf16 %v1247, %v1246
      %v1255 = vpack.c.bf16 %v1249, %v1248
      %v1256 = vpack.c.bf16 %v1251, %v1250
      %v1257 = vpack.c.bf16 %v1253, %v1252
      %vm1258 = vcmask 261248
      %v1259 = vsel %vm1258, %v1158, -inf
      %1260 = vmax.xlane.f32.xlu0 %v1259
      %v1261 = vpop.xlane.xlu0 %1260
      %v1262 = vsel %vm1258, %v1159, -inf
      %1263 = vmax.xlane.f32.xlu0 %v1262
      %v1264 = vpop.xlane.xlu0 %1263
      %v1265 = vsel %vm1258, %v1160, -inf
      %1266 = vmax.xlane.f32.xlu0 %v1265
      %v1267 = vpop.xlane.xlu0 %1266
      %v1268 = vsel %vm1258, %v1161, -inf
      %1269 = vmax.xlane.f32.xlu0 %v1268
      %v1270 = vpop.xlane.xlu0 %1269
      %v1271 = vsel %vm1258, %v1162, -inf
      %1272 = vmax.xlane.f32.xlu0 %v1271
      %v1273 = vpop.xlane.xlu0 %1272
      %v1274 = vsel %vm1258, %v1163, -inf
      %1275 = vmax.xlane.f32.xlu0 %v1274
      %v1276 = vpop.xlane.xlu0 %1275
      %v1277 = vsel %vm1258, %v1164, -inf
      %1278 = vmax.xlane.f32.xlu0 %v1277
      %v1279 = vpop.xlane.xlu0 %1278
      %v1280 = vsel %vm1258, %v1165, -inf
      %1281 = vmax.xlane.f32.xlu0 %v1280
      %v1282 = vpop.xlane.xlu0 %1281
      %v1283 = vsub.f32 %v1158, %v1261
      %v1284 = vsub.f32 %v1159, %v1264
      %v1285 = vsub.f32 %v1160, %v1267
      %v1286 = vsub.f32 %v1161, %v1270
      %v1287 = vsub.f32 %v1162, %v1273
      %v1288 = vsub.f32 %v1163, %v1276
      %v1289 = vsub.f32 %v1164, %v1279
      %v1290 = vsub.f32 %v1165, %v1282
      %v1291 = vmul.f32 %v1283, 1.442695
      %v1292 = vpow.pop %v1291
      %v1293 = vmul.f32 %v1284, 1.442695
      %v1294 = vpow.pop %v1293
      %v1295 = vmul.f32 %v1285, 1.442695
      %v1296 = vpow.pop %v1295
      %v1297 = vmul.f32 %v1286, 1.442695
      %v1298 = vpow.pop %v1297
      %v1299 = vmul.f32 %v1287, 1.442695
      %v1300 = vpow.pop %v1299
      %v1301 = vmul.f32 %v1288, 1.442695
      %v1302 = vpow.pop %v1301
      %v1303 = vmul.f32 %v1289, 1.442695
      %v1304 = vpow.pop %v1303
      %v1305 = vmul.f32 %v1290, 1.442695
      %v1306 = vpow.pop %v1305
      %1315 = vrot.lane.b32.xlu0 %v1292, 112
      %v1316 = vpop.permute.xlu0 %1315
      %1317 = vrot.lane.b32.xlu0 %v1294, 112
      %v1318 = vpop.permute.xlu0 %1317
      %1319 = vrot.lane.b32.xlu0 %v1296, 112
      %v1320 = vpop.permute.xlu0 %1319
      %1321 = vrot.lane.b32.xlu0 %v1298, 112
      %v1322 = vpop.permute.xlu0 %1321
      %1323 = vrot.lane.b32.xlu0 %v1300, 112
      %v1324 = vpop.permute.xlu0 %1323
      %1325 = vrot.lane.b32.xlu0 %v1302, 112
      %v1326 = vpop.permute.xlu0 %1325
      %1327 = vrot.lane.b32.xlu0 %v1304, 112
      %v1328 = vpop.permute.xlu0 %1327
      %1329 = vrot.lane.b32.xlu0 %v1306, 112
      %v1330 = vpop.permute.xlu0 %1329
      %v1339 = vsel %vm733, %v1316, 0.0
      %1340 = vadd.xlane.f32.xlu0 %v1339
      %v1341 = vpop.xlane.xlu0 %1340
      %v1342 = vsel %vm733, %v1318, 0.0
      %1343 = vadd.xlane.f32.xlu0 %v1342
      %v1344 = vpop.xlane.xlu0 %1343
      %v1345 = vsel %vm733, %v1320, 0.0
      %1346 = vadd.xlane.f32.xlu0 %v1345
      %v1347 = vpop.xlane.xlu0 %1346
      %v1348 = vsel %vm733, %v1322, 0.0
      %1349 = vadd.xlane.f32.xlu0 %v1348
      %v1350 = vpop.xlane.xlu0 %1349
      %v1351 = vsel %vm733, %v1324, 0.0
      %1352 = vadd.xlane.f32.xlu0 %v1351
      %v1353 = vpop.xlane.xlu0 %1352
      %v1354 = vsel %vm733, %v1326, 0.0
      %1355 = vadd.xlane.f32.xlu0 %v1354
      %v1356 = vpop.xlane.xlu0 %1355
      %v1357 = vsel %vm733, %v1328, 0.0
      %1358 = vadd.xlane.f32.xlu0 %v1357
      %v1359 = vpop.xlane.xlu0 %1358
      %v1360 = vsel %vm733, %v1330, 0.0
      %1361 = vadd.xlane.f32.xlu0 %v1360
      %v1362 = vpop.xlane.xlu0 %1361
      %v1363 = vrcp.pop %v1341
      %v1364 = vrcp.pop %v1344
      %v1365 = vrcp.pop %v1347
      %v1366 = vrcp.pop %v1350
      %v1367 = vrcp.pop %v1353
      %v1368 = vrcp.pop %v1356
      %v1369 = vrcp.pop %v1359
      %v1370 = vrcp.pop %v1362
      %v1371 = vmul.f32 %v1292, %v1363
      %v1372 = vmul.f32 %v1294, %v1364
      %v1373 = vmul.f32 %v1296, %v1365
      %v1374 = vmul.f32 %v1298, %v1366
      %v1375 = vmul.f32 %v1300, %v1367
      %v1376 = vmul.f32 %v1302, %v1368
      %v1377 = vmul.f32 %v1304, %v1369
      %v1378 = vmul.f32 %v1306, %v1370
      %v1379 = vpack.c.bf16 %v1372, %v1371
      %v1380 = vpack.c.bf16 %v1374, %v1373
      %v1381 = vpack.c.bf16 %v1376, %v1375
      %v1382 = vpack.c.bf16 %v1378, %v1377
      %1387 = vrot.lane.b32.xlu0 %v1379, 112
      %v1388 = vpop.permute.xlu0 %1387
      %1389 = vrot.lane.b32.xlu0 %v1380, 112
      %v1390 = vpop.permute.xlu0 %1389
      %1391 = vrot.lane.b32.xlu0 %v1381, 112
      %v1392 = vpop.permute.xlu0 %1391
      %1393 = vrot.lane.b32.xlu0 %v1382, 112
      %v1394 = vpop.permute.xlu0 %1393
      %v1397 = vunpack.c.l.b16 %v1091
      %v1398 = vunpack.c.l.b16 %v1092
      %v1399 = vpack.c.b16 %v1398, %v1397
      %1400 = vrot.lane.b32.xlu0 %v1399, 64
      %v1401 = vpop.permute.xlu0 %1400
      %v1404 = vsel %vm733, %v1388, 0
      %v1407 = vsel %vm733, %v1390, 0
      %v1410 = vsel %vm733, %v1392, 0
      %v1413 = vsel %vm733, %v1394, 0
      %1415 = vmatpush.bf16.msra.mxu0 0
      %1416 = vmatpush.bf16.msra.mxu0 0
      %1417 = vmatpush.bf16.msra.mxu0 0
      %1418 = vmatpush.bf16.msra.mxu0 0
      %1419 = vmatpush.bf16.msra.mxu0 0
      %1420 = vmatpush.bf16.msra.mxu0 0
      %1421 = vmatpush.bf16.msra.mxu0 0
      %1422 = vmatpush.bf16.msra.mxu0 %v1401
      %1423 = vmatmul.bf16.gmra.mxu0 %v1404
      %v1424 = vpop.f32.mrf.mxu0
      %v1425 = vadd.f32 0.0, %v1424
      %v1426 = vpop.f32.mrf.mxu0
      %v1427 = vadd.f32 0.0, %v1426
      %1428 = vmatmul.bf16.gmra.mxu0 %v1407
      %v1429 = vpop.f32.mrf.mxu0
      %v1430 = vadd.f32 0.0, %v1429
      %v1431 = vpop.f32.mrf.mxu0
      %v1432 = vadd.f32 0.0, %v1431
      %1433 = vmatmul.bf16.gmra.mxu0 %v1410
      %v1434 = vpop.f32.mrf.mxu0
      %v1435 = vadd.f32 0.0, %v1434
      %v1436 = vpop.f32.mrf.mxu0
      %v1437 = vadd.f32 0.0, %v1436
      %1438 = vmatmul.bf16.gmra.mxu0 %v1413
      %v1439 = vpop.f32.mrf.mxu0
      %v1440 = vadd.f32 0.0, %v1439
      %v1441 = vpop.f32.mrf.mxu0
      %v1442 = vadd.f32 0.0, %v1441
      %1443 = vdwg.mxu0
      %v1446 = vunpack.c.l.b16 %v1089
      %v1447 = vunpack.c.l.b16 %v1090
      %v1448 = vpack.c.b16 %v1447, %v1446
      %1449 = vrot.lane.b32.xlu0 %v1448, 64
      %v1450 = vpop.permute.xlu0 %1449
      %v1453 = vsel %vm733, %v1254, 0
      %v1456 = vsel %vm733, %v1255, 0
      %v1459 = vsel %vm733, %v1256, 0
      %v1462 = vsel %vm733, %v1257, 0
      %1464 = vmatpush.bf16.msra.mxu0 0
      %1465 = vmatpush.bf16.msra.mxu0 0
      %1466 = vmatpush.bf16.msra.mxu0 0
      %1467 = vmatpush.bf16.msra.mxu0 0
      %1468 = vmatpush.bf16.msra.mxu0 0
      %1469 = vmatpush.bf16.msra.mxu0 0
      %1470 = vmatpush.bf16.msra.mxu0 0
      %1471 = vmatpush.bf16.msra.mxu0 %v1450
      %1472 = vmatmul.bf16.gmra.mxu0 %v1453
      %v1473 = vpop.f32.mrf.mxu0
      %v1474 = vadd.f32 %v1425, %v1473
      %v1475 = vpop.f32.mrf.mxu0
      %v1476 = vadd.f32 %v1427, %v1475
      %1477 = vmatmul.bf16.gmra.mxu0 %v1456
      %v1478 = vpop.f32.mrf.mxu0
      %v1479 = vadd.f32 %v1430, %v1478
      %v1480 = vpop.f32.mrf.mxu0
      %v1481 = vadd.f32 %v1432, %v1480
      %1482 = vmatmul.bf16.gmra.mxu0 %v1459
      %v1483 = vpop.f32.mrf.mxu0
      %v1484 = vadd.f32 %v1435, %v1483
      %v1485 = vpop.f32.mrf.mxu0
      %v1486 = vadd.f32 %v1437, %v1485
      %1487 = vmatmul.bf16.gmra.mxu0 %v1462
      %v1488 = vpop.f32.mrf.mxu0
      %v1489 = vadd.f32 %v1440, %v1488
      %v1490 = vpop.f32.mrf.mxu0
      %v1491 = vadd.f32 %v1442, %v1490
      %1492 = vdwg.mxu0
      %vm1493 = vcmask 326912
      %v1494 = vsel %vm1493, %v1158, -inf
      %1495 = vmax.xlane.f32.xlu0 %v1494
      %v1496 = vpop.xlane.xlu0 %1495
      %v1497 = vsel %vm1493, %v1159, -inf
      %1498 = vmax.xlane.f32.xlu0 %v1497
      %v1499 = vpop.xlane.xlu0 %1498
      %v1500 = vsel %vm1493, %v1160, -inf
      %1501 = vmax.xlane.f32.xlu0 %v1500
      %v1502 = vpop.xlane.xlu0 %1501
      %v1503 = vsel %vm1493, %v1161, -inf
      %1504 = vmax.xlane.f32.xlu0 %v1503
      %v1505 = vpop.xlane.xlu0 %1504
      %v1506 = vsel %vm1493, %v1162, -inf
      %1507 = vmax.xlane.f32.xlu0 %v1506
      %v1508 = vpop.xlane.xlu0 %1507
      %v1509 = vsel %vm1493, %v1163, -inf
      %1510 = vmax.xlane.f32.xlu0 %v1509
      %v1511 = vpop.xlane.xlu0 %1510
      %v1512 = vsel %vm1493, %v1164, -inf
      %1513 = vmax.xlane.f32.xlu0 %v1512
      %v1514 = vpop.xlane.xlu0 %1513
      %v1515 = vsel %vm1493, %v1165, -inf
      %1516 = vmax.xlane.f32.xlu0 %v1515
      %v1517 = vpop.xlane.xlu0 %1516
      %v1518 = vsub.f32 %v1158, %v1496
      %v1519 = vsub.f32 %v1159, %v1499
      %v1520 = vsub.f32 %v1160, %v1502
      %v1521 = vsub.f32 %v1161, %v1505
      %v1522 = vsub.f32 %v1162, %v1508
      %v1523 = vsub.f32 %v1163, %v1511
      %v1524 = vsub.f32 %v1164, %v1514
      %v1525 = vsub.f32 %v1165, %v1517
      %v1526 = vmul.f32 %v1518, 1.442695
      %v1527 = vpow.pop %v1526
      %v1528 = vmul.f32 %v1519, 1.442695
      %v1529 = vpow.pop %v1528
      %v1530 = vmul.f32 %v1520, 1.442695
      %v1531 = vpow.pop %v1530
      %v1532 = vmul.f32 %v1521, 1.442695
      %v1533 = vpow.pop %v1532
      %v1534 = vmul.f32 %v1522, 1.442695
      %v1535 = vpow.pop %v1534
      %v1536 = vmul.f32 %v1523, 1.442695
      %v1537 = vpow.pop %v1536
      %v1538 = vmul.f32 %v1524, 1.442695
      %v1539 = vpow.pop %v1538
      %v1540 = vmul.f32 %v1525, 1.442695
      %v1541 = vpow.pop %v1540
      %1550 = vrot.lane.b32.xlu0 %v1527, 96
      %v1551 = vpop.permute.xlu0 %1550
      %1552 = vrot.lane.b32.xlu0 %v1529, 96
      %v1553 = vpop.permute.xlu0 %1552
      %1554 = vrot.lane.b32.xlu0 %v1531, 96
      %v1555 = vpop.permute.xlu0 %1554
      %1556 = vrot.lane.b32.xlu0 %v1533, 96
      %v1557 = vpop.permute.xlu0 %1556
      %1558 = vrot.lane.b32.xlu0 %v1535, 96
      %v1559 = vpop.permute.xlu0 %1558
      %1560 = vrot.lane.b32.xlu0 %v1537, 96
      %v1561 = vpop.permute.xlu0 %1560
      %1562 = vrot.lane.b32.xlu0 %v1539, 96
      %v1563 = vpop.permute.xlu0 %1562
      %1564 = vrot.lane.b32.xlu0 %v1541, 96
      %v1565 = vpop.permute.xlu0 %1564
      %vm1574 = vcmask 64512
      %v1575 = vsel %vm1574, %v1551, 0.0
      %1576 = vadd.xlane.f32.xlu0 %v1575
      %v1577 = vpop.xlane.xlu0 %1576
      %v1578 = vsel %vm1574, %v1553, 0.0
      %1579 = vadd.xlane.f32.xlu0 %v1578
      %v1580 = vpop.xlane.xlu0 %1579
      %v1581 = vsel %vm1574, %v1555, 0.0
      %1582 = vadd.xlane.f32.xlu0 %v1581
      %v1583 = vpop.xlane.xlu0 %1582
      %v1584 = vsel %vm1574, %v1557, 0.0
      %1585 = vadd.xlane.f32.xlu0 %v1584
      %v1586 = vpop.xlane.xlu0 %1585
      %v1587 = vsel %vm1574, %v1559, 0.0
      %1588 = vadd.xlane.f32.xlu0 %v1587
      %v1589 = vpop.xlane.xlu0 %1588
      %v1590 = vsel %vm1574, %v1561, 0.0
      %1591 = vadd.xlane.f32.xlu0 %v1590
      %v1592 = vpop.xlane.xlu0 %1591
      %v1593 = vsel %vm1574, %v1563, 0.0
      %1594 = vadd.xlane.f32.xlu0 %v1593
      %v1595 = vpop.xlane.xlu0 %1594
      %v1596 = vsel %vm1574, %v1565, 0.0
      %1597 = vadd.xlane.f32.xlu0 %v1596
      %v1598 = vpop.xlane.xlu0 %1597
      %v1599 = vrcp.pop %v1577
      %v1600 = vrcp.pop %v1580
      %v1601 = vrcp.pop %v1583
      %v1602 = vrcp.pop %v1586
      %v1603 = vrcp.pop %v1589
      %v1604 = vrcp.pop %v1592
      %v1605 = vrcp.pop %v1595
      %v1606 = vrcp.pop %v1598
      %v1607 = vmul.f32 %v1527, %v1599
      %v1608 = vmul.f32 %v1529, %v1600
      %v1609 = vmul.f32 %v1531, %v1601
      %v1610 = vmul.f32 %v1533, %v1602
      %v1611 = vmul.f32 %v1535, %v1603
      %v1612 = vmul.f32 %v1537, %v1604
      %v1613 = vmul.f32 %v1539, %v1605
      %v1614 = vmul.f32 %v1541, %v1606
      %v1615 = vpack.c.bf16 %v1608, %v1607
      %v1616 = vpack.c.bf16 %v1610, %v1609
      %v1617 = vpack.c.bf16 %v1612, %v1611
      %v1618 = vpack.c.bf16 %v1614, %v1613
      %1623 = vrot.lane.b32.xlu0 %v1615, 96
      %v1624 = vpop.permute.xlu0 %1623
      %1625 = vrot.lane.b32.xlu0 %v1616, 96
      %v1626 = vpop.permute.xlu0 %1625
      %1627 = vrot.lane.b32.xlu0 %v1617, 96
      %v1628 = vpop.permute.xlu0 %1627
      %1629 = vrot.lane.b32.xlu0 %v1618, 96
      %v1630 = vpop.permute.xlu0 %1629
      %v1632 = vunpack.c.l.b16 %v1093
      %v1633 = vpack.c.b16 %v1632, %v1632
      %1634 = vrot.lane.b32.xlu0 %v1633, 64
      %v1635 = vpop.permute.xlu0 %1634
      %v1637 = vsel %vm1574, %v1624, 0
      %v1640 = vsel %vm1574, %v1626, 0
      %v1643 = vsel %vm1574, %v1628, 0
      %v1646 = vsel %vm1574, %v1630, 0
      %vm1648 = vcmask 1043456
      %v1650 = vsel %vm1648, %v1635, 0
      %1652 = vmatpush.bf16.msra.mxu0 0
      %1653 = vmatpush.bf16.msra.mxu0 0
      %1654 = vmatpush.bf16.msra.mxu0 0
      %1655 = vmatpush.bf16.msra.mxu0 0
      %1656 = vmatpush.bf16.msra.mxu0 0
      %1657 = vmatpush.bf16.msra.mxu0 0
      %1658 = vmatpush.bf16.msra.mxu0 0
      %1659 = vmatpush.bf16.msra.mxu0 %v1650
      %1660 = vmatmul.bf16.gmra.mxu0 %v1637
      %v1661 = vpop.f32.mrf.mxu0
      %v1662 = vadd.f32 0.0, %v1661
      %v1663 = vpop.f32.mrf.mxu0
      %v1664 = vadd.f32 0.0, %v1663
      %1665 = vmatmul.bf16.gmra.mxu0 %v1640
      %v1666 = vpop.f32.mrf.mxu0
      %v1667 = vadd.f32 0.0, %v1666
      %v1668 = vpop.f32.mrf.mxu0
      %v1669 = vadd.f32 0.0, %v1668
      %1670 = vmatmul.bf16.gmra.mxu0 %v1643
      %v1671 = vpop.f32.mrf.mxu0
      %v1672 = vadd.f32 0.0, %v1671
      %v1673 = vpop.f32.mrf.mxu0
      %v1674 = vadd.f32 0.0, %v1673
      %1675 = vmatmul.bf16.gmra.mxu0 %v1646
      %v1676 = vpop.f32.mrf.mxu0
      %v1677 = vadd.f32 0.0, %v1676
      %v1678 = vpop.f32.mrf.mxu0
      %v1679 = vadd.f32 0.0, %v1678
      %1680 = vdwg.mxu0
      %v1681 = vadd.f32 %v1474, %v1662
      %v1682 = vadd.f32 %v1476, %v1664
      %v1683 = vadd.f32 %v1479, %v1667
      %v1684 = vadd.f32 %v1481, %v1669
      %v1685 = vadd.f32 %v1484, %v1672
      %v1686 = vadd.f32 %v1486, %v1674
      %v1687 = vadd.f32 %v1489, %v1677
      %v1688 = vadd.f32 %v1491, %v1679
      %vm1689 = vcmask 392512
      %v1690 = vsel %vm1689, %v1158, -inf
      %1691 = vmax.xlane.f32.xlu0 %v1690
      %v1692 = vpop.xlane.xlu0 %1691
      %v1693 = vsel %vm1689, %v1159, -inf
      %1694 = vmax.xlane.f32.xlu0 %v1693
      %v1695 = vpop.xlane.xlu0 %1694
      %v1696 = vsel %vm1689, %v1160, -inf
      %1697 = vmax.xlane.f32.xlu0 %v1696
      %v1698 = vpop.xlane.xlu0 %1697
      %v1699 = vsel %vm1689, %v1161, -inf
      %1700 = vmax.xlane.f32.xlu0 %v1699
      %v1701 = vpop.xlane.xlu0 %1700
      %v1702 = vsel %vm1689, %v1162, -inf
      %1703 = vmax.xlane.f32.xlu0 %v1702
      %v1704 = vpop.xlane.xlu0 %1703
      %v1705 = vsel %vm1689, %v1163, -inf
      %1706 = vmax.xlane.f32.xlu0 %v1705
      %v1707 = vpop.xlane.xlu0 %1706
      %v1708 = vsel %vm1689, %v1164, -inf
      %1709 = vmax.xlane.f32.xlu0 %v1708
      %v1710 = vpop.xlane.xlu0 %1709
      %v1711 = vsel %vm1689, %v1165, -inf
      %1712 = vmax.xlane.f32.xlu0 %v1711
      %v1713 = vpop.xlane.xlu0 %1712
      %v1714 = vsub.f32 %v1158, %v1692
      %v1715 = vsub.f32 %v1159, %v1695
      %v1716 = vsub.f32 %v1160, %v1698
      %v1717 = vsub.f32 %v1161, %v1701
      %v1718 = vsub.f32 %v1162, %v1704
      %v1719 = vsub.f32 %v1163, %v1707
      %v1720 = vsub.f32 %v1164, %v1710
      %v1721 = vsub.f32 %v1165, %v1713
      %v1722 = vmul.f32 %v1714, 1.442695
      %v1723 = vpow.pop %v1722
      %v1724 = vmul.f32 %v1715, 1.442695
      %v1725 = vpow.pop %v1724
      %v1726 = vmul.f32 %v1716, 1.442695
      %v1727 = vpow.pop %v1726
      %v1728 = vmul.f32 %v1717, 1.442695
      %v1729 = vpow.pop %v1728
      %v1730 = vmul.f32 %v1718, 1.442695
      %v1731 = vpow.pop %v1730
      %v1732 = vmul.f32 %v1719, 1.442695
      %v1733 = vpow.pop %v1732
      %v1734 = vmul.f32 %v1720, 1.442695
      %v1735 = vpow.pop %v1734
      %v1736 = vmul.f32 %v1721, 1.442695
      %v1737 = vpow.pop %v1736
      %1746 = vrot.lane.b32.xlu0 %v1723, 88
      %v1747 = vpop.permute.xlu0 %1746
      %1748 = vrot.lane.b32.xlu0 %v1725, 88
      %v1749 = vpop.permute.xlu0 %1748
      %1750 = vrot.lane.b32.xlu0 %v1727, 88
      %v1751 = vpop.permute.xlu0 %1750
      %1752 = vrot.lane.b32.xlu0 %v1729, 88
      %v1753 = vpop.permute.xlu0 %1752
      %1754 = vrot.lane.b32.xlu0 %v1731, 88
      %v1755 = vpop.permute.xlu0 %1754
      %1756 = vrot.lane.b32.xlu0 %v1733, 88
      %v1757 = vpop.permute.xlu0 %1756
      %1758 = vrot.lane.b32.xlu0 %v1735, 88
      %v1759 = vpop.permute.xlu0 %1758
      %1760 = vrot.lane.b32.xlu0 %v1737, 88
      %v1761 = vpop.permute.xlu0 %1760
      %v1770 = vsel %vm1574, %v1747, 0.0
      %1771 = vadd.xlane.f32.xlu0 %v1770
      %v1772 = vpop.xlane.xlu0 %1771
      %v1773 = vsel %vm1574, %v1749, 0.0
      %1774 = vadd.xlane.f32.xlu0 %v1773
      %v1775 = vpop.xlane.xlu0 %1774
      %v1776 = vsel %vm1574, %v1751, 0.0
      %1777 = vadd.xlane.f32.xlu0 %v1776
      %v1778 = vpop.xlane.xlu0 %1777
      %v1779 = vsel %vm1574, %v1753, 0.0
      %1780 = vadd.xlane.f32.xlu0 %v1779
      %v1781 = vpop.xlane.xlu0 %1780
      %v1782 = vsel %vm1574, %v1755, 0.0
      %1783 = vadd.xlane.f32.xlu0 %v1782
      %v1784 = vpop.xlane.xlu0 %1783
      %v1785 = vsel %vm1574, %v1757, 0.0
      %1786 = vadd.xlane.f32.xlu0 %v1785
      %v1787 = vpop.xlane.xlu0 %1786
      %v1788 = vsel %vm1574, %v1759, 0.0
      %1789 = vadd.xlane.f32.xlu0 %v1788
      %v1790 = vpop.xlane.xlu0 %1789
      %v1791 = vsel %vm1574, %v1761, 0.0
      %1792 = vadd.xlane.f32.xlu0 %v1791
      %v1793 = vpop.xlane.xlu0 %1792
      %v1794 = vrcp.pop %v1772
      %v1795 = vrcp.pop %v1775
      %v1796 = vrcp.pop %v1778
      %v1797 = vrcp.pop %v1781
      %v1798 = vrcp.pop %v1784
      %v1799 = vrcp.pop %v1787
      %v1800 = vrcp.pop %v1790
      %v1801 = vrcp.pop %v1793
      %v1802 = vmul.f32 %v1723, %v1794
      %v1803 = vmul.f32 %v1725, %v1795
      %v1804 = vmul.f32 %v1727, %v1796
      %v1805 = vmul.f32 %v1729, %v1797
      %v1806 = vmul.f32 %v1731, %v1798
      %v1807 = vmul.f32 %v1733, %v1799
      %v1808 = vmul.f32 %v1735, %v1800
      %v1809 = vmul.f32 %v1737, %v1801
      %v1810 = vpack.c.bf16 %v1803, %v1802
      %v1811 = vpack.c.bf16 %v1805, %v1804
      %v1812 = vpack.c.bf16 %v1807, %v1806
      %v1813 = vpack.c.bf16 %v1809, %v1808
      %1818 = vrot.lane.b32.xlu0 %v1810, 88
      %v1819 = vpop.permute.xlu0 %1818
      %1820 = vrot.lane.b32.xlu0 %v1811, 88
      %v1821 = vpop.permute.xlu0 %1820
      %1822 = vrot.lane.b32.xlu0 %v1812, 88
      %v1823 = vpop.permute.xlu0 %1822
      %1824 = vrot.lane.b32.xlu0 %v1813, 88
      %v1825 = vpop.permute.xlu0 %1824
      %v1827 = vunpack.c.l.b16 %v1094
      %v1828 = vpack.c.b16 %v1827, %v1827
      %1829 = vrot.lane.b32.xlu0 %v1828, 64
      %v1830 = vpop.permute.xlu0 %1829
      %v1832 = vsel %vm1574, %v1819, 0
      %v1835 = vsel %vm1574, %v1821, 0
      %v1838 = vsel %vm1574, %v1823, 0
      %v1841 = vsel %vm1574, %v1825, 0
      %v1844 = vsel %vm1648, %v1830, 0
      %1846 = vmatpush.bf16.msra.mxu0 0
      %1847 = vmatpush.bf16.msra.mxu0 0
      %1848 = vmatpush.bf16.msra.mxu0 0
      %1849 = vmatpush.bf16.msra.mxu0 0
      %1850 = vmatpush.bf16.msra.mxu0 0
      %1851 = vmatpush.bf16.msra.mxu0 0
      %1852 = vmatpush.bf16.msra.mxu0 0
      %1853 = vmatpush.bf16.msra.mxu0 %v1844
      %1854 = vmatmul.bf16.gmra.mxu0 %v1832
      %v1855 = vpop.f32.mrf.mxu0
      %v1856 = vadd.f32 0.0, %v1855
      %v1857 = vpop.f32.mrf.mxu0
      %v1858 = vadd.f32 0.0, %v1857
      %1859 = vmatmul.bf16.gmra.mxu0 %v1835
      %v1860 = vpop.f32.mrf.mxu0
      %v1861 = vadd.f32 0.0, %v1860
      %v1862 = vpop.f32.mrf.mxu0
      %v1863 = vadd.f32 0.0, %v1862
      %1864 = vmatmul.bf16.gmra.mxu0 %v1838
      %v1865 = vpop.f32.mrf.mxu0
      %v1866 = vadd.f32 0.0, %v1865
      %v1867 = vpop.f32.mrf.mxu0
      %v1868 = vadd.f32 0.0, %v1867
      %1869 = vmatmul.bf16.gmra.mxu0 %v1841
      %v1870 = vpop.f32.mrf.mxu0
      %v1871 = vadd.f32 0.0, %v1870
      %v1872 = vpop.f32.mrf.mxu0
      %v1873 = vadd.f32 0.0, %v1872
      %1874 = vdwg.mxu0
      %v1875 = vadd.f32 %v1681, %v1856
      %v1876 = vadd.f32 %v1682, %v1858
      %v1877 = vadd.f32 %v1683, %v1861
      %v1878 = vadd.f32 %v1684, %v1863
      %v1879 = vadd.f32 %v1685, %v1866
      %v1880 = vadd.f32 %v1686, %v1868
      %v1881 = vadd.f32 %v1687, %v1871
      %v1882 = vadd.f32 %v1688, %v1873
      %vm1883 = vcmask 458112
      %v1884 = vsel %vm1883, %v1158, -inf
      %1885 = vmax.xlane.f32.xlu0 %v1884
      %v1886 = vpop.xlane.xlu0 %1885
      %v1887 = vsel %vm1883, %v1159, -inf
      %1888 = vmax.xlane.f32.xlu0 %v1887
      %v1889 = vpop.xlane.xlu0 %1888
      %v1890 = vsel %vm1883, %v1160, -inf
      %1891 = vmax.xlane.f32.xlu0 %v1890
      %v1892 = vpop.xlane.xlu0 %1891
      %v1893 = vsel %vm1883, %v1161, -inf
      %1894 = vmax.xlane.f32.xlu0 %v1893
      %v1895 = vpop.xlane.xlu0 %1894
      %v1896 = vsel %vm1883, %v1162, -inf
      %1897 = vmax.xlane.f32.xlu0 %v1896
      %v1898 = vpop.xlane.xlu0 %1897
      %v1899 = vsel %vm1883, %v1163, -inf
      %1900 = vmax.xlane.f32.xlu0 %v1899
      %v1901 = vpop.xlane.xlu0 %1900
      %v1902 = vsel %vm1883, %v1164, -inf
      %1903 = vmax.xlane.f32.xlu0 %v1902
      %v1904 = vpop.xlane.xlu0 %1903
      %v1905 = vsel %vm1883, %v1165, -inf
      %1906 = vmax.xlane.f32.xlu0 %v1905
      %v1907 = vpop.xlane.xlu0 %1906
      %v1908 = vsub.f32 %v1158, %v1886
      %v1909 = vsub.f32 %v1159, %v1889
      %v1910 = vsub.f32 %v1160, %v1892
      %v1911 = vsub.f32 %v1161, %v1895
      %v1912 = vsub.f32 %v1162, %v1898
      %v1913 = vsub.f32 %v1163, %v1901
      %v1914 = vsub.f32 %v1164, %v1904
      %v1915 = vsub.f32 %v1165, %v1907
      %v1916 = vmul.f32 %v1908, 1.442695
      %v1917 = vpow.pop %v1916
      %v1918 = vmul.f32 %v1909, 1.442695
      %v1919 = vpow.pop %v1918
      %v1920 = vmul.f32 %v1910, 1.442695
      %v1921 = vpow.pop %v1920
      %v1922 = vmul.f32 %v1911, 1.442695
      %v1923 = vpow.pop %v1922
      %v1924 = vmul.f32 %v1912, 1.442695
      %v1925 = vpow.pop %v1924
      %v1926 = vmul.f32 %v1913, 1.442695
      %v1927 = vpow.pop %v1926
      %v1928 = vmul.f32 %v1914, 1.442695
      %v1929 = vpow.pop %v1928
      %v1930 = vmul.f32 %v1915, 1.442695
      %v1931 = vpow.pop %v1930
      %1940 = vrot.lane.b32.xlu0 %v1917, 80
      %v1941 = vpop.permute.xlu0 %1940
      %1942 = vrot.lane.b32.xlu0 %v1919, 80
      %v1943 = vpop.permute.xlu0 %1942
      %1944 = vrot.lane.b32.xlu0 %v1921, 80
      %v1945 = vpop.permute.xlu0 %1944
      %1946 = vrot.lane.b32.xlu0 %v1923, 80
      %v1947 = vpop.permute.xlu0 %1946
      %1948 = vrot.lane.b32.xlu0 %v1925, 80
      %v1949 = vpop.permute.xlu0 %1948
      %1950 = vrot.lane.b32.xlu0 %v1927, 80
      %v1951 = vpop.permute.xlu0 %1950
      %1952 = vrot.lane.b32.xlu0 %v1929, 80
      %v1953 = vpop.permute.xlu0 %1952
      %1954 = vrot.lane.b32.xlu0 %v1931, 80
      %v1955 = vpop.permute.xlu0 %1954
      %v1964 = vsel %vm1574, %v1941, 0.0
      %1965 = vadd.xlane.f32.xlu0 %v1964
      %v1966 = vpop.xlane.xlu0 %1965
      %v1967 = vsel %vm1574, %v1943, 0.0
      %1968 = vadd.xlane.f32.xlu0 %v1967
      %v1969 = vpop.xlane.xlu0 %1968
      %v1970 = vsel %vm1574, %v1945, 0.0
      %1971 = vadd.xlane.f32.xlu0 %v1970
      %v1972 = vpop.xlane.xlu0 %1971
      %v1973 = vsel %vm1574, %v1947, 0.0
      %1974 = vadd.xlane.f32.xlu0 %v1973
      %v1975 = vpop.xlane.xlu0 %1974
      %v1976 = vsel %vm1574, %v1949, 0.0
      %1977 = vadd.xlane.f32.xlu0 %v1976
      %v1978 = vpop.xlane.xlu0 %1977
      %v1979 = vsel %vm1574, %v1951, 0.0
      %1980 = vadd.xlane.f32.xlu0 %v1979
      %v1981 = vpop.xlane.xlu0 %1980
      %v1982 = vsel %vm1574, %v1953, 0.0
      %1983 = vadd.xlane.f32.xlu0 %v1982
      %v1984 = vpop.xlane.xlu0 %1983
      %v1985 = vsel %vm1574, %v1955, 0.0
      %1986 = vadd.xlane.f32.xlu0 %v1985
      %v1987 = vpop.xlane.xlu0 %1986
      %v1988 = vrcp.pop %v1966
      %v1989 = vrcp.pop %v1969
      %v1990 = vrcp.pop %v1972
      %v1991 = vrcp.pop %v1975
      %v1992 = vrcp.pop %v1978
      %v1993 = vrcp.pop %v1981
      %v1994 = vrcp.pop %v1984
      %v1995 = vrcp.pop %v1987
      %v1996 = vmul.f32 %v1917, %v1988
      %v1997 = vmul.f32 %v1919, %v1989
      %v1998 = vmul.f32 %v1921, %v1990
      %v1999 = vmul.f32 %v1923, %v1991
      %v2000 = vmul.f32 %v1925, %v1992
      %v2001 = vmul.f32 %v1927, %v1993
      %v2002 = vmul.f32 %v1929, %v1994
      %v2003 = vmul.f32 %v1931, %v1995
      %v2004 = vpack.c.bf16 %v1997, %v1996
      %v2005 = vpack.c.bf16 %v1999, %v1998
      %v2006 = vpack.c.bf16 %v2001, %v2000
      %v2007 = vpack.c.bf16 %v2003, %v2002
      %2012 = vrot.lane.b32.xlu0 %v2004, 80
      %v2013 = vpop.permute.xlu0 %2012
      %2014 = vrot.lane.b32.xlu0 %v2005, 80
      %v2015 = vpop.permute.xlu0 %2014
      %2016 = vrot.lane.b32.xlu0 %v2006, 80
      %v2017 = vpop.permute.xlu0 %2016
      %2018 = vrot.lane.b32.xlu0 %v2007, 80
      %v2019 = vpop.permute.xlu0 %2018
      %v2021 = vunpack.c.l.b16 %v1095
      %v2022 = vpack.c.b16 %v2021, %v2021
      %2023 = vrot.lane.b32.xlu0 %v2022, 64
      %v2024 = vpop.permute.xlu0 %2023
      %v2026 = vsel %vm1574, %v2013, 0
      %v2029 = vsel %vm1574, %v2015, 0
      %v2032 = vsel %vm1574, %v2017, 0
      %v2035 = vsel %vm1574, %v2019, 0
      %v2038 = vsel %vm1648, %v2024, 0
      %2040 = vmatpush.bf16.msra.mxu0 0
      %2041 = vmatpush.bf16.msra.mxu0 0
      %2042 = vmatpush.bf16.msra.mxu0 0
      %2043 = vmatpush.bf16.msra.mxu0 0
      %2044 = vmatpush.bf16.msra.mxu0 0
      %2045 = vmatpush.bf16.msra.mxu0 0
      %2046 = vmatpush.bf16.msra.mxu0 0
      %2047 = vmatpush.bf16.msra.mxu0 %v2038
      %2048 = vmatmul.bf16.gmra.mxu0 %v2026
      %v2049 = vpop.f32.mrf.mxu0
      %v2050 = vadd.f32 0.0, %v2049
      %v2051 = vpop.f32.mrf.mxu0
      %v2052 = vadd.f32 0.0, %v2051
      %2053 = vmatmul.bf16.gmra.mxu0 %v2029
      %v2054 = vpop.f32.mrf.mxu0
      %v2055 = vadd.f32 0.0, %v2054
      %v2056 = vpop.f32.mrf.mxu0
      %v2057 = vadd.f32 0.0, %v2056
      %2058 = vmatmul.bf16.gmra.mxu0 %v2032
      %v2059 = vpop.f32.mrf.mxu0
      %v2060 = vadd.f32 0.0, %v2059
      %v2061 = vpop.f32.mrf.mxu0
      %v2062 = vadd.f32 0.0, %v2061
      %2063 = vmatmul.bf16.gmra.mxu0 %v2035
      %v2064 = vpop.f32.mrf.mxu0
      %v2065 = vadd.f32 0.0, %v2064
      %v2066 = vpop.f32.mrf.mxu0
      %v2067 = vadd.f32 0.0, %v2066
      %2068 = vdwg.mxu0
      %v2069 = vadd.f32 %v1875, %v2050
      %v2070 = vadd.f32 %v1876, %v2052
      %v2071 = vadd.f32 %v1877, %v2055
      %v2072 = vadd.f32 %v1878, %v2057
      %v2073 = vadd.f32 %v1879, %v2060
      %v2074 = vadd.f32 %v1880, %v2062
      %v2075 = vadd.f32 %v1881, %v2065
      %v2076 = vadd.f32 %v1882, %v2067
      %vm2077 = vcmask 490944
      %v2078 = vsel %vm2077, %v1158, -inf
      %2079 = vmax.xlane.f32.xlu0 %v2078
      %v2080 = vpop.xlane.xlu0 %2079
      %v2081 = vsel %vm2077, %v1159, -inf
      %2082 = vmax.xlane.f32.xlu0 %v2081
      %v2083 = vpop.xlane.xlu0 %2082
      %v2084 = vsel %vm2077, %v1160, -inf
      %2085 = vmax.xlane.f32.xlu0 %v2084
      %v2086 = vpop.xlane.xlu0 %2085
      %v2087 = vsel %vm2077, %v1161, -inf
      %2088 = vmax.xlane.f32.xlu0 %v2087
      %v2089 = vpop.xlane.xlu0 %2088
      %v2090 = vsel %vm2077, %v1162, -inf
      %2091 = vmax.xlane.f32.xlu0 %v2090
      %v2092 = vpop.xlane.xlu0 %2091
      %v2093 = vsel %vm2077, %v1163, -inf
      %2094 = vmax.xlane.f32.xlu0 %v2093
      %v2095 = vpop.xlane.xlu0 %2094
      %v2096 = vsel %vm2077, %v1164, -inf
      %2097 = vmax.xlane.f32.xlu0 %v2096
      %v2098 = vpop.xlane.xlu0 %2097
      %v2099 = vsel %vm2077, %v1165, -inf
      %2100 = vmax.xlane.f32.xlu0 %v2099
      %v2101 = vpop.xlane.xlu0 %2100
      %v2102 = vsub.f32 %v1158, %v2080
      %v2103 = vsub.f32 %v1159, %v2083
      %v2104 = vsub.f32 %v1160, %v2086
      %v2105 = vsub.f32 %v1161, %v2089
      %v2106 = vsub.f32 %v1162, %v2092
      %v2107 = vsub.f32 %v1163, %v2095
      %v2108 = vsub.f32 %v1164, %v2098
      %v2109 = vsub.f32 %v1165, %v2101
      %v2110 = vmul.f32 %v2102, 1.442695
      %v2111 = vpow.pop %v2110
      %v2112 = vmul.f32 %v2103, 1.442695
      %v2113 = vpow.pop %v2112
      %v2114 = vmul.f32 %v2104, 1.442695
      %v2115 = vpow.pop %v2114
      %v2116 = vmul.f32 %v2105, 1.442695
      %v2117 = vpow.pop %v2116
      %v2118 = vmul.f32 %v2106, 1.442695
      %v2119 = vpow.pop %v2118
      %v2120 = vmul.f32 %v2107, 1.442695
      %v2121 = vpow.pop %v2120
      %v2122 = vmul.f32 %v2108, 1.442695
      %v2123 = vpow.pop %v2122
      %v2124 = vmul.f32 %v2109, 1.442695
      %v2125 = vpow.pop %v2124
      %2134 = vrot.lane.b32.xlu0 %v2111, 72
      %v2135 = vpop.permute.xlu0 %2134
      %2136 = vrot.lane.b32.xlu0 %v2113, 72
      %v2137 = vpop.permute.xlu0 %2136
      %2138 = vrot.lane.b32.xlu0 %v2115, 72
      %v2139 = vpop.permute.xlu0 %2138
      %2140 = vrot.lane.b32.xlu0 %v2117, 72
      %v2141 = vpop.permute.xlu0 %2140
      %2142 = vrot.lane.b32.xlu0 %v2119, 72
      %v2143 = vpop.permute.xlu0 %2142
      %2144 = vrot.lane.b32.xlu0 %v2121, 72
      %v2145 = vpop.permute.xlu0 %2144
      %2146 = vrot.lane.b32.xlu0 %v2123, 72
      %v2147 = vpop.permute.xlu0 %2146
      %2148 = vrot.lane.b32.xlu0 %v2125, 72
      %v2149 = vpop.permute.xlu0 %2148
      %vm2158 = vcmask 31744
      %v2159 = vsel %vm2158, %v2135, 0.0
      %2160 = vadd.xlane.f32.xlu0 %v2159
      %v2161 = vpop.xlane.xlu0 %2160
      %v2162 = vsel %vm2158, %v2137, 0.0
      %2163 = vadd.xlane.f32.xlu0 %v2162
      %v2164 = vpop.xlane.xlu0 %2163
      %v2165 = vsel %vm2158, %v2139, 0.0
      %2166 = vadd.xlane.f32.xlu0 %v2165
      %v2167 = vpop.xlane.xlu0 %2166
      %v2168 = vsel %vm2158, %v2141, 0.0
      %2169 = vadd.xlane.f32.xlu0 %v2168
      %v2170 = vpop.xlane.xlu0 %2169
      %v2171 = vsel %vm2158, %v2143, 0.0
      %2172 = vadd.xlane.f32.xlu0 %v2171
      %v2173 = vpop.xlane.xlu0 %2172
      %v2174 = vsel %vm2158, %v2145, 0.0
      %2175 = vadd.xlane.f32.xlu0 %v2174
      %v2176 = vpop.xlane.xlu0 %2175
      %v2177 = vsel %vm2158, %v2147, 0.0
      %2178 = vadd.xlane.f32.xlu0 %v2177
      %v2179 = vpop.xlane.xlu0 %2178
      %v2180 = vsel %vm2158, %v2149, 0.0
      %2181 = vadd.xlane.f32.xlu0 %v2180
      %v2182 = vpop.xlane.xlu0 %2181
      %v2183 = vrcp.pop %v2161
      %v2184 = vrcp.pop %v2164
      %v2185 = vrcp.pop %v2167
      %v2186 = vrcp.pop %v2170
      %v2187 = vrcp.pop %v2173
      %v2188 = vrcp.pop %v2176
      %v2189 = vrcp.pop %v2179
      %v2190 = vrcp.pop %v2182
      %v2191 = vmul.f32 %v2111, %v2183
      %v2192 = vmul.f32 %v2113, %v2184
      %v2193 = vmul.f32 %v2115, %v2185
      %v2194 = vmul.f32 %v2117, %v2186
      %v2195 = vmul.f32 %v2119, %v2187
      %v2196 = vmul.f32 %v2121, %v2188
      %v2197 = vmul.f32 %v2123, %v2189
      %v2198 = vmul.f32 %v2125, %v2190
      %v2199 = vpack.c.bf16 %v2192, %v2191
      %v2200 = vpack.c.bf16 %v2194, %v2193
      %v2201 = vpack.c.bf16 %v2196, %v2195
      %v2202 = vpack.c.bf16 %v2198, %v2197
      %2207 = vrot.lane.b32.xlu0 %v2199, 72
      %v2208 = vpop.permute.xlu0 %2207
      %2209 = vrot.lane.b32.xlu0 %v2200, 72
      %v2210 = vpop.permute.xlu0 %2209
      %2211 = vrot.lane.b32.xlu0 %v2201, 72
      %v2212 = vpop.permute.xlu0 %2211
      %2213 = vrot.lane.b32.xlu0 %v2202, 72
      %v2214 = vpop.permute.xlu0 %2213
      %v2216 = vunpack.c.l.b16 %v1096
      %v2217 = vpack.c.b16 %v2216, %v2216
      %2218 = vrot.lane.b32.xlu0 %v2217, 64
      %v2219 = vpop.permute.xlu0 %2218
      %v2221 = vsel %vm2158, %v2208, 0
      %v2224 = vsel %vm2158, %v2210, 0
      %v2227 = vsel %vm2158, %v2212, 0
      %v2230 = vsel %vm2158, %v2214, 0
      %vm2232 = vcmask 1041408
      %v2234 = vsel %vm2232, %v2219, 0
      %2236 = vmatpush.bf16.msra.mxu0 0
      %2237 = vmatpush.bf16.msra.mxu0 0
      %2238 = vmatpush.bf16.msra.mxu0 0
      %2239 = vmatpush.bf16.msra.mxu0 0
      %2240 = vmatpush.bf16.msra.mxu0 0
      %2241 = vmatpush.bf16.msra.mxu0 0
      %2242 = vmatpush.bf16.msra.mxu0 0
      %2243 = vmatpush.bf16.msra.mxu0 %v2234
      %2244 = vmatmul.bf16.gmra.mxu0 %v2221
      %v2245 = vpop.f32.mrf.mxu0
      %v2246 = vadd.f32 0.0, %v2245
      %v2247 = vpop.f32.mrf.mxu0
      %v2248 = vadd.f32 0.0, %v2247
      %2249 = vmatmul.bf16.gmra.mxu0 %v2224
      %v2250 = vpop.f32.mrf.mxu0
      %v2251 = vadd.f32 0.0, %v2250
      %v2252 = vpop.f32.mrf.mxu0
      %v2253 = vadd.f32 0.0, %v2252
      %2254 = vmatmul.bf16.gmra.mxu0 %v2227
      %v2255 = vpop.f32.mrf.mxu0
      %v2256 = vadd.f32 0.0, %v2255
      %v2257 = vpop.f32.mrf.mxu0
      %v2258 = vadd.f32 0.0, %v2257
      %2259 = vmatmul.bf16.gmra.mxu0 %v2230
      %v2260 = vpop.f32.mrf.mxu0
      %v2261 = vadd.f32 0.0, %v2260
      %v2262 = vpop.f32.mrf.mxu0
      %v2263 = vadd.f32 0.0, %v2262
      %2264 = vdwg.mxu0
      %v2265 = vadd.f32 %v2069, %v2246
      %v2266 = vadd.f32 %v2070, %v2248
      %v2267 = vadd.f32 %v2071, %v2251
      %v2268 = vadd.f32 %v2072, %v2253
      %v2269 = vadd.f32 %v2073, %v2256
      %v2270 = vadd.f32 %v2074, %v2258
      %v2271 = vadd.f32 %v2075, %v2261
      %v2272 = vadd.f32 %v2076, %v2263
      %vm2273 = vcmask 523744
      %v2274 = vsel %vm2273, %v1158, -inf
      %2275 = vmax.xlane.f32.xlu0 %v2274
      %v2276 = vpop.xlane.xlu0 %2275
      %v2277 = vsel %vm2273, %v1159, -inf
      %2278 = vmax.xlane.f32.xlu0 %v2277
      %v2279 = vpop.xlane.xlu0 %2278
      %v2280 = vsel %vm2273, %v1160, -inf
      %2281 = vmax.xlane.f32.xlu0 %v2280
      %v2282 = vpop.xlane.xlu0 %2281
      %v2283 = vsel %vm2273, %v1161, -inf
      %2284 = vmax.xlane.f32.xlu0 %v2283
      %v2285 = vpop.xlane.xlu0 %2284
      %v2286 = vsel %vm2273, %v1162, -inf
      %2287 = vmax.xlane.f32.xlu0 %v2286
      %v2288 = vpop.xlane.xlu0 %2287
      %v2289 = vsel %vm2273, %v1163, -inf
      %2290 = vmax.xlane.f32.xlu0 %v2289
      %v2291 = vpop.xlane.xlu0 %2290
      %v2292 = vsel %vm2273, %v1164, -inf
      %2293 = vmax.xlane.f32.xlu0 %v2292
      %v2294 = vpop.xlane.xlu0 %2293
      %v2295 = vsel %vm2273, %v1165, -inf
      %2296 = vmax.xlane.f32.xlu0 %v2295
      %v2297 = vpop.xlane.xlu0 %2296
      %v2298 = vsub.f32 %v1158, %v2276
      %v2299 = vsub.f32 %v1159, %v2279
      %v2300 = vsub.f32 %v1160, %v2282
      %v2301 = vsub.f32 %v1161, %v2285
      %v2302 = vsub.f32 %v1162, %v2288
      %v2303 = vsub.f32 %v1163, %v2291
      %v2304 = vsub.f32 %v1164, %v2294
      %v2305 = vsub.f32 %v1165, %v2297
      %v2306 = vmul.f32 %v2298, 1.442695
      %v2307 = vpow.pop %v2306
      %v2308 = vmul.f32 %v2299, 1.442695
      %v2309 = vpow.pop %v2308
      %v2310 = vmul.f32 %v2300, 1.442695
      %v2311 = vpow.pop %v2310
      %v2312 = vmul.f32 %v2301, 1.442695
      %v2313 = vpow.pop %v2312
      %v2314 = vmul.f32 %v2302, 1.442695
      %v2315 = vpow.pop %v2314
      %v2316 = vmul.f32 %v2303, 1.442695
      %v2317 = vpow.pop %v2316
      %v2318 = vmul.f32 %v2304, 1.442695
      %v2319 = vpow.pop %v2318
      %v2320 = vmul.f32 %v2305, 1.442695
      %v2321 = vpow.pop %v2320
      %2330 = vrot.lane.b32.xlu0 %v2307, 68
      %v2331 = vpop.permute.xlu0 %2330
      %2332 = vrot.lane.b32.xlu0 %v2309, 68
      %v2333 = vpop.permute.xlu0 %2332
      %2334 = vrot.lane.b32.xlu0 %v2311, 68
      %v2335 = vpop.permute.xlu0 %2334
      %2336 = vrot.lane.b32.xlu0 %v2313, 68
      %v2337 = vpop.permute.xlu0 %2336
      %2338 = vrot.lane.b32.xlu0 %v2315, 68
      %v2339 = vpop.permute.xlu0 %2338
      %2340 = vrot.lane.b32.xlu0 %v2317, 68
      %v2341 = vpop.permute.xlu0 %2340
      %2342 = vrot.lane.b32.xlu0 %v2319, 68
      %v2343 = vpop.permute.xlu0 %2342
      %2344 = vrot.lane.b32.xlu0 %v2321, 68
      %v2345 = vpop.permute.xlu0 %2344
      %v2354 = vsel %vm2158, %v2331, 0.0
      %2355 = vadd.xlane.f32.xlu0 %v2354
      %v2356 = vpop.xlane.xlu0 %2355
      %v2357 = vsel %vm2158, %v2333, 0.0
      %2358 = vadd.xlane.f32.xlu0 %v2357
      %v2359 = vpop.xlane.xlu0 %2358
      %v2360 = vsel %vm2158, %v2335, 0.0
      %2361 = vadd.xlane.f32.xlu0 %v2360
      %v2362 = vpop.xlane.xlu0 %2361
      %v2363 = vsel %vm2158, %v2337, 0.0
      %2364 = vadd.xlane.f32.xlu0 %v2363
      %v2365 = vpop.xlane.xlu0 %2364
      %v2366 = vsel %vm2158, %v2339, 0.0
      %2367 = vadd.xlane.f32.xlu0 %v2366
      %v2368 = vpop.xlane.xlu0 %2367
      %v2369 = vsel %vm2158, %v2341, 0.0
      %2370 = vadd.xlane.f32.xlu0 %v2369
      %v2371 = vpop.xlane.xlu0 %2370
      %v2372 = vsel %vm2158, %v2343, 0.0
      %2373 = vadd.xlane.f32.xlu0 %v2372
      %v2374 = vpop.xlane.xlu0 %2373
      %v2375 = vsel %vm2158, %v2345, 0.0
      %2376 = vadd.xlane.f32.xlu0 %v2375
      %v2377 = vpop.xlane.xlu0 %2376
      %v2378 = vrcp.pop %v2356
      %v2379 = vrcp.pop %v2359
      %v2380 = vrcp.pop %v2362
      %v2381 = vrcp.pop %v2365
      %v2382 = vrcp.pop %v2368
      %v2383 = vrcp.pop %v2371
      %v2384 = vrcp.pop %v2374
      %v2385 = vrcp.pop %v2377
      %v2386 = vmul.f32 %v2307, %v2378
      %v2387 = vmul.f32 %v2309, %v2379
      %v2388 = vmul.f32 %v2311, %v2380
      %v2389 = vmul.f32 %v2313, %v2381
      %v2390 = vmul.f32 %v2315, %v2382
      %v2391 = vmul.f32 %v2317, %v2383
      %v2392 = vmul.f32 %v2319, %v2384
      %v2393 = vmul.f32 %v2321, %v2385
      %v2394 = vpack.c.bf16 %v2387, %v2386
      %v2395 = vpack.c.bf16 %v2389, %v2388
      %v2396 = vpack.c.bf16 %v2391, %v2390
      %v2397 = vpack.c.bf16 %v2393, %v2392
      %2402 = vrot.lane.b32.xlu0 %v2394, 68
      %v2403 = vpop.permute.xlu0 %2402
      %2404 = vrot.lane.b32.xlu0 %v2395, 68
      %v2405 = vpop.permute.xlu0 %2404
      %2406 = vrot.lane.b32.xlu0 %v2396, 68
      %v2407 = vpop.permute.xlu0 %2406
      %2408 = vrot.lane.b32.xlu0 %v2397, 68
      %v2409 = vpop.permute.xlu0 %2408
      %v2410 = vrot.slane %v2217, 2
      %2411 = vrot.lane.b32.xlu0 %v2410, 64
      %v2412 = vpop.permute.xlu0 %2411
      %v2414 = vsel %vm2158, %v2403, 0
      %v2417 = vsel %vm2158, %v2405, 0
      %v2420 = vsel %vm2158, %v2407, 0
      %v2423 = vsel %vm2158, %v2409, 0
      %v2426 = vsel %vm2232, %v2412, 0
      %2428 = vmatpush.bf16.msra.mxu0 0
      %2429 = vmatpush.bf16.msra.mxu0 0
      %2430 = vmatpush.bf16.msra.mxu0 0
      %2431 = vmatpush.bf16.msra.mxu0 0
      %2432 = vmatpush.bf16.msra.mxu0 0
      %2433 = vmatpush.bf16.msra.mxu0 0
      %2434 = vmatpush.bf16.msra.mxu0 0
      %2435 = vmatpush.bf16.msra.mxu0 %v2426
      %2436 = vmatmul.bf16.gmra.mxu0 %v2414
      %v2437 = vpop.f32.mrf.mxu0
      %v2438 = vadd.f32 0.0, %v2437
      %v2439 = vpop.f32.mrf.mxu0
      %v2440 = vadd.f32 0.0, %v2439
      %2441 = vmatmul.bf16.gmra.mxu0 %v2417
      %v2442 = vpop.f32.mrf.mxu0
      %v2443 = vadd.f32 0.0, %v2442
      %v2444 = vpop.f32.mrf.mxu0
      %v2445 = vadd.f32 0.0, %v2444
      %2446 = vmatmul.bf16.gmra.mxu0 %v2420
      %v2447 = vpop.f32.mrf.mxu0
      %v2448 = vadd.f32 0.0, %v2447
      %v2449 = vpop.f32.mrf.mxu0
      %v2450 = vadd.f32 0.0, %v2449
      %2451 = vmatmul.bf16.gmra.mxu0 %v2423
      %v2452 = vpop.f32.mrf.mxu0
      %v2453 = vadd.f32 0.0, %v2452
      %v2454 = vpop.f32.mrf.mxu0
      %v2455 = vadd.f32 0.0, %v2454
      %2456 = vdwg.mxu0
      %v2457 = vadd.f32 %v2265, %v2438
      %v2458 = vadd.f32 %v2266, %v2440
      %v2459 = vadd.f32 %v2267, %v2443
      %v2460 = vadd.f32 %v2268, %v2445
      %v2461 = vadd.f32 %v2269, %v2448
      %v2462 = vadd.f32 %v2270, %v2450
      %v2463 = vadd.f32 %v2271, %v2453
      %v2464 = vadd.f32 %v2272, %v2455
      %vm2465 = vcmask 556544
      %v2466 = vsel %vm2465, %v1158, -inf
      %2467 = vmax.xlane.f32.xlu0 %v2466
      %v2468 = vpop.xlane.xlu0 %2467
      %v2469 = vsel %vm2465, %v1159, -inf
      %2470 = vmax.xlane.f32.xlu0 %v2469
      %v2471 = vpop.xlane.xlu0 %2470
      %v2472 = vsel %vm2465, %v1160, -inf
      %2473 = vmax.xlane.f32.xlu0 %v2472
      %v2474 = vpop.xlane.xlu0 %2473
      %v2475 = vsel %vm2465, %v1161, -inf
      %2476 = vmax.xlane.f32.xlu0 %v2475
      %v2477 = vpop.xlane.xlu0 %2476
      %v2478 = vsel %vm2465, %v1162, -inf
      %2479 = vmax.xlane.f32.xlu0 %v2478
      %v2480 = vpop.xlane.xlu0 %2479
      %v2481 = vsel %vm2465, %v1163, -inf
      %2482 = vmax.xlane.f32.xlu0 %v2481
      %v2483 = vpop.xlane.xlu0 %2482
      %v2484 = vsel %vm2465, %v1164, -inf
      %2485 = vmax.xlane.f32.xlu0 %v2484
      %v2486 = vpop.xlane.xlu0 %2485
      %v2487 = vsel %vm2465, %v1165, -inf
      %2488 = vmax.xlane.f32.xlu0 %v2487
      %v2489 = vpop.xlane.xlu0 %2488
      %v2490 = vsub.f32 %v1158, %v2468
      %v2491 = vsub.f32 %v1159, %v2471
      %v2492 = vsub.f32 %v1160, %v2474
      %v2493 = vsub.f32 %v1161, %v2477
      %v2494 = vsub.f32 %v1162, %v2480
      %v2495 = vsub.f32 %v1163, %v2483
      %v2496 = vsub.f32 %v1164, %v2486
      %v2497 = vsub.f32 %v1165, %v2489
      %v2498 = vmul.f32 %v2490, 1.442695
      %v2499 = vpow.pop %v2498
      %v2500 = vmul.f32 %v2491, 1.442695
      %v2501 = vpow.pop %v2500
      %v2502 = vmul.f32 %v2492, 1.442695
      %v2503 = vpow.pop %v2502
      %v2504 = vmul.f32 %v2493, 1.442695
      %v2505 = vpow.pop %v2504
      %v2506 = vmul.f32 %v2494, 1.442695
      %v2507 = vpow.pop %v2506
      %v2508 = vmul.f32 %v2495, 1.442695
      %v2509 = vpow.pop %v2508
      %v2510 = vmul.f32 %v2496, 1.442695
      %v2511 = vpow.pop %v2510
      %v2512 = vmul.f32 %v2497, 1.442695
      %v2513 = vpow.pop %v2512
      %2522 = vrot.lane.b32.xlu0 %v2499, 64
      %v2523 = vpop.permute.xlu0 %2522
      %2524 = vrot.lane.b32.xlu0 %v2501, 64
      %v2525 = vpop.permute.xlu0 %2524
      %2526 = vrot.lane.b32.xlu0 %v2503, 64
      %v2527 = vpop.permute.xlu0 %2526
      %2528 = vrot.lane.b32.xlu0 %v2505, 64
      %v2529 = vpop.permute.xlu0 %2528
      %2530 = vrot.lane.b32.xlu0 %v2507, 64
      %v2531 = vpop.permute.xlu0 %2530
      %2532 = vrot.lane.b32.xlu0 %v2509, 64
      %v2533 = vpop.permute.xlu0 %2532
      %2534 = vrot.lane.b32.xlu0 %v2511, 64
      %v2535 = vpop.permute.xlu0 %2534
      %2536 = vrot.lane.b32.xlu0 %v2513, 64
      %v2537 = vpop.permute.xlu0 %2536
      %v2546 = vsel %vm2158, %v2523, 0.0
      %2547 = vadd.xlane.f32.xlu0 %v2546
      %v2548 = vpop.xlane.xlu0 %2547
      %v2549 = vsel %vm2158, %v2525, 0.0
      %2550 = vadd.xlane.f32.xlu0 %v2549
      %v2551 = vpop.xlane.xlu0 %2550
      %v2552 = vsel %vm2158, %v2527, 0.0
      %2553 = vadd.xlane.f32.xlu0 %v2552
      %v2554 = vpop.xlane.xlu0 %2553
      %v2555 = vsel %vm2158, %v2529, 0.0
      %2556 = vadd.xlane.f32.xlu0 %v2555
      %v2557 = vpop.xlane.xlu0 %2556
      %v2558 = vsel %vm2158, %v2531, 0.0
      %2559 = vadd.xlane.f32.xlu0 %v2558
      %v2560 = vpop.xlane.xlu0 %2559
      %v2561 = vsel %vm2158, %v2533, 0.0
      %2562 = vadd.xlane.f32.xlu0 %v2561
      %v2563 = vpop.xlane.xlu0 %2562
      %v2564 = vsel %vm2158, %v2535, 0.0
      %2565 = vadd.xlane.f32.xlu0 %v2564
      %v2566 = vpop.xlane.xlu0 %2565
      %v2567 = vsel %vm2158, %v2537, 0.0
      %2568 = vadd.xlane.f32.xlu0 %v2567
      %v2569 = vpop.xlane.xlu0 %2568
      %v2570 = vrcp.pop %v2548
      %v2571 = vrcp.pop %v2551
      %v2572 = vrcp.pop %v2554
      %v2573 = vrcp.pop %v2557
      %v2574 = vrcp.pop %v2560
      %v2575 = vrcp.pop %v2563
      %v2576 = vrcp.pop %v2566
      %v2577 = vrcp.pop %v2569
      %v2578 = vmul.f32 %v2499, %v2570
      %v2579 = vmul.f32 %v2501, %v2571
      %v2580 = vmul.f32 %v2503, %v2572
      %v2581 = vmul.f32 %v2505, %v2573
      %v2582 = vmul.f32 %v2507, %v2574
      %v2583 = vmul.f32 %v2509, %v2575
      %v2584 = vmul.f32 %v2511, %v2576
      %v2585 = vmul.f32 %v2513, %v2577
      %v2586 = vpack.c.bf16 %v2579, %v2578
      %v2587 = vpack.c.bf16 %v2581, %v2580
      %v2588 = vpack.c.bf16 %v2583, %v2582
      %v2589 = vpack.c.bf16 %v2585, %v2584
      %2594 = vrot.lane.b32.xlu0 %v2586, 64
      %v2595 = vpop.permute.xlu0 %2594
      %2596 = vrot.lane.b32.xlu0 %v2587, 64
      %v2597 = vpop.permute.xlu0 %2596
      %2598 = vrot.lane.b32.xlu0 %v2588, 64
      %v2599 = vpop.permute.xlu0 %2598
      %2600 = vrot.lane.b32.xlu0 %v2589, 64
      %v2601 = vpop.permute.xlu0 %2600
      %v2603 = vunpack.c.l.b16 %v1097
      %v2604 = vpack.c.b16 %v2603, %v2603
      %2605 = vrot.lane.b32.xlu0 %v2604, 64
      %v2606 = vpop.permute.xlu0 %2605
      %v2608 = vsel %vm2158, %v2595, 0
      %v2611 = vsel %vm2158, %v2597, 0
      %v2614 = vsel %vm2158, %v2599, 0
      %v2617 = vsel %vm2158, %v2601, 0
      %v2620 = vsel %vm2232, %v2606, 0
      %2622 = vmatpush.bf16.msra.mxu0 0
      %2623 = vmatpush.bf16.msra.mxu0 0
      %2624 = vmatpush.bf16.msra.mxu0 0
      %2625 = vmatpush.bf16.msra.mxu0 0
      %2626 = vmatpush.bf16.msra.mxu0 0
      %2627 = vmatpush.bf16.msra.mxu0 0
      %2628 = vmatpush.bf16.msra.mxu0 0
      %2629 = vmatpush.bf16.msra.mxu0 %v2620
      %2630 = vmatmul.bf16.gmra.mxu0 %v2608
      %v2631 = vpop.f32.mrf.mxu0
      %v2632 = vadd.f32 0.0, %v2631
      %v2633 = vpop.f32.mrf.mxu0
      %v2634 = vadd.f32 0.0, %v2633
      %2635 = vmatmul.bf16.gmra.mxu0 %v2611
      %v2636 = vpop.f32.mrf.mxu0
      %v2637 = vadd.f32 0.0, %v2636
      %v2638 = vpop.f32.mrf.mxu0
      %v2639 = vadd.f32 0.0, %v2638
      %2640 = vmatmul.bf16.gmra.mxu0 %v2614
      %v2641 = vpop.f32.mrf.mxu0
      %v2642 = vadd.f32 0.0, %v2641
      %v2643 = vpop.f32.mrf.mxu0
      %v2644 = vadd.f32 0.0, %v2643
      %2645 = vmatmul.bf16.gmra.mxu0 %v2617
      %v2646 = vpop.f32.mrf.mxu0
      %v2647 = vadd.f32 0.0, %v2646
      %v2648 = vpop.f32.mrf.mxu0
      %v2649 = vadd.f32 0.0, %v2648
      %2650 = vdwg.mxu0
      %v2651 = vadd.f32 %v2457, %v2632
      %v2652 = vadd.f32 %v2458, %v2634
      %v2653 = vadd.f32 %v2459, %v2637
      %v2654 = vadd.f32 %v2460, %v2639
      %v2655 = vadd.f32 %v2461, %v2642
      %v2656 = vadd.f32 %v2462, %v2644
      %v2657 = vadd.f32 %v2463, %v2647
      %v2658 = vadd.f32 %v2464, %v2649
      %v2659 = vadd.f32 %v432, %v2651
      %v2660 = vadd.f32 %v433, %v2652
      %v2661 = vadd.f32 %v434, %v2653
      %v2662 = vadd.f32 %v435, %v2654
      %v2663 = vadd.f32 %v436, %v2655
      %v2664 = vadd.f32 %v437, %v2656
      %v2665 = vadd.f32 %v438, %v2657
      %v2666 = vadd.f32 %v439, %v2658
      %v2667 = vld [vmem:[%s2 + $0x2] sm:$0x1]
      %v2668 = vld [vmem:[%s2 + $0x3] sm:$0x1]
      %v2669 = vsel %vm454, %v2659, 0.0
      %2670 = vadd.xlane.f32.xlu0 %v2669
      %v2671 = vpop.xlane.xlu0 %2670
      %v2672 = vsel %vm454, %v2660, 0.0
      %2673 = vadd.xlane.f32.xlu0 %v2672
      %v2674 = vpop.xlane.xlu0 %2673
      %v2675 = vsel %vm454, %v2661, 0.0
      %2676 = vadd.xlane.f32.xlu0 %v2675
      %v2677 = vpop.xlane.xlu0 %2676
      %v2678 = vsel %vm454, %v2662, 0.0
      %2679 = vadd.xlane.f32.xlu0 %v2678
      %v2680 = vpop.xlane.xlu0 %2679
      %v2681 = vsel %vm454, %v2663, 0.0
      %2682 = vadd.xlane.f32.xlu0 %v2681
      %v2683 = vpop.xlane.xlu0 %2682
      %v2684 = vsel %vm454, %v2664, 0.0
      %2685 = vadd.xlane.f32.xlu0 %v2684
      %v2686 = vpop.xlane.xlu0 %2685
      %v2687 = vsel %vm454, %v2665, 0.0
      %2688 = vadd.xlane.f32.xlu0 %v2687
      %v2689 = vpop.xlane.xlu0 %2688
      %v2690 = vsel %vm454, %v2666, 0.0
      %2691 = vadd.xlane.f32.xlu0 %v2690
      %v2692 = vpop.xlane.xlu0 %2691
      %v2693 = vmul.f32 %v2671, %v485
      %v2694 = vmul.f32 %v2674, %v485
      %v2695 = vmul.f32 %v2677, %v485
      %v2696 = vmul.f32 %v2680, %v485
      %v2697 = vmul.f32 %v2683, %v485
      %v2698 = vmul.f32 %v2686, %v485
      %v2699 = vmul.f32 %v2689, %v485
      %v2700 = vmul.f32 %v2692, %v485
      %v2701 = vsub.f32 %v2659, %v2693
      %v2702 = vsub.f32 %v2660, %v2694
      %v2703 = vsub.f32 %v2661, %v2695
      %v2704 = vsub.f32 %v2662, %v2696
      %v2705 = vsub.f32 %v2663, %v2697
      %v2706 = vsub.f32 %v2664, %v2698
      %v2707 = vsub.f32 %v2665, %v2699
      %v2708 = vsub.f32 %v2666, %v2700
      %v2709 = vmul.f32 %v2701, %v2701
      %v2710 = vmul.f32 %v2702, %v2702
      %v2711 = vmul.f32 %v2703, %v2703
      %v2712 = vmul.f32 %v2704, %v2704
      %v2713 = vmul.f32 %v2705, %v2705
      %v2714 = vmul.f32 %v2706, %v2706
      %v2715 = vmul.f32 %v2707, %v2707
      %v2716 = vmul.f32 %v2708, %v2708
      %v2717 = vsel %vm454, %v2709, 0.0
      %2718 = vadd.xlane.f32.xlu0 %v2717
      %v2719 = vpop.xlane.xlu0 %2718
      %v2720 = vsel %vm454, %v2710, 0.0
      %2721 = vadd.xlane.f32.xlu0 %v2720
      %v2722 = vpop.xlane.xlu0 %2721
      %v2723 = vsel %vm454, %v2711, 0.0
      %2724 = vadd.xlane.f32.xlu0 %v2723
      %v2725 = vpop.xlane.xlu0 %2724
      %v2726 = vsel %vm454, %v2712, 0.0
      %2727 = vadd.xlane.f32.xlu0 %v2726
      %v2728 = vpop.xlane.xlu0 %2727
      %v2729 = vsel %vm454, %v2713, 0.0
      %2730 = vadd.xlane.f32.xlu0 %v2729
      %v2731 = vpop.xlane.xlu0 %2730
      %v2732 = vsel %vm454, %v2714, 0.0
      %2733 = vadd.xlane.f32.xlu0 %v2732
      %v2734 = vpop.xlane.xlu0 %2733
      %v2735 = vsel %vm454, %v2715, 0.0
      %2736 = vadd.xlane.f32.xlu0 %v2735
      %v2737 = vpop.xlane.xlu0 %2736
      %v2738 = vsel %vm454, %v2716, 0.0
      %2739 = vadd.xlane.f32.xlu0 %v2738
      %v2740 = vpop.xlane.xlu0 %2739
      %v2741 = vmul.f32 %v2719, %v485
      %v2742 = vmul.f32 %v2722, %v485
      %v2743 = vmul.f32 %v2725, %v485
      %v2744 = vmul.f32 %v2728, %v485
      %v2745 = vmul.f32 %v2731, %v485
      %v2746 = vmul.f32 %v2734, %v485
      %v2747 = vmul.f32 %v2737, %v485
      %v2748 = vmul.f32 %v2740, %v485
      %v2749 = vadd.f32 %v2741, 1e-05
      %v2750 = vadd.f32 %v2742, 1e-05
      %v2751 = vadd.f32 %v2743, 1e-05
      %v2752 = vadd.f32 %v2744, 1e-05
      %v2753 = vadd.f32 %v2745, 1e-05
      %v2754 = vadd.f32 %v2746, 1e-05
      %v2755 = vadd.f32 %v2747, 1e-05
      %v2756 = vadd.f32 %v2748, 1e-05
      %v2757 = vrsqrt.pop %v2749
      %v2758 = vmul.f32 %v2757, %v2749
      %v2759 = vmul.f32 %v2758, %v2757
      %v2760 = vmul.f32 0.5, %v2759
      %v2761 = vsub.f32 1.5, %v2760
      %v2762 = vmul.f32 %v2757, %v2761
      %vm2763 = vweird.f32 %v2749
      %vm2764 = vweird.f32 %v2757
      %vm2765 = vmor %vm2763, %vm2764
      %v2766 = vsel %vm2765, %v2757, %v2762
      %v2767 = vrsqrt.pop %v2750
      %v2768 = vmul.f32 %v2767, %v2750
      %v2769 = vmul.f32 %v2768, %v2767
      %v2770 = vmul.f32 0.5, %v2769
      %v2771 = vsub.f32 1.5, %v2770
      %v2772 = vmul.f32 %v2767, %v2771
      %vm2773 = vweird.f32 %v2750
      %vm2774 = vweird.f32 %v2767
      %vm2775 = vmor %vm2773, %vm2774
      %v2776 = vsel %vm2775, %v2767, %v2772
      %v2777 = vrsqrt.pop %v2751
      %v2778 = vmul.f32 %v2777, %v2751
      %v2779 = vmul.f32 %v2778, %v2777
      %v2780 = vmul.f32 0.5, %v2779
      %v2781 = vsub.f32 1.5, %v2780
      %v2782 = vmul.f32 %v2777, %v2781
      %vm2783 = vweird.f32 %v2751
      %vm2784 = vweird.f32 %v2777
      %vm2785 = vmor %vm2783, %vm2784
      %v2786 = vsel %vm2785, %v2777, %v2782
      %v2787 = vrsqrt.pop %v2752
      %v2788 = vmul.f32 %v2787, %v2752
      %v2789 = vmul.f32 %v2788, %v2787
      %v2790 = vmul.f32 0.5, %v2789
      %v2791 = vsub.f32 1.5, %v2790
      %v2792 = vmul.f32 %v2787, %v2791
      %vm2793 = vweird.f32 %v2752
      %vm2794 = vweird.f32 %v2787
      %vm2795 = vmor %vm2793, %vm2794
      %v2796 = vsel %vm2795, %v2787, %v2792
      %v2797 = vrsqrt.pop %v2753
      %v2798 = vmul.f32 %v2797, %v2753
      %v2799 = vmul.f32 %v2798, %v2797
      %v2800 = vmul.f32 0.5, %v2799
      %v2801 = vsub.f32 1.5, %v2800
      %v2802 = vmul.f32 %v2797, %v2801
      %vm2803 = vweird.f32 %v2753
      %vm2804 = vweird.f32 %v2797
      %vm2805 = vmor %vm2803, %vm2804
      %v2806 = vsel %vm2805, %v2797, %v2802
      %v2807 = vrsqrt.pop %v2754
      %v2808 = vmul.f32 %v2807, %v2754
      %v2809 = vmul.f32 %v2808, %v2807
      %v2810 = vmul.f32 0.5, %v2809
      %v2811 = vsub.f32 1.5, %v2810
      %v2812 = vmul.f32 %v2807, %v2811
      %vm2813 = vweird.f32 %v2754
      %vm2814 = vweird.f32 %v2807
      %vm2815 = vmor %vm2813, %vm2814
      %v2816 = vsel %vm2815, %v2807, %v2812
      %v2817 = vrsqrt.pop %v2755
      %v2818 = vmul.f32 %v2817, %v2755
      %v2819 = vmul.f32 %v2818, %v2817
      %v2820 = vmul.f32 0.5, %v2819
      %v2821 = vsub.f32 1.5, %v2820
      %v2822 = vmul.f32 %v2817, %v2821
      %vm2823 = vweird.f32 %v2755
      %vm2824 = vweird.f32 %v2817
      %vm2825 = vmor %vm2823, %vm2824
      %v2826 = vsel %vm2825, %v2817, %v2822
      %v2827 = vrsqrt.pop %v2756
      %v2828 = vmul.f32 %v2827, %v2756
      %v2829 = vmul.f32 %v2828, %v2827
      %v2830 = vmul.f32 0.5, %v2829
      %v2831 = vsub.f32 1.5, %v2830
      %v2832 = vmul.f32 %v2827, %v2831
      %vm2833 = vweird.f32 %v2756
      %vm2834 = vweird.f32 %v2827
      %vm2835 = vmor %vm2833, %vm2834
      %v2836 = vsel %vm2835, %v2827, %v2832
      %v2837 = vmul.f32 %v2701, %v2766
      %v2838 = vmul.f32 %v2702, %v2776
      %v2839 = vmul.f32 %v2703, %v2786
      %v2840 = vmul.f32 %v2704, %v2796
      %v2841 = vmul.f32 %v2705, %v2806
      %v2842 = vmul.f32 %v2706, %v2816
      %v2843 = vmul.f32 %v2707, %v2826
      %v2844 = vmul.f32 %v2708, %v2836
      %v2845 = vperm.slane %v2667, 0
      %v2846 = vmul.f32 %v2837, %v2845
      %v2847 = vmul.f32 %v2838, %v2845
      %v2848 = vmul.f32 %v2839, %v2845
      %v2849 = vmul.f32 %v2840, %v2845
      %v2850 = vmul.f32 %v2841, %v2845
      %v2851 = vmul.f32 %v2842, %v2845
      %v2852 = vmul.f32 %v2843, %v2845
      %v2853 = vmul.f32 %v2844, %v2845
      %v2854 = vperm.slane %v2668, 0
      %v2855 = vadd.f32 %v2846, %v2854
      %v2856 = vadd.f32 %v2847, %v2854
      %v2857 = vadd.f32 %v2848, %v2854
      %v2858 = vadd.f32 %v2849, %v2854
      %v2859 = vadd.f32 %v2850, %v2854
      %v2860 = vadd.f32 %v2851, %v2854
      %v2861 = vadd.f32 %v2852, %v2854
      %v2862 = vadd.f32 %v2853, %v2854
      %2863 = vst.msk [vmem:[#allocation2] sm:$0xff] %vm454, 0.0
      %vm2864 = vcmask 521216
      %2865 = vst.msk [vmem:[#allocation2 + $0x8] sm:$0x3f] %vm2864, 0.0
      %2866 = vst.msk [vmem:[#allocation2 + $0x10] sm:$0xff] %vm454, 0.0
      %2867 = vst.msk [vmem:[#allocation2 + $0x18] sm:$0x3f] %vm2864, 0.0
      %2868 = vst.msk [vmem:[#allocation2 + $0x20] sm:$0xff] %vm454, 0.0
      %2869 = vst.msk [vmem:[#allocation2 + $0x28] sm:$0x3f] %vm2864, 0.0
      %2870 = vst.msk [vmem:[#allocation2 + $0x30] sm:$0xff] %vm454, 0.0
      %2871 = vst.msk [vmem:[#allocation2 + $0x38] sm:$0x3f] %vm2864, 0.0
      %2872 = vst.msk [vmem:[#allocation2 + $0x40] sm:$0xff] %vm454, 0.0
      %2873 = vst.msk [vmem:[#allocation2 + $0x48] sm:$0x3f] %vm2864, 0.0
      %2874 = vst.msk [vmem:[#allocation2 + $0x50] sm:$0xff] %vm454, 0.0
      %2875 = vst.msk [vmem:[#allocation2 + $0x58] sm:$0x3f] %vm2864, 0.0
      %2876 = vst.msk [vmem:[#allocation2 + $0x60] sm:$0xff] %vm454, 0.0
      %2877 = vst.msk [vmem:[#allocation2 + $0x68] sm:$0x3f] %vm2864, 0.0
      %2878 = vst.msk [vmem:[#allocation2 + $0x70] sm:$0xff] %vm454, 0.0
      %2879 = vst.msk [vmem:[#allocation2 + $0x78] sm:$0x3f] %vm2864, 0.0
      %2880 = vst.msk [vmem:[#allocation2 + $0x80] sm:$0xff] %vm454, 0.0
      %2881 = vst.msk [vmem:[#allocation2 + $0x88] sm:$0x3f] %vm2864, 0.0
      %2882 = vst.msk [vmem:[#allocation2 + $0x90] sm:$0xff] %vm454, 0.0
      %2883 = vst.msk [vmem:[#allocation2 + $0x98] sm:$0x3f] %vm2864, 0.0
      %2884 = vst.msk [vmem:[#allocation2 + $0xa0] sm:$0xff] %vm454, 0.0
      %2885 = vst.msk [vmem:[#allocation2 + $0xa8] sm:$0x3f] %vm2864, 0.0
      %2886 = vst.msk [vmem:[#allocation2 + $0xb0] sm:$0xff] %vm454, 0.0
      %2887 = vst.msk [vmem:[#allocation2 + $0xb8] sm:$0x3f] %vm2864, 0.0
      %2888 = vst.msk [vmem:[#allocation2 + $0xc0] sm:$0xff] %vm454, 0.0
      %2889 = vst.msk [vmem:[#allocation2 + $0xc8] sm:$0x3f] %vm2864, 0.0
      %2890 = vst.msk [vmem:[#allocation2 + $0xd0] sm:$0xff] %vm454, 0.0
      %2891 = vst.msk [vmem:[#allocation2 + $0xd8] sm:$0x3f] %vm2864, 0.0
      %s2892 = scalar_lea.vmem [#allocation2], 48
      %2893 = vst.msk [vmem:[%s2892 + $0x3] sm:$0xff] %vm454, %v2855
      %2894 = vst.msk [vmem:[%s2892 + $0x13] sm:$0xff] %vm454, %v2856
      %2895 = vst.msk [vmem:[%s2892 + $0x23] sm:$0xff] %vm454, %v2857
      %2896 = vst.msk [vmem:[%s2892 + $0x33] sm:$0xff] %vm454, %v2858
      %2897 = vst.msk [vmem:[%s2892 + $0x43] sm:$0xff] %vm454, %v2859
      %2898 = vst.msk [vmem:[%s2892 + $0x53] sm:$0xff] %vm454, %v2860
      %2899 = vst.msk [vmem:[%s2892 + $0x63] sm:$0xff] %vm454, %v2861
      %2900 = vst.msk [vmem:[%s2892 + $0x73] sm:$0xff] %vm454, %v2862
      %v2901 = vld [vmem:[#allocation2] sm:$0xff]
      %v2902 = vld [vmem:[#allocation2 + $0x10] sm:$0xff]
      %v2903 = vld [vmem:[#allocation2 + $0x20] sm:$0xff]
      %v2904 = vld [vmem:[#allocation2 + $0x30] sm:$0xff]
      %v2905 = vld [vmem:[#allocation2 + $0x40] sm:$0xff]
      %v2906 = vld [vmem:[#allocation2 + $0x50] sm:$0xff]
      %v2907 = vld [vmem:[#allocation2 + $0x60] sm:$0xff]
      %v2908 = vld [vmem:[#allocation2 + $0x70] sm:$0xff]
      %v2909 = vld [vmem:[%s8] sm:$0x1]
      %v2910 = vperm.slane %v2909, 0
      %v2911 = vmul.f32 %v2901, %v2910
      %v2912 = vmul.f32 %v2902, %v2910
      %v2913 = vmul.f32 %v2903, %v2910
      %v2914 = vmul.f32 %v2904, %v2910
      %v2915 = vmul.f32 %v2905, %v2910
      %v2916 = vmul.f32 %v2906, %v2910
      %v2917 = vmul.f32 %v2907, %v2910
      %v2918 = vmul.f32 %v2908, %v2910
      %v2919 = vadd.f32 %v2911, 0.0
      %v2920 = vadd.f32 %v2912, 0.0
      %v2921 = vadd.f32 %v2913, 0.0
      %v2922 = vadd.f32 %v2914, 0.0
      %v2923 = vadd.f32 %v2915, 0.0
      %v2924 = vadd.f32 %v2916, 0.0
      %v2925 = vadd.f32 %v2917, 0.0
      %v2926 = vadd.f32 %v2918, 0.0
      %v2927 = vld [vmem:[#allocation2 + $0x1] sm:$0xff]
      %v2928 = vld [vmem:[#allocation2 + $0x11] sm:$0xff]
      %v2929 = vld [vmem:[#allocation2 + $0x21] sm:$0xff]
      %v2930 = vld [vmem:[#allocation2 + $0x31] sm:$0xff]
      %v2931 = vld [vmem:[#allocation2 + $0x41] sm:$0xff]
      %v2932 = vld [vmem:[#allocation2 + $0x51] sm:$0xff]
      %v2933 = vld [vmem:[#allocation2 + $0x61] sm:$0xff]
      %v2934 = vld [vmem:[#allocation2 + $0x71] sm:$0xff]
      %v2935 = vld [vmem:[%s8 + $0x1] sm:$0x1]
      %v2936 = vperm.slane %v2935, 0
      %v2937 = vmul.f32 %v2927, %v2936
      %v2938 = vmul.f32 %v2928, %v2936
      %v2939 = vmul.f32 %v2929, %v2936
      %v2940 = vmul.f32 %v2930, %v2936
      %v2941 = vmul.f32 %v2931, %v2936
      %v2942 = vmul.f32 %v2932, %v2936
      %v2943 = vmul.f32 %v2933, %v2936
      %v2944 = vmul.f32 %v2934, %v2936
      %v2945 = vadd.f32 %v2919, %v2937
      %v2946 = vadd.f32 %v2920, %v2938
      %v2947 = vadd.f32 %v2921, %v2939
      %v2948 = vadd.f32 %v2922, %v2940
      %v2949 = vadd.f32 %v2923, %v2941
      %v2950 = vadd.f32 %v2924, %v2942
      %v2951 = vadd.f32 %v2925, %v2943
      %v2952 = vadd.f32 %v2926, %v2944
      %v2953 = vld [vmem:[#allocation2 + $0x2] sm:$0xff]
      %v2954 = vld [vmem:[#allocation2 + $0x12] sm:$0xff]
      %v2955 = vld [vmem:[#allocation2 + $0x22] sm:$0xff]
      %v2956 = vld [vmem:[#allocation2 + $0x32] sm:$0xff]
      %v2957 = vld [vmem:[#allocation2 + $0x42] sm:$0xff]
      %v2958 = vld [vmem:[#allocation2 + $0x52] sm:$0xff]
      %v2959 = vld [vmem:[#allocation2 + $0x62] sm:$0xff]
      %v2960 = vld [vmem:[#allocation2 + $0x72] sm:$0xff]
      %v2961 = vld [vmem:[%s8 + $0x2] sm:$0x1]
      %v2962 = vperm.slane %v2961, 0
      %v2963 = vmul.f32 %v2953, %v2962
      %v2964 = vmul.f32 %v2954, %v2962
      %v2965 = vmul.f32 %v2955, %v2962
      %v2966 = vmul.f32 %v2956, %v2962
      %v2967 = vmul.f32 %v2957, %v2962
      %v2968 = vmul.f32 %v2958, %v2962
      %v2969 = vmul.f32 %v2959, %v2962
      %v2970 = vmul.f32 %v2960, %v2962
      %v2971 = vadd.f32 %v2945, %v2963
      %v2972 = vadd.f32 %v2946, %v2964
      %v2973 = vadd.f32 %v2947, %v2965
      %v2974 = vadd.f32 %v2948, %v2966
      %v2975 = vadd.f32 %v2949, %v2967
      %v2976 = vadd.f32 %v2950, %v2968
      %v2977 = vadd.f32 %v2951, %v2969
      %v2978 = vadd.f32 %v2952, %v2970
      %v2979 = vld [vmem:[#allocation2 + $0x3] sm:$0xff]
      %v2980 = vld [vmem:[#allocation2 + $0x13] sm:$0xff]
      %v2981 = vld [vmem:[#allocation2 + $0x23] sm:$0xff]
      %v2982 = vld [vmem:[#allocation2 + $0x33] sm:$0xff]
      %v2983 = vld [vmem:[#allocation2 + $0x43] sm:$0xff]
      %v2984 = vld [vmem:[#allocation2 + $0x53] sm:$0xff]
      %v2985 = vld [vmem:[#allocation2 + $0x63] sm:$0xff]
      %v2986 = vld [vmem:[#allocation2 + $0x73] sm:$0xff]
      %v2987 = vld [vmem:[%s8 + $0x3] sm:$0x1]
      %v2988 = vperm.slane %v2987, 0
      %v2989 = vmul.f32 %v2979, %v2988
      %v2990 = vmul.f32 %v2980, %v2988
      %v2991 = vmul.f32 %v2981, %v2988
      %v2992 = vmul.f32 %v2982, %v2988
      %v2993 = vmul.f32 %v2983, %v2988
      %v2994 = vmul.f32 %v2984, %v2988
      %v2995 = vmul.f32 %v2985, %v2988
      %v2996 = vmul.f32 %v2986, %v2988
      %v2997 = vadd.f32 %v2971, %v2989
      %v2998 = vadd.f32 %v2972, %v2990
      %v2999 = vadd.f32 %v2973, %v2991
      %v3000 = vadd.f32 %v2974, %v2992
      %v3001 = vadd.f32 %v2975, %v2993
      %v3002 = vadd.f32 %v2976, %v2994
      %v3003 = vadd.f32 %v2977, %v2995
      %v3004 = vadd.f32 %v2978, %v2996
      %v3005 = vld [vmem:[#allocation2 + $0x4] sm:$0xff]
      %v3006 = vld [vmem:[#allocation2 + $0x14] sm:$0xff]
      %v3007 = vld [vmem:[#allocation2 + $0x24] sm:$0xff]
      %v3008 = vld [vmem:[#allocation2 + $0x34] sm:$0xff]
      %v3009 = vld [vmem:[#allocation2 + $0x44] sm:$0xff]
      %v3010 = vld [vmem:[#allocation2 + $0x54] sm:$0xff]
      %v3011 = vld [vmem:[#allocation2 + $0x64] sm:$0xff]
      %v3012 = vld [vmem:[#allocation2 + $0x74] sm:$0xff]
      %v3013 = vld [vmem:[%s8 + $0x4] sm:$0x1]
      %v3014 = vperm.slane %v3013, 0
      %v3015 = vmul.f32 %v3005, %v3014
      %v3016 = vmul.f32 %v3006, %v3014
      %v3017 = vmul.f32 %v3007, %v3014
      %v3018 = vmul.f32 %v3008, %v3014
      %v3019 = vmul.f32 %v3009, %v3014
      %v3020 = vmul.f32 %v3010, %v3014
      %v3021 = vmul.f32 %v3011, %v3014
      %v3022 = vmul.f32 %v3012, %v3014
      %v3023 = vadd.f32 %v2997, %v3015
      %v3024 = vadd.f32 %v2998, %v3016
      %v3025 = vadd.f32 %v2999, %v3017
      %v3026 = vadd.f32 %v3000, %v3018
      %v3027 = vadd.f32 %v3001, %v3019
      %v3028 = vadd.f32 %v3002, %v3020
      %v3029 = vadd.f32 %v3003, %v3021
      %v3030 = vadd.f32 %v3004, %v3022
      %v3031 = vld [vmem:[#allocation2 + $0x5] sm:$0xff]
      %v3032 = vld [vmem:[#allocation2 + $0x15] sm:$0xff]
      %v3033 = vld [vmem:[#allocation2 + $0x25] sm:$0xff]
      %v3034 = vld [vmem:[#allocation2 + $0x35] sm:$0xff]
      %v3035 = vld [vmem:[#allocation2 + $0x45] sm:$0xff]
      %v3036 = vld [vmem:[#allocation2 + $0x55] sm:$0xff]
      %v3037 = vld [vmem:[#allocation2 + $0x65] sm:$0xff]
      %v3038 = vld [vmem:[#allocation2 + $0x75] sm:$0xff]
      %v3039 = vld [vmem:[%s8 + $0x5] sm:$0x1]
      %v3040 = vperm.slane %v3039, 0
      %v3041 = vmul.f32 %v3031, %v3040
      %v3042 = vmul.f32 %v3032, %v3040
      %v3043 = vmul.f32 %v3033, %v3040
      %v3044 = vmul.f32 %v3034, %v3040
      %v3045 = vmul.f32 %v3035, %v3040
      %v3046 = vmul.f32 %v3036, %v3040
      %v3047 = vmul.f32 %v3037, %v3040
      %v3048 = vmul.f32 %v3038, %v3040
      %v3049 = vadd.f32 %v3023, %v3041
      %v3050 = vadd.f32 %v3024, %v3042
      %v3051 = vadd.f32 %v3025, %v3043
      %v3052 = vadd.f32 %v3026, %v3044
      %v3053 = vadd.f32 %v3027, %v3045
      %v3054 = vadd.f32 %v3028, %v3046
      %v3055 = vadd.f32 %v3029, %v3047
      %v3056 = vadd.f32 %v3030, %v3048
      %v3057 = vld [vmem:[#allocation2 + $0x6] sm:$0xff]
      %v3058 = vld [vmem:[#allocation2 + $0x16] sm:$0xff]
      %v3059 = vld [vmem:[#allocation2 + $0x26] sm:$0xff]
      %v3060 = vld [vmem:[#allocation2 + $0x36] sm:$0xff]
      %v3061 = vld [vmem:[#allocation2 + $0x46] sm:$0xff]
      %v3062 = vld [vmem:[#allocation2 + $0x56] sm:$0xff]
      %v3063 = vld [vmem:[#allocation2 + $0x66] sm:$0xff]
      %v3064 = vld [vmem:[#allocation2 + $0x76] sm:$0xff]
      %v3065 = vld [vmem:[%s8 + $0x6] sm:$0x1]
      %v3066 = vperm.slane %v3065, 0
      %v3067 = vmul.f32 %v3057, %v3066
      %v3068 = vmul.f32 %v3058, %v3066
      %v3069 = vmul.f32 %v3059, %v3066
      %v3070 = vmul.f32 %v3060, %v3066
      %v3071 = vmul.f32 %v3061, %v3066
      %v3072 = vmul.f32 %v3062, %v3066
      %v3073 = vmul.f32 %v3063, %v3066
      %v3074 = vmul.f32 %v3064, %v3066
      %v3075 = vadd.f32 %v3049, %v3067
      %v3076 = vadd.f32 %v3050, %v3068
      %v3077 = vadd.f32 %v3051, %v3069
      %v3078 = vadd.f32 %v3052, %v3070
      %v3079 = vadd.f32 %v3053, %v3071
      %v3080 = vadd.f32 %v3054, %v3072
      %v3081 = vadd.f32 %v3055, %v3073
      %v3082 = vadd.f32 %v3056, %v3074
      %s3083 = scalar_lea.vmem [#allocation2], 16
      %v3084 = vld [vmem:[%s3083] sm:$0xff]
      %v3085 = vld [vmem:[%s3083 + $0x10] sm:$0xff]
      %v3086 = vld [vmem:[%s3083 + $0x20] sm:$0xff]
      %v3087 = vld [vmem:[%s3083 + $0x30] sm:$0xff]
      %v3088 = vld [vmem:[%s3083 + $0x40] sm:$0xff]
      %v3089 = vld [vmem:[%s3083 + $0x50] sm:$0xff]
      %v3090 = vld [vmem:[%s3083 + $0x60] sm:$0xff]
      %v3091 = vld [vmem:[%s3083 + $0x70] sm:$0xff]
      %v3092 = vld [vmem:[%s8 + $0x7] sm:$0x1]
      %v3093 = vperm.slane %v3092, 0
      %v3094 = vmul.f32 %v3084, %v3093
      %v3095 = vmul.f32 %v3085, %v3093
      %v3096 = vmul.f32 %v3086, %v3093
      %v3097 = vmul.f32 %v3087, %v3093
      %v3098 = vmul.f32 %v3088, %v3093
      %v3099 = vmul.f32 %v3089, %v3093
      %v3100 = vmul.f32 %v3090, %v3093
      %v3101 = vmul.f32 %v3091, %v3093
      %v3102 = vadd.f32 %v3075, %v3094
      %v3103 = vadd.f32 %v3076, %v3095
      %v3104 = vadd.f32 %v3077, %v3096
      %v3105 = vadd.f32 %v3078, %v3097
      %v3106 = vadd.f32 %v3079, %v3098
      %v3107 = vadd.f32 %v3080, %v3099
      %v3108 = vadd.f32 %v3081, %v3100
      %v3109 = vadd.f32 %v3082, %v3101
      %v3110 = vld [vmem:[%s3083 + $0x1] sm:$0xff]
      %v3111 = vld [vmem:[%s3083 + $0x11] sm:$0xff]
      %v3112 = vld [vmem:[%s3083 + $0x21] sm:$0xff]
      %v3113 = vld [vmem:[%s3083 + $0x31] sm:$0xff]
      %v3114 = vld [vmem:[%s3083 + $0x41] sm:$0xff]
      %v3115 = vld [vmem:[%s3083 + $0x51] sm:$0xff]
      %v3116 = vld [vmem:[%s3083 + $0x61] sm:$0xff]
      %v3117 = vld [vmem:[%s3083 + $0x71] sm:$0xff]
      %v3118 = vld [vmem:[%s8 + $0x8] sm:$0x1]
      %v3119 = vperm.slane %v3118, 0
      %v3120 = vmul.f32 %v3110, %v3119
      %v3121 = vmul.f32 %v3111, %v3119
      %v3122 = vmul.f32 %v3112, %v3119
      %v3123 = vmul.f32 %v3113, %v3119
      %v3124 = vmul.f32 %v3114, %v3119
      %v3125 = vmul.f32 %v3115, %v3119
      %v3126 = vmul.f32 %v3116, %v3119
      %v3127 = vmul.f32 %v3117, %v3119
      %v3128 = vadd.f32 %v3102, %v3120
      %v3129 = vadd.f32 %v3103, %v3121
      %v3130 = vadd.f32 %v3104, %v3122
      %v3131 = vadd.f32 %v3105, %v3123
      %v3132 = vadd.f32 %v3106, %v3124
      %v3133 = vadd.f32 %v3107, %v3125
      %v3134 = vadd.f32 %v3108, %v3126
      %v3135 = vadd.f32 %v3109, %v3127
      %v3136 = vld [vmem:[%s3083 + $0x2] sm:$0xff]
      %v3137 = vld [vmem:[%s3083 + $0x12] sm:$0xff]
      %v3138 = vld [vmem:[%s3083 + $0x22] sm:$0xff]
      %v3139 = vld [vmem:[%s3083 + $0x32] sm:$0xff]
      %v3140 = vld [vmem:[%s3083 + $0x42] sm:$0xff]
      %v3141 = vld [vmem:[%s3083 + $0x52] sm:$0xff]
      %v3142 = vld [vmem:[%s3083 + $0x62] sm:$0xff]
      %v3143 = vld [vmem:[%s3083 + $0x72] sm:$0xff]
      %v3144 = vld [vmem:[%s8 + $0x9] sm:$0x1]
      %v3145 = vperm.slane %v3144, 0
      %v3146 = vmul.f32 %v3136, %v3145
      %v3147 = vmul.f32 %v3137, %v3145
      %v3148 = vmul.f32 %v3138, %v3145
      %v3149 = vmul.f32 %v3139, %v3145
      %v3150 = vmul.f32 %v3140, %v3145
      %v3151 = vmul.f32 %v3141, %v3145
      %v3152 = vmul.f32 %v3142, %v3145
      %v3153 = vmul.f32 %v3143, %v3145
      %v3154 = vadd.f32 %v3128, %v3146
      %v3155 = vadd.f32 %v3129, %v3147
      %v3156 = vadd.f32 %v3130, %v3148
      %v3157 = vadd.f32 %v3131, %v3149
      %v3158 = vadd.f32 %v3132, %v3150
      %v3159 = vadd.f32 %v3133, %v3151
      %v3160 = vadd.f32 %v3134, %v3152
      %v3161 = vadd.f32 %v3135, %v3153
      %v3162 = vld [vmem:[%s3083 + $0x3] sm:$0xff]
      %v3163 = vld [vmem:[%s3083 + $0x13] sm:$0xff]
      %v3164 = vld [vmem:[%s3083 + $0x23] sm:$0xff]
      %v3165 = vld [vmem:[%s3083 + $0x33] sm:$0xff]
      %v3166 = vld [vmem:[%s3083 + $0x43] sm:$0xff]
      %v3167 = vld [vmem:[%s3083 + $0x53] sm:$0xff]
      %v3168 = vld [vmem:[%s3083 + $0x63] sm:$0xff]
      %v3169 = vld [vmem:[%s3083 + $0x73] sm:$0xff]
      %v3170 = vld [vmem:[%s8 + $0xa] sm:$0x1]
      %v3171 = vperm.slane %v3170, 0
      %v3172 = vmul.f32 %v3162, %v3171
      %v3173 = vmul.f32 %v3163, %v3171
      %v3174 = vmul.f32 %v3164, %v3171
      %v3175 = vmul.f32 %v3165, %v3171
      %v3176 = vmul.f32 %v3166, %v3171
      %v3177 = vmul.f32 %v3167, %v3171
      %v3178 = vmul.f32 %v3168, %v3171
      %v3179 = vmul.f32 %v3169, %v3171
      %v3180 = vadd.f32 %v3154, %v3172
      %v3181 = vadd.f32 %v3155, %v3173
      %v3182 = vadd.f32 %v3156, %v3174
      %v3183 = vadd.f32 %v3157, %v3175
      %v3184 = vadd.f32 %v3158, %v3176
      %v3185 = vadd.f32 %v3159, %v3177
      %v3186 = vadd.f32 %v3160, %v3178
      %v3187 = vadd.f32 %v3161, %v3179
      %v3188 = vld [vmem:[%s3083 + $0x4] sm:$0xff]
      %v3189 = vld [vmem:[%s3083 + $0x14] sm:$0xff]
      %v3190 = vld [vmem:[%s3083 + $0x24] sm:$0xff]
      %v3191 = vld [vmem:[%s3083 + $0x34] sm:$0xff]
      %v3192 = vld [vmem:[%s3083 + $0x44] sm:$0xff]
      %v3193 = vld [vmem:[%s3083 + $0x54] sm:$0xff]
      %v3194 = vld [vmem:[%s3083 + $0x64] sm:$0xff]
      %v3195 = vld [vmem:[%s3083 + $0x74] sm:$0xff]
      %v3196 = vld [vmem:[%s8 + $0xb] sm:$0x1]
      %v3197 = vperm.slane %v3196, 0
      %v3198 = vmul.f32 %v3188, %v3197
      %v3199 = vmul.f32 %v3189, %v3197
      %v3200 = vmul.f32 %v3190, %v3197
      %v3201 = vmul.f32 %v3191, %v3197
      %v3202 = vmul.f32 %v3192, %v3197
      %v3203 = vmul.f32 %v3193, %v3197
      %v3204 = vmul.f32 %v3194, %v3197
      %v3205 = vmul.f32 %v3195, %v3197
      %v3206 = vadd.f32 %v3180, %v3198
      %v3207 = vadd.f32 %v3181, %v3199
      %v3208 = vadd.f32 %v3182, %v3200
      %v3209 = vadd.f32 %v3183, %v3201
      %v3210 = vadd.f32 %v3184, %v3202
      %v3211 = vadd.f32 %v3185, %v3203
      %v3212 = vadd.f32 %v3186, %v3204
      %v3213 = vadd.f32 %v3187, %v3205
      %v3214 = vld [vmem:[%s3083 + $0x5] sm:$0xff]
      %v3215 = vld [vmem:[%s3083 + $0x15] sm:$0xff]
      %v3216 = vld [vmem:[%s3083 + $0x25] sm:$0xff]
      %v3217 = vld [vmem:[%s3083 + $0x35] sm:$0xff]
      %v3218 = vld [vmem:[%s3083 + $0x45] sm:$0xff]
      %v3219 = vld [vmem:[%s3083 + $0x55] sm:$0xff]
      %v3220 = vld [vmem:[%s3083 + $0x65] sm:$0xff]
      %v3221 = vld [vmem:[%s3083 + $0x75] sm:$0xff]
      %v3222 = vld [vmem:[%s8 + $0xc] sm:$0x1]
      %v3223 = vperm.slane %v3222, 0
      %v3224 = vmul.f32 %v3214, %v3223
      %v3225 = vmul.f32 %v3215, %v3223
      %v3226 = vmul.f32 %v3216, %v3223
      %v3227 = vmul.f32 %v3217, %v3223
      %v3228 = vmul.f32 %v3218, %v3223
      %v3229 = vmul.f32 %v3219, %v3223
      %v3230 = vmul.f32 %v3220, %v3223
      %v3231 = vmul.f32 %v3221, %v3223
      %v3232 = vadd.f32 %v3206, %v3224
      %v3233 = vadd.f32 %v3207, %v3225
      %v3234 = vadd.f32 %v3208, %v3226
      %v3235 = vadd.f32 %v3209, %v3227
      %v3236 = vadd.f32 %v3210, %v3228
      %v3237 = vadd.f32 %v3211, %v3229
      %v3238 = vadd.f32 %v3212, %v3230
      %v3239 = vadd.f32 %v3213, %v3231
      %v3240 = vld [vmem:[%s3083 + $0x6] sm:$0xff]
      %v3241 = vld [vmem:[%s3083 + $0x16] sm:$0xff]
      %v3242 = vld [vmem:[%s3083 + $0x26] sm:$0xff]
      %v3243 = vld [vmem:[%s3083 + $0x36] sm:$0xff]
      %v3244 = vld [vmem:[%s3083 + $0x46] sm:$0xff]
      %v3245 = vld [vmem:[%s3083 + $0x56] sm:$0xff]
      %v3246 = vld [vmem:[%s3083 + $0x66] sm:$0xff]
      %v3247 = vld [vmem:[%s3083 + $0x76] sm:$0xff]
      %v3248 = vld [vmem:[%s8 + $0xd] sm:$0x1]
      %v3249 = vperm.slane %v3248, 0
      %v3250 = vmul.f32 %v3240, %v3249
      %v3251 = vmul.f32 %v3241, %v3249
      %v3252 = vmul.f32 %v3242, %v3249
      %v3253 = vmul.f32 %v3243, %v3249
      %v3254 = vmul.f32 %v3244, %v3249
      %v3255 = vmul.f32 %v3245, %v3249
      %v3256 = vmul.f32 %v3246, %v3249
      %v3257 = vmul.f32 %v3247, %v3249
      %v3258 = vadd.f32 %v3232, %v3250
      %v3259 = vadd.f32 %v3233, %v3251
      %v3260 = vadd.f32 %v3234, %v3252
      %v3261 = vadd.f32 %v3235, %v3253
      %v3262 = vadd.f32 %v3236, %v3254
      %v3263 = vadd.f32 %v3237, %v3255
      %v3264 = vadd.f32 %v3238, %v3256
      %v3265 = vadd.f32 %v3239, %v3257
      %s3266 = scalar_lea.vmem [#allocation2], 32
      %v3267 = vld [vmem:[%s3266] sm:$0xff]
      %v3268 = vld [vmem:[%s3266 + $0x10] sm:$0xff]
      %v3269 = vld [vmem:[%s3266 + $0x20] sm:$0xff]
      %v3270 = vld [vmem:[%s3266 + $0x30] sm:$0xff]
      %v3271 = vld [vmem:[%s3266 + $0x40] sm:$0xff]
      %v3272 = vld [vmem:[%s3266 + $0x50] sm:$0xff]
      %v3273 = vld [vmem:[%s3266 + $0x60] sm:$0xff]
      %v3274 = vld [vmem:[%s3266 + $0x70] sm:$0xff]
      %v3275 = vld [vmem:[%s8 + $0xe] sm:$0x1]
      %v3276 = vperm.slane %v3275, 0
      %v3277 = vmul.f32 %v3267, %v3276
      %v3278 = vmul.f32 %v3268, %v3276
      %v3279 = vmul.f32 %v3269, %v3276
      %v3280 = vmul.f32 %v3270, %v3276
      %v3281 = vmul.f32 %v3271, %v3276
      %v3282 = vmul.f32 %v3272, %v3276
      %v3283 = vmul.f32 %v3273, %v3276
      %v3284 = vmul.f32 %v3274, %v3276
      %v3285 = vadd.f32 %v3258, %v3277
      %v3286 = vadd.f32 %v3259, %v3278
      %v3287 = vadd.f32 %v3260, %v3279
      %v3288 = vadd.f32 %v3261, %v3280
      %v3289 = vadd.f32 %v3262, %v3281
      %v3290 = vadd.f32 %v3263, %v3282
      %v3291 = vadd.f32 %v3264, %v3283
      %v3292 = vadd.f32 %v3265, %v3284
      %v3293 = vld [vmem:[%s3266 + $0x1] sm:$0xff]
      %v3294 = vld [vmem:[%s3266 + $0x11] sm:$0xff]
      %v3295 = vld [vmem:[%s3266 + $0x21] sm:$0xff]
      %v3296 = vld [vmem:[%s3266 + $0x31] sm:$0xff]
      %v3297 = vld [vmem:[%s3266 + $0x41] sm:$0xff]
      %v3298 = vld [vmem:[%s3266 + $0x51] sm:$0xff]
      %v3299 = vld [vmem:[%s3266 + $0x61] sm:$0xff]
      %v3300 = vld [vmem:[%s3266 + $0x71] sm:$0xff]
      %v3301 = vld [vmem:[%s8 + $0xf] sm:$0x1]
      %v3302 = vperm.slane %v3301, 0
      %v3303 = vmul.f32 %v3293, %v3302
      %v3304 = vmul.f32 %v3294, %v3302
      %v3305 = vmul.f32 %v3295, %v3302
      %v3306 = vmul.f32 %v3296, %v3302
      %v3307 = vmul.f32 %v3297, %v3302
      %v3308 = vmul.f32 %v3298, %v3302
      %v3309 = vmul.f32 %v3299, %v3302
      %v3310 = vmul.f32 %v3300, %v3302
      %v3311 = vadd.f32 %v3285, %v3303
      %v3312 = vadd.f32 %v3286, %v3304
      %v3313 = vadd.f32 %v3287, %v3305
      %v3314 = vadd.f32 %v3288, %v3306
      %v3315 = vadd.f32 %v3289, %v3307
      %v3316 = vadd.f32 %v3290, %v3308
      %v3317 = vadd.f32 %v3291, %v3309
      %v3318 = vadd.f32 %v3292, %v3310
      %v3319 = vld [vmem:[%s3266 + $0x2] sm:$0xff]
      %v3320 = vld [vmem:[%s3266 + $0x12] sm:$0xff]
      %v3321 = vld [vmem:[%s3266 + $0x22] sm:$0xff]
      %v3322 = vld [vmem:[%s3266 + $0x32] sm:$0xff]
      %v3323 = vld [vmem:[%s3266 + $0x42] sm:$0xff]
      %v3324 = vld [vmem:[%s3266 + $0x52] sm:$0xff]
      %v3325 = vld [vmem:[%s3266 + $0x62] sm:$0xff]
      %v3326 = vld [vmem:[%s3266 + $0x72] sm:$0xff]
      %v3327 = vld [vmem:[%s8 + $0x10] sm:$0x1]
      %v3328 = vperm.slane %v3327, 0
      %v3329 = vmul.f32 %v3319, %v3328
      %v3330 = vmul.f32 %v3320, %v3328
      %v3331 = vmul.f32 %v3321, %v3328
      %v3332 = vmul.f32 %v3322, %v3328
      %v3333 = vmul.f32 %v3323, %v3328
      %v3334 = vmul.f32 %v3324, %v3328
      %v3335 = vmul.f32 %v3325, %v3328
      %v3336 = vmul.f32 %v3326, %v3328
      %v3337 = vadd.f32 %v3311, %v3329
      %v3338 = vadd.f32 %v3312, %v3330
      %v3339 = vadd.f32 %v3313, %v3331
      %v3340 = vadd.f32 %v3314, %v3332
      %v3341 = vadd.f32 %v3315, %v3333
      %v3342 = vadd.f32 %v3316, %v3334
      %v3343 = vadd.f32 %v3317, %v3335
      %v3344 = vadd.f32 %v3318, %v3336
      %v3345 = vld [vmem:[%s3266 + $0x3] sm:$0xff]
      %v3346 = vld [vmem:[%s3266 + $0x13] sm:$0xff]
      %v3347 = vld [vmem:[%s3266 + $0x23] sm:$0xff]
      %v3348 = vld [vmem:[%s3266 + $0x33] sm:$0xff]
      %v3349 = vld [vmem:[%s3266 + $0x43] sm:$0xff]
      %v3350 = vld [vmem:[%s3266 + $0x53] sm:$0xff]
      %v3351 = vld [vmem:[%s3266 + $0x63] sm:$0xff]
      %v3352 = vld [vmem:[%s3266 + $0x73] sm:$0xff]
      %v3353 = vld [vmem:[%s8 + $0x11] sm:$0x1]
      %v3354 = vperm.slane %v3353, 0
      %v3355 = vmul.f32 %v3345, %v3354
      %v3356 = vmul.f32 %v3346, %v3354
      %v3357 = vmul.f32 %v3347, %v3354
      %v3358 = vmul.f32 %v3348, %v3354
      %v3359 = vmul.f32 %v3349, %v3354
      %v3360 = vmul.f32 %v3350, %v3354
      %v3361 = vmul.f32 %v3351, %v3354
      %v3362 = vmul.f32 %v3352, %v3354
      %v3363 = vadd.f32 %v3337, %v3355
      %v3364 = vadd.f32 %v3338, %v3356
      %v3365 = vadd.f32 %v3339, %v3357
      %v3366 = vadd.f32 %v3340, %v3358
      %v3367 = vadd.f32 %v3341, %v3359
      %v3368 = vadd.f32 %v3342, %v3360
      %v3369 = vadd.f32 %v3343, %v3361
      %v3370 = vadd.f32 %v3344, %v3362
      %v3371 = vld [vmem:[%s3266 + $0x4] sm:$0xff]
      %v3372 = vld [vmem:[%s3266 + $0x14] sm:$0xff]
      %v3373 = vld [vmem:[%s3266 + $0x24] sm:$0xff]
      %v3374 = vld [vmem:[%s3266 + $0x34] sm:$0xff]
      %v3375 = vld [vmem:[%s3266 + $0x44] sm:$0xff]
      %v3376 = vld [vmem:[%s3266 + $0x54] sm:$0xff]
      %v3377 = vld [vmem:[%s3266 + $0x64] sm:$0xff]
      %v3378 = vld [vmem:[%s3266 + $0x74] sm:$0xff]
      %v3379 = vld [vmem:[%s8 + $0x12] sm:$0x1]
      %v3380 = vperm.slane %v3379, 0
      %v3381 = vmul.f32 %v3371, %v3380
      %v3382 = vmul.f32 %v3372, %v3380
      %v3383 = vmul.f32 %v3373, %v3380
      %v3384 = vmul.f32 %v3374, %v3380
      %v3385 = vmul.f32 %v3375, %v3380
      %v3386 = vmul.f32 %v3376, %v3380
      %v3387 = vmul.f32 %v3377, %v3380
      %v3388 = vmul.f32 %v3378, %v3380
      %v3389 = vadd.f32 %v3363, %v3381
      %v3390 = vadd.f32 %v3364, %v3382
      %v3391 = vadd.f32 %v3365, %v3383
      %v3392 = vadd.f32 %v3366, %v3384
      %v3393 = vadd.f32 %v3367, %v3385
      %v3394 = vadd.f32 %v3368, %v3386
      %v3395 = vadd.f32 %v3369, %v3387
      %v3396 = vadd.f32 %v3370, %v3388
      %v3397 = vld [vmem:[%s3266 + $0x5] sm:$0xff]
      %v3398 = vld [vmem:[%s3266 + $0x15] sm:$0xff]
      %v3399 = vld [vmem:[%s3266 + $0x25] sm:$0xff]
      %v3400 = vld [vmem:[%s3266 + $0x35] sm:$0xff]
      %v3401 = vld [vmem:[%s3266 + $0x45] sm:$0xff]
      %v3402 = vld [vmem:[%s3266 + $0x55] sm:$0xff]
      %v3403 = vld [vmem:[%s3266 + $0x65] sm:$0xff]
      %v3404 = vld [vmem:[%s3266 + $0x75] sm:$0xff]
      %v3405 = vld [vmem:[%s8 + $0x13] sm:$0x1]
      %v3406 = vperm.slane %v3405, 0
      %v3407 = vmul.f32 %v3397, %v3406
      %v3408 = vmul.f32 %v3398, %v3406
      %v3409 = vmul.f32 %v3399, %v3406
      %v3410 = vmul.f32 %v3400, %v3406
      %v3411 = vmul.f32 %v3401, %v3406
      %v3412 = vmul.f32 %v3402, %v3406
      %v3413 = vmul.f32 %v3403, %v3406
      %v3414 = vmul.f32 %v3404, %v3406
      %v3415 = vadd.f32 %v3389, %v3407
      %v3416 = vadd.f32 %v3390, %v3408
      %v3417 = vadd.f32 %v3391, %v3409
      %v3418 = vadd.f32 %v3392, %v3410
      %v3419 = vadd.f32 %v3393, %v3411
      %v3420 = vadd.f32 %v3394, %v3412
      %v3421 = vadd.f32 %v3395, %v3413
      %v3422 = vadd.f32 %v3396, %v3414
      %v3423 = vld [vmem:[%s3266 + $0x6] sm:$0xff]
      %v3424 = vld [vmem:[%s3266 + $0x16] sm:$0xff]
      %v3425 = vld [vmem:[%s3266 + $0x26] sm:$0xff]
      %v3426 = vld [vmem:[%s3266 + $0x36] sm:$0xff]
      %v3427 = vld [vmem:[%s3266 + $0x46] sm:$0xff]
      %v3428 = vld [vmem:[%s3266 + $0x56] sm:$0xff]
      %v3429 = vld [vmem:[%s3266 + $0x66] sm:$0xff]
      %v3430 = vld [vmem:[%s3266 + $0x76] sm:$0xff]
      %v3431 = vld [vmem:[%s8 + $0x14] sm:$0x1]
      %v3432 = vperm.slane %v3431, 0
      %v3433 = vmul.f32 %v3423, %v3432
      %v3434 = vmul.f32 %v3424, %v3432
      %v3435 = vmul.f32 %v3425, %v3432
      %v3436 = vmul.f32 %v3426, %v3432
      %v3437 = vmul.f32 %v3427, %v3432
      %v3438 = vmul.f32 %v3428, %v3432
      %v3439 = vmul.f32 %v3429, %v3432
      %v3440 = vmul.f32 %v3430, %v3432
      %v3441 = vadd.f32 %v3415, %v3433
      %v3442 = vadd.f32 %v3416, %v3434
      %v3443 = vadd.f32 %v3417, %v3435
      %v3444 = vadd.f32 %v3418, %v3436
      %v3445 = vadd.f32 %v3419, %v3437
      %v3446 = vadd.f32 %v3420, %v3438
      %v3447 = vadd.f32 %v3421, %v3439
      %v3448 = vadd.f32 %v3422, %v3440
      %v3449 = vld [vmem:[%s2892] sm:$0xff]
      %v3450 = vld [vmem:[%s2892 + $0x10] sm:$0xff]
      %v3451 = vld [vmem:[%s2892 + $0x20] sm:$0xff]
      %v3452 = vld [vmem:[%s2892 + $0x30] sm:$0xff]
      %v3453 = vld [vmem:[%s2892 + $0x40] sm:$0xff]
      %v3454 = vld [vmem:[%s2892 + $0x50] sm:$0xff]
      %v3455 = vld [vmem:[%s2892 + $0x60] sm:$0xff]
      %v3456 = vld [vmem:[%s2892 + $0x70] sm:$0xff]
      %v3457 = vld [vmem:[%s8 + $0x15] sm:$0x1]
      %v3458 = vperm.slane %v3457, 0
      %v3459 = vmul.f32 %v3449, %v3458
      %v3460 = vmul.f32 %v3450, %v3458
      %v3461 = vmul.f32 %v3451, %v3458
      %v3462 = vmul.f32 %v3452, %v3458
      %v3463 = vmul.f32 %v3453, %v3458
      %v3464 = vmul.f32 %v3454, %v3458
      %v3465 = vmul.f32 %v3455, %v3458
      %v3466 = vmul.f32 %v3456, %v3458
      %v3467 = vadd.f32 %v3441, %v3459
      %v3468 = vadd.f32 %v3442, %v3460
      %v3469 = vadd.f32 %v3443, %v3461
      %v3470 = vadd.f32 %v3444, %v3462
      %v3471 = vadd.f32 %v3445, %v3463
      %v3472 = vadd.f32 %v3446, %v3464
      %v3473 = vadd.f32 %v3447, %v3465
      %v3474 = vadd.f32 %v3448, %v3466
      %v3475 = vld [vmem:[%s2892 + $0x1] sm:$0xff]
      %v3476 = vld [vmem:[%s2892 + $0x11] sm:$0xff]
      %v3477 = vld [vmem:[%s2892 + $0x21] sm:$0xff]
      %v3478 = vld [vmem:[%s2892 + $0x31] sm:$0xff]
      %v3479 = vld [vmem:[%s2892 + $0x41] sm:$0xff]
      %v3480 = vld [vmem:[%s2892 + $0x51] sm:$0xff]
      %v3481 = vld [vmem:[%s2892 + $0x61] sm:$0xff]
      %v3482 = vld [vmem:[%s2892 + $0x71] sm:$0xff]
      %v3483 = vld [vmem:[%s8 + $0x16] sm:$0x1]
      %v3484 = vperm.slane %v3483, 0
      %v3485 = vmul.f32 %v3475, %v3484
      %v3486 = vmul.f32 %v3476, %v3484
      %v3487 = vmul.f32 %v3477, %v3484
      %v3488 = vmul.f32 %v3478, %v3484
      %v3489 = vmul.f32 %v3479, %v3484
      %v3490 = vmul.f32 %v3480, %v3484
      %v3491 = vmul.f32 %v3481, %v3484
      %v3492 = vmul.f32 %v3482, %v3484
      %v3493 = vadd.f32 %v3467, %v3485
      %v3494 = vadd.f32 %v3468, %v3486
      %v3495 = vadd.f32 %v3469, %v3487
      %v3496 = vadd.f32 %v3470, %v3488
      %v3497 = vadd.f32 %v3471, %v3489
      %v3498 = vadd.f32 %v3472, %v3490
      %v3499 = vadd.f32 %v3473, %v3491
      %v3500 = vadd.f32 %v3474, %v3492
      %v3501 = vld [vmem:[%s2892 + $0x2] sm:$0xff]
      %v3502 = vld [vmem:[%s2892 + $0x12] sm:$0xff]
      %v3503 = vld [vmem:[%s2892 + $0x22] sm:$0xff]
      %v3504 = vld [vmem:[%s2892 + $0x32] sm:$0xff]
      %v3505 = vld [vmem:[%s2892 + $0x42] sm:$0xff]
      %v3506 = vld [vmem:[%s2892 + $0x52] sm:$0xff]
      %v3507 = vld [vmem:[%s2892 + $0x62] sm:$0xff]
      %v3508 = vld [vmem:[%s2892 + $0x72] sm:$0xff]
      %v3509 = vld [vmem:[%s8 + $0x17] sm:$0x1]
      %v3510 = vperm.slane %v3509, 0
      %v3511 = vmul.f32 %v3501, %v3510
      %v3512 = vmul.f32 %v3502, %v3510
      %v3513 = vmul.f32 %v3503, %v3510
      %v3514 = vmul.f32 %v3504, %v3510
      %v3515 = vmul.f32 %v3505, %v3510
      %v3516 = vmul.f32 %v3506, %v3510
      %v3517 = vmul.f32 %v3507, %v3510
      %v3518 = vmul.f32 %v3508, %v3510
      %v3519 = vadd.f32 %v3493, %v3511
      %v3520 = vadd.f32 %v3494, %v3512
      %v3521 = vadd.f32 %v3495, %v3513
      %v3522 = vadd.f32 %v3496, %v3514
      %v3523 = vadd.f32 %v3497, %v3515
      %v3524 = vadd.f32 %v3498, %v3516
      %v3525 = vadd.f32 %v3499, %v3517
      %v3526 = vadd.f32 %v3500, %v3518
      %v3527 = vld [vmem:[%s2892 + $0x3] sm:$0xff]
      %v3528 = vld [vmem:[%s2892 + $0x13] sm:$0xff]
      %v3529 = vld [vmem:[%s2892 + $0x23] sm:$0xff]
      %v3530 = vld [vmem:[%s2892 + $0x33] sm:$0xff]
      %v3531 = vld [vmem:[%s2892 + $0x43] sm:$0xff]
      %v3532 = vld [vmem:[%s2892 + $0x53] sm:$0xff]
      %v3533 = vld [vmem:[%s2892 + $0x63] sm:$0xff]
      %v3534 = vld [vmem:[%s2892 + $0x73] sm:$0xff]
      %v3535 = vld [vmem:[%s8 + $0x18] sm:$0x1]
      %v3536 = vperm.slane %v3535, 0
      %v3537 = vmul.f32 %v3527, %v3536
      %v3538 = vmul.f32 %v3528, %v3536
      %v3539 = vmul.f32 %v3529, %v3536
      %v3540 = vmul.f32 %v3530, %v3536
      %v3541 = vmul.f32 %v3531, %v3536
      %v3542 = vmul.f32 %v3532, %v3536
      %v3543 = vmul.f32 %v3533, %v3536
      %v3544 = vmul.f32 %v3534, %v3536
      %v3545 = vadd.f32 %v3519, %v3537
      %v3546 = vadd.f32 %v3520, %v3538
      %v3547 = vadd.f32 %v3521, %v3539
      %v3548 = vadd.f32 %v3522, %v3540
      %v3549 = vadd.f32 %v3523, %v3541
      %v3550 = vadd.f32 %v3524, %v3542
      %v3551 = vadd.f32 %v3525, %v3543
      %v3552 = vadd.f32 %v3526, %v3544
      %v3553 = vld [vmem:[%s2892 + $0x4] sm:$0xff]
      %v3554 = vld [vmem:[%s2892 + $0x14] sm:$0xff]
      %v3555 = vld [vmem:[%s2892 + $0x24] sm:$0xff]
      %v3556 = vld [vmem:[%s2892 + $0x34] sm:$0xff]
      %v3557 = vld [vmem:[%s2892 + $0x44] sm:$0xff]
      %v3558 = vld [vmem:[%s2892 + $0x54] sm:$0xff]
      %v3559 = vld [vmem:[%s2892 + $0x64] sm:$0xff]
      %v3560 = vld [vmem:[%s2892 + $0x74] sm:$0xff]
      %v3561 = vld [vmem:[%s8 + $0x19] sm:$0x1]
      %v3562 = vperm.slane %v3561, 0
      %v3563 = vmul.f32 %v3553, %v3562
      %v3564 = vmul.f32 %v3554, %v3562
      %v3565 = vmul.f32 %v3555, %v3562
      %v3566 = vmul.f32 %v3556, %v3562
      %v3567 = vmul.f32 %v3557, %v3562
      %v3568 = vmul.f32 %v3558, %v3562
      %v3569 = vmul.f32 %v3559, %v3562
      %v3570 = vmul.f32 %v3560, %v3562
      %v3571 = vadd.f32 %v3545, %v3563
      %v3572 = vadd.f32 %v3546, %v3564
      %v3573 = vadd.f32 %v3547, %v3565
      %v3574 = vadd.f32 %v3548, %v3566
      %v3575 = vadd.f32 %v3549, %v3567
      %v3576 = vadd.f32 %v3550, %v3568
      %v3577 = vadd.f32 %v3551, %v3569
      %v3578 = vadd.f32 %v3552, %v3570
      %v3579 = vld [vmem:[%s2892 + $0x5] sm:$0xff]
      %v3580 = vld [vmem:[%s2892 + $0x15] sm:$0xff]
      %v3581 = vld [vmem:[%s2892 + $0x25] sm:$0xff]
      %v3582 = vld [vmem:[%s2892 + $0x35] sm:$0xff]
      %v3583 = vld [vmem:[%s2892 + $0x45] sm:$0xff]
      %v3584 = vld [vmem:[%s2892 + $0x55] sm:$0xff]
      %v3585 = vld [vmem:[%s2892 + $0x65] sm:$0xff]
      %v3586 = vld [vmem:[%s2892 + $0x75] sm:$0xff]
      %v3587 = vld [vmem:[%s8 + $0x1a] sm:$0x1]
      %v3588 = vperm.slane %v3587, 0
      %v3589 = vmul.f32 %v3579, %v3588
      %v3590 = vmul.f32 %v3580, %v3588
      %v3591 = vmul.f32 %v3581, %v3588
      %v3592 = vmul.f32 %v3582, %v3588
      %v3593 = vmul.f32 %v3583, %v3588
      %v3594 = vmul.f32 %v3584, %v3588
      %v3595 = vmul.f32 %v3585, %v3588
      %v3596 = vmul.f32 %v3586, %v3588
      %v3597 = vadd.f32 %v3571, %v3589
      %v3598 = vadd.f32 %v3572, %v3590
      %v3599 = vadd.f32 %v3573, %v3591
      %v3600 = vadd.f32 %v3574, %v3592
      %v3601 = vadd.f32 %v3575, %v3593
      %v3602 = vadd.f32 %v3576, %v3594
      %v3603 = vadd.f32 %v3577, %v3595
      %v3604 = vadd.f32 %v3578, %v3596
      %v3605 = vld [vmem:[%s2892 + $0x6] sm:$0xff]
      %v3606 = vld [vmem:[%s2892 + $0x16] sm:$0xff]
      %v3607 = vld [vmem:[%s2892 + $0x26] sm:$0xff]
      %v3608 = vld [vmem:[%s2892 + $0x36] sm:$0xff]
      %v3609 = vld [vmem:[%s2892 + $0x46] sm:$0xff]
      %v3610 = vld [vmem:[%s2892 + $0x56] sm:$0xff]
      %v3611 = vld [vmem:[%s2892 + $0x66] sm:$0xff]
      %v3612 = vld [vmem:[%s2892 + $0x76] sm:$0xff]
      %v3613 = vld [vmem:[%s8 + $0x1b] sm:$0x1]
      %v3614 = vperm.slane %v3613, 0
      %v3615 = vmul.f32 %v3605, %v3614
      %v3616 = vmul.f32 %v3606, %v3614
      %v3617 = vmul.f32 %v3607, %v3614
      %v3618 = vmul.f32 %v3608, %v3614
      %v3619 = vmul.f32 %v3609, %v3614
      %v3620 = vmul.f32 %v3610, %v3614
      %v3621 = vmul.f32 %v3611, %v3614
      %v3622 = vmul.f32 %v3612, %v3614
      %v3623 = vadd.f32 %v3597, %v3615
      %v3624 = vadd.f32 %v3598, %v3616
      %v3625 = vadd.f32 %v3599, %v3617
      %v3626 = vadd.f32 %v3600, %v3618
      %v3627 = vadd.f32 %v3601, %v3619
      %v3628 = vadd.f32 %v3602, %v3620
      %v3629 = vadd.f32 %v3603, %v3621
      %v3630 = vadd.f32 %v3604, %v3622
      %s3631 = scalar_lea.vmem [#allocation2], 64
      %v3632 = vld [vmem:[%s3631] sm:$0xff]
      %v3633 = vld [vmem:[%s3631 + $0x10] sm:$0xff]
      %v3634 = vld [vmem:[%s3631 + $0x20] sm:$0xff]
      %v3635 = vld [vmem:[%s3631 + $0x30] sm:$0xff]
      %v3636 = vld [vmem:[%s3631 + $0x40] sm:$0xff]
      %v3637 = vld [vmem:[%s3631 + $0x50] sm:$0xff]
      %v3638 = vld [vmem:[%s3631 + $0x60] sm:$0xff]
      %v3639 = vld [vmem:[%s3631 + $0x70] sm:$0xff]
      %v3640 = vld [vmem:[%s8 + $0x1c] sm:$0x1]
      %v3641 = vperm.slane %v3640, 0
      %v3642 = vmul.f32 %v3632, %v3641
      %v3643 = vmul.f32 %v3633, %v3641
      %v3644 = vmul.f32 %v3634, %v3641
      %v3645 = vmul.f32 %v3635, %v3641
      %v3646 = vmul.f32 %v3636, %v3641
      %v3647 = vmul.f32 %v3637, %v3641
      %v3648 = vmul.f32 %v3638, %v3641
      %v3649 = vmul.f32 %v3639, %v3641
      %v3650 = vadd.f32 %v3623, %v3642
      %v3651 = vadd.f32 %v3624, %v3643
      %v3652 = vadd.f32 %v3625, %v3644
      %v3653 = vadd.f32 %v3626, %v3645
      %v3654 = vadd.f32 %v3627, %v3646
      %v3655 = vadd.f32 %v3628, %v3647
      %v3656 = vadd.f32 %v3629, %v3648
      %v3657 = vadd.f32 %v3630, %v3649
      %v3658 = vld [vmem:[%s3631 + $0x1] sm:$0xff]
      %v3659 = vld [vmem:[%s3631 + $0x11] sm:$0xff]
      %v3660 = vld [vmem:[%s3631 + $0x21] sm:$0xff]
      %v3661 = vld [vmem:[%s3631 + $0x31] sm:$0xff]
      %v3662 = vld [vmem:[%s3631 + $0x41] sm:$0xff]
      %v3663 = vld [vmem:[%s3631 + $0x51] sm:$0xff]
      %v3664 = vld [vmem:[%s3631 + $0x61] sm:$0xff]
      %v3665 = vld [vmem:[%s3631 + $0x71] sm:$0xff]
      %v3666 = vld [vmem:[%s8 + $0x1d] sm:$0x1]
      %v3667 = vperm.slane %v3666, 0
      %v3668 = vmul.f32 %v3658, %v3667
      %v3669 = vmul.f32 %v3659, %v3667
      %v3670 = vmul.f32 %v3660, %v3667
      %v3671 = vmul.f32 %v3661, %v3667
      %v3672 = vmul.f32 %v3662, %v3667
      %v3673 = vmul.f32 %v3663, %v3667
      %v3674 = vmul.f32 %v3664, %v3667
      %v3675 = vmul.f32 %v3665, %v3667
      %v3676 = vadd.f32 %v3650, %v3668
      %v3677 = vadd.f32 %v3651, %v3669
      %v3678 = vadd.f32 %v3652, %v3670
      %v3679 = vadd.f32 %v3653, %v3671
      %v3680 = vadd.f32 %v3654, %v3672
      %v3681 = vadd.f32 %v3655, %v3673
      %v3682 = vadd.f32 %v3656, %v3674
      %v3683 = vadd.f32 %v3657, %v3675
      %v3684 = vld [vmem:[%s3631 + $0x2] sm:$0xff]
      %v3685 = vld [vmem:[%s3631 + $0x12] sm:$0xff]
      %v3686 = vld [vmem:[%s3631 + $0x22] sm:$0xff]
      %v3687 = vld [vmem:[%s3631 + $0x32] sm:$0xff]
      %v3688 = vld [vmem:[%s3631 + $0x42] sm:$0xff]
      %v3689 = vld [vmem:[%s3631 + $0x52] sm:$0xff]
      %v3690 = vld [vmem:[%s3631 + $0x62] sm:$0xff]
      %v3691 = vld [vmem:[%s3631 + $0x72] sm:$0xff]
      %v3692 = vld [vmem:[%s8 + $0x1e] sm:$0x1]
      %v3693 = vperm.slane %v3692, 0
      %v3694 = vmul.f32 %v3684, %v3693
      %v3695 = vmul.f32 %v3685, %v3693
      %v3696 = vmul.f32 %v3686, %v3693
      %v3697 = vmul.f32 %v3687, %v3693
      %v3698 = vmul.f32 %v3688, %v3693
      %v3699 = vmul.f32 %v3689, %v3693
      %v3700 = vmul.f32 %v3690, %v3693
      %v3701 = vmul.f32 %v3691, %v3693
      %v3702 = vadd.f32 %v3676, %v3694
      %v3703 = vadd.f32 %v3677, %v3695
      %v3704 = vadd.f32 %v3678, %v3696
      %v3705 = vadd.f32 %v3679, %v3697
      %v3706 = vadd.f32 %v3680, %v3698
      %v3707 = vadd.f32 %v3681, %v3699
      %v3708 = vadd.f32 %v3682, %v3700
      %v3709 = vadd.f32 %v3683, %v3701
      %v3710 = vld [vmem:[%s3631 + $0x3] sm:$0xff]
      %v3711 = vld [vmem:[%s3631 + $0x13] sm:$0xff]
      %v3712 = vld [vmem:[%s3631 + $0x23] sm:$0xff]
      %v3713 = vld [vmem:[%s3631 + $0x33] sm:$0xff]
      %v3714 = vld [vmem:[%s3631 + $0x43] sm:$0xff]
      %v3715 = vld [vmem:[%s3631 + $0x53] sm:$0xff]
      %v3716 = vld [vmem:[%s3631 + $0x63] sm:$0xff]
      %v3717 = vld [vmem:[%s3631 + $0x73] sm:$0xff]
      %v3718 = vld [vmem:[%s8 + $0x1f] sm:$0x1]
      %v3719 = vperm.slane %v3718, 0
      %v3720 = vmul.f32 %v3710, %v3719
      %v3721 = vmul.f32 %v3711, %v3719
      %v3722 = vmul.f32 %v3712, %v3719
      %v3723 = vmul.f32 %v3713, %v3719
      %v3724 = vmul.f32 %v3714, %v3719
      %v3725 = vmul.f32 %v3715, %v3719
      %v3726 = vmul.f32 %v3716, %v3719
      %v3727 = vmul.f32 %v3717, %v3719
      %v3728 = vadd.f32 %v3702, %v3720
      %v3729 = vadd.f32 %v3703, %v3721
      %v3730 = vadd.f32 %v3704, %v3722
      %v3731 = vadd.f32 %v3705, %v3723
      %v3732 = vadd.f32 %v3706, %v3724
      %v3733 = vadd.f32 %v3707, %v3725
      %v3734 = vadd.f32 %v3708, %v3726
      %v3735 = vadd.f32 %v3709, %v3727
      %v3736 = vld [vmem:[%s3631 + $0x4] sm:$0xff]
      %v3737 = vld [vmem:[%s3631 + $0x14] sm:$0xff]
      %v3738 = vld [vmem:[%s3631 + $0x24] sm:$0xff]
      %v3739 = vld [vmem:[%s3631 + $0x34] sm:$0xff]
      %v3740 = vld [vmem:[%s3631 + $0x44] sm:$0xff]
      %v3741 = vld [vmem:[%s3631 + $0x54] sm:$0xff]
      %v3742 = vld [vmem:[%s3631 + $0x64] sm:$0xff]
      %v3743 = vld [vmem:[%s3631 + $0x74] sm:$0xff]
      %v3744 = vld [vmem:[%s8 + $0x20] sm:$0x1]
      %v3745 = vperm.slane %v3744, 0
      %v3746 = vmul.f32 %v3736, %v3745
      %v3747 = vmul.f32 %v3737, %v3745
      %v3748 = vmul.f32 %v3738, %v3745
      %v3749 = vmul.f32 %v3739, %v3745
      %v3750 = vmul.f32 %v3740, %v3745
      %v3751 = vmul.f32 %v3741, %v3745
      %v3752 = vmul.f32 %v3742, %v3745
      %v3753 = vmul.f32 %v3743, %v3745
      %v3754 = vadd.f32 %v3728, %v3746
      %v3755 = vadd.f32 %v3729, %v3747
      %v3756 = vadd.f32 %v3730, %v3748
      %v3757 = vadd.f32 %v3731, %v3749
      %v3758 = vadd.f32 %v3732, %v3750
      %v3759 = vadd.f32 %v3733, %v3751
      %v3760 = vadd.f32 %v3734, %v3752
      %v3761 = vadd.f32 %v3735, %v3753
      %v3762 = vld [vmem:[%s3631 + $0x5] sm:$0xff]
      %v3763 = vld [vmem:[%s3631 + $0x15] sm:$0xff]
      %v3764 = vld [vmem:[%s3631 + $0x25] sm:$0xff]
      %v3765 = vld [vmem:[%s3631 + $0x35] sm:$0xff]
      %v3766 = vld [vmem:[%s3631 + $0x45] sm:$0xff]
      %v3767 = vld [vmem:[%s3631 + $0x55] sm:$0xff]
      %v3768 = vld [vmem:[%s3631 + $0x65] sm:$0xff]
      %v3769 = vld [vmem:[%s3631 + $0x75] sm:$0xff]
      %v3770 = vld [vmem:[%s8 + $0x21] sm:$0x1]
      %v3771 = vperm.slane %v3770, 0
      %v3772 = vmul.f32 %v3762, %v3771
      %v3773 = vmul.f32 %v3763, %v3771
      %v3774 = vmul.f32 %v3764, %v3771
      %v3775 = vmul.f32 %v3765, %v3771
      %v3776 = vmul.f32 %v3766, %v3771
      %v3777 = vmul.f32 %v3767, %v3771
      %v3778 = vmul.f32 %v3768, %v3771
      %v3779 = vmul.f32 %v3769, %v3771
      %v3780 = vadd.f32 %v3754, %v3772
      %v3781 = vadd.f32 %v3755, %v3773
      %v3782 = vadd.f32 %v3756, %v3774
      %v3783 = vadd.f32 %v3757, %v3775
      %v3784 = vadd.f32 %v3758, %v3776
      %v3785 = vadd.f32 %v3759, %v3777
      %v3786 = vadd.f32 %v3760, %v3778
      %v3787 = vadd.f32 %v3761, %v3779
      %v3788 = vld [vmem:[%s3631 + $0x6] sm:$0xff]
      %v3789 = vld [vmem:[%s3631 + $0x16] sm:$0xff]
      %v3790 = vld [vmem:[%s3631 + $0x26] sm:$0xff]
      %v3791 = vld [vmem:[%s3631 + $0x36] sm:$0xff]
      %v3792 = vld [vmem:[%s3631 + $0x46] sm:$0xff]
      %v3793 = vld [vmem:[%s3631 + $0x56] sm:$0xff]
      %v3794 = vld [vmem:[%s3631 + $0x66] sm:$0xff]
      %v3795 = vld [vmem:[%s3631 + $0x76] sm:$0xff]
      %v3796 = vld [vmem:[%s8 + $0x22] sm:$0x1]
      %v3797 = vperm.slane %v3796, 0
      %v3798 = vmul.f32 %v3788, %v3797
      %v3799 = vmul.f32 %v3789, %v3797
      %v3800 = vmul.f32 %v3790, %v3797
      %v3801 = vmul.f32 %v3791, %v3797
      %v3802 = vmul.f32 %v3792, %v3797
      %v3803 = vmul.f32 %v3793, %v3797
      %v3804 = vmul.f32 %v3794, %v3797
      %v3805 = vmul.f32 %v3795, %v3797
      %v3806 = vadd.f32 %v3780, %v3798
      %v3807 = vadd.f32 %v3781, %v3799
      %v3808 = vadd.f32 %v3782, %v3800
      %v3809 = vadd.f32 %v3783, %v3801
      %v3810 = vadd.f32 %v3784, %v3802
      %v3811 = vadd.f32 %v3785, %v3803
      %v3812 = vadd.f32 %v3786, %v3804
      %v3813 = vadd.f32 %v3787, %v3805
      %s3814 = scalar_lea.vmem [#allocation2], 80
      %v3815 = vld [vmem:[%s3814] sm:$0xff]
      %v3816 = vld [vmem:[%s3814 + $0x10] sm:$0xff]
      %v3817 = vld [vmem:[%s3814 + $0x20] sm:$0xff]
      %v3818 = vld [vmem:[%s3814 + $0x30] sm:$0xff]
      %v3819 = vld [vmem:[%s3814 + $0x40] sm:$0xff]
      %v3820 = vld [vmem:[%s3814 + $0x50] sm:$0xff]
      %v3821 = vld [vmem:[%s3814 + $0x60] sm:$0xff]
      %v3822 = vld [vmem:[%s3814 + $0x70] sm:$0xff]
      %v3823 = vld [vmem:[%s8 + $0x23] sm:$0x1]
      %v3824 = vperm.slane %v3823, 0
      %v3825 = vmul.f32 %v3815, %v3824
      %v3826 = vmul.f32 %v3816, %v3824
      %v3827 = vmul.f32 %v3817, %v3824
      %v3828 = vmul.f32 %v3818, %v3824
      %v3829 = vmul.f32 %v3819, %v3824
      %v3830 = vmul.f32 %v3820, %v3824
      %v3831 = vmul.f32 %v3821, %v3824
      %v3832 = vmul.f32 %v3822, %v3824
      %v3833 = vadd.f32 %v3806, %v3825
      %v3834 = vadd.f32 %v3807, %v3826
      %v3835 = vadd.f32 %v3808, %v3827
      %v3836 = vadd.f32 %v3809, %v3828
      %v3837 = vadd.f32 %v3810, %v3829
      %v3838 = vadd.f32 %v3811, %v3830
      %v3839 = vadd.f32 %v3812, %v3831
      %v3840 = vadd.f32 %v3813, %v3832
      %v3841 = vld [vmem:[%s3814 + $0x1] sm:$0xff]
      %v3842 = vld [vmem:[%s3814 + $0x11] sm:$0xff]
      %v3843 = vld [vmem:[%s3814 + $0x21] sm:$0xff]
      %v3844 = vld [vmem:[%s3814 + $0x31] sm:$0xff]
      %v3845 = vld [vmem:[%s3814 + $0x41] sm:$0xff]
      %v3846 = vld [vmem:[%s3814 + $0x51] sm:$0xff]
      %v3847 = vld [vmem:[%s3814 + $0x61] sm:$0xff]
      %v3848 = vld [vmem:[%s3814 + $0x71] sm:$0xff]
      %v3849 = vld [vmem:[%s8 + $0x24] sm:$0x1]
      %v3850 = vperm.slane %v3849, 0
      %v3851 = vmul.f32 %v3841, %v3850
      %v3852 = vmul.f32 %v3842, %v3850
      %v3853 = vmul.f32 %v3843, %v3850
      %v3854 = vmul.f32 %v3844, %v3850
      %v3855 = vmul.f32 %v3845, %v3850
      %v3856 = vmul.f32 %v3846, %v3850
      %v3857 = vmul.f32 %v3847, %v3850
      %v3858 = vmul.f32 %v3848, %v3850
      %v3859 = vadd.f32 %v3833, %v3851
      %v3860 = vadd.f32 %v3834, %v3852
      %v3861 = vadd.f32 %v3835, %v3853
      %v3862 = vadd.f32 %v3836, %v3854
      %v3863 = vadd.f32 %v3837, %v3855
      %v3864 = vadd.f32 %v3838, %v3856
      %v3865 = vadd.f32 %v3839, %v3857
      %v3866 = vadd.f32 %v3840, %v3858
      %v3867 = vld [vmem:[%s3814 + $0x2] sm:$0xff]
      %v3868 = vld [vmem:[%s3814 + $0x12] sm:$0xff]
      %v3869 = vld [vmem:[%s3814 + $0x22] sm:$0xff]
      %v3870 = vld [vmem:[%s3814 + $0x32] sm:$0xff]
      %v3871 = vld [vmem:[%s3814 + $0x42] sm:$0xff]
      %v3872 = vld [vmem:[%s3814 + $0x52] sm:$0xff]
      %v3873 = vld [vmem:[%s3814 + $0x62] sm:$0xff]
      %v3874 = vld [vmem:[%s3814 + $0x72] sm:$0xff]
      %v3875 = vld [vmem:[%s8 + $0x25] sm:$0x1]
      %v3876 = vperm.slane %v3875, 0
      %v3877 = vmul.f32 %v3867, %v3876
      %v3878 = vmul.f32 %v3868, %v3876
      %v3879 = vmul.f32 %v3869, %v3876
      %v3880 = vmul.f32 %v3870, %v3876
      %v3881 = vmul.f32 %v3871, %v3876
      %v3882 = vmul.f32 %v3872, %v3876
      %v3883 = vmul.f32 %v3873, %v3876
      %v3884 = vmul.f32 %v3874, %v3876
      %v3885 = vadd.f32 %v3859, %v3877
      %v3886 = vadd.f32 %v3860, %v3878
      %v3887 = vadd.f32 %v3861, %v3879
      %v3888 = vadd.f32 %v3862, %v3880
      %v3889 = vadd.f32 %v3863, %v3881
      %v3890 = vadd.f32 %v3864, %v3882
      %v3891 = vadd.f32 %v3865, %v3883
      %v3892 = vadd.f32 %v3866, %v3884
      %v3893 = vld [vmem:[%s3814 + $0x3] sm:$0xff]
      %v3894 = vld [vmem:[%s3814 + $0x13] sm:$0xff]
      %v3895 = vld [vmem:[%s3814 + $0x23] sm:$0xff]
      %v3896 = vld [vmem:[%s3814 + $0x33] sm:$0xff]
      %v3897 = vld [vmem:[%s3814 + $0x43] sm:$0xff]
      %v3898 = vld [vmem:[%s3814 + $0x53] sm:$0xff]
      %v3899 = vld [vmem:[%s3814 + $0x63] sm:$0xff]
      %v3900 = vld [vmem:[%s3814 + $0x73] sm:$0xff]
      %v3901 = vld [vmem:[%s8 + $0x26] sm:$0x1]
      %v3902 = vperm.slane %v3901, 0
      %v3903 = vmul.f32 %v3893, %v3902
      %v3904 = vmul.f32 %v3894, %v3902
      %v3905 = vmul.f32 %v3895, %v3902
      %v3906 = vmul.f32 %v3896, %v3902
      %v3907 = vmul.f32 %v3897, %v3902
      %v3908 = vmul.f32 %v3898, %v3902
      %v3909 = vmul.f32 %v3899, %v3902
      %v3910 = vmul.f32 %v3900, %v3902
      %v3911 = vadd.f32 %v3885, %v3903
      %v3912 = vadd.f32 %v3886, %v3904
      %v3913 = vadd.f32 %v3887, %v3905
      %v3914 = vadd.f32 %v3888, %v3906
      %v3915 = vadd.f32 %v3889, %v3907
      %v3916 = vadd.f32 %v3890, %v3908
      %v3917 = vadd.f32 %v3891, %v3909
      %v3918 = vadd.f32 %v3892, %v3910
      %v3919 = vld [vmem:[%s3814 + $0x4] sm:$0xff]
      %v3920 = vld [vmem:[%s3814 + $0x14] sm:$0xff]
      %v3921 = vld [vmem:[%s3814 + $0x24] sm:$0xff]
      %v3922 = vld [vmem:[%s3814 + $0x34] sm:$0xff]
      %v3923 = vld [vmem:[%s3814 + $0x44] sm:$0xff]
      %v3924 = vld [vmem:[%s3814 + $0x54] sm:$0xff]
      %v3925 = vld [vmem:[%s3814 + $0x64] sm:$0xff]
      %v3926 = vld [vmem:[%s3814 + $0x74] sm:$0xff]
      %v3927 = vld [vmem:[%s8 + $0x27] sm:$0x1]
      %v3928 = vperm.slane %v3927, 0
      %v3929 = vmul.f32 %v3919, %v3928
      %v3930 = vmul.f32 %v3920, %v3928
      %v3931 = vmul.f32 %v3921, %v3928
      %v3932 = vmul.f32 %v3922, %v3928
      %v3933 = vmul.f32 %v3923, %v3928
      %v3934 = vmul.f32 %v3924, %v3928
      %v3935 = vmul.f32 %v3925, %v3928
      %v3936 = vmul.f32 %v3926, %v3928
      %v3937 = vadd.f32 %v3911, %v3929
      %v3938 = vadd.f32 %v3912, %v3930
      %v3939 = vadd.f32 %v3913, %v3931
      %v3940 = vadd.f32 %v3914, %v3932
      %v3941 = vadd.f32 %v3915, %v3933
      %v3942 = vadd.f32 %v3916, %v3934
      %v3943 = vadd.f32 %v3917, %v3935
      %v3944 = vadd.f32 %v3918, %v3936
      %v3945 = vld [vmem:[%s3814 + $0x5] sm:$0xff]
      %v3946 = vld [vmem:[%s3814 + $0x15] sm:$0xff]
      %v3947 = vld [vmem:[%s3814 + $0x25] sm:$0xff]
      %v3948 = vld [vmem:[%s3814 + $0x35] sm:$0xff]
      %v3949 = vld [vmem:[%s3814 + $0x45] sm:$0xff]
      %v3950 = vld [vmem:[%s3814 + $0x55] sm:$0xff]
      %v3951 = vld [vmem:[%s3814 + $0x65] sm:$0xff]
      %v3952 = vld [vmem:[%s3814 + $0x75] sm:$0xff]
      %v3953 = vld [vmem:[%s8 + $0x28] sm:$0x1]
      %v3954 = vperm.slane %v3953, 0
      %v3955 = vmul.f32 %v3945, %v3954
      %v3956 = vmul.f32 %v3946, %v3954
      %v3957 = vmul.f32 %v3947, %v3954
      %v3958 = vmul.f32 %v3948, %v3954
      %v3959 = vmul.f32 %v3949, %v3954
      %v3960 = vmul.f32 %v3950, %v3954
      %v3961 = vmul.f32 %v3951, %v3954
      %v3962 = vmul.f32 %v3952, %v3954
      %v3963 = vadd.f32 %v3937, %v3955
      %v3964 = vadd.f32 %v3938, %v3956
      %v3965 = vadd.f32 %v3939, %v3957
      %v3966 = vadd.f32 %v3940, %v3958
      %v3967 = vadd.f32 %v3941, %v3959
      %v3968 = vadd.f32 %v3942, %v3960
      %v3969 = vadd.f32 %v3943, %v3961
      %v3970 = vadd.f32 %v3944, %v3962
      %v3971 = vld [vmem:[%s3814 + $0x6] sm:$0xff]
      %v3972 = vld [vmem:[%s3814 + $0x16] sm:$0xff]
      %v3973 = vld [vmem:[%s3814 + $0x26] sm:$0xff]
      %v3974 = vld [vmem:[%s3814 + $0x36] sm:$0xff]
      %v3975 = vld [vmem:[%s3814 + $0x46] sm:$0xff]
      %v3976 = vld [vmem:[%s3814 + $0x56] sm:$0xff]
      %v3977 = vld [vmem:[%s3814 + $0x66] sm:$0xff]
      %v3978 = vld [vmem:[%s3814 + $0x76] sm:$0xff]
      %v3979 = vld [vmem:[%s8 + $0x29] sm:$0x1]
      %v3980 = vperm.slane %v3979, 0
      %v3981 = vmul.f32 %v3971, %v3980
      %v3982 = vmul.f32 %v3972, %v3980
      %v3983 = vmul.f32 %v3973, %v3980
      %v3984 = vmul.f32 %v3974, %v3980
      %v3985 = vmul.f32 %v3975, %v3980
      %v3986 = vmul.f32 %v3976, %v3980
      %v3987 = vmul.f32 %v3977, %v3980
      %v3988 = vmul.f32 %v3978, %v3980
      %v3989 = vadd.f32 %v3963, %v3981
      %v3990 = vadd.f32 %v3964, %v3982
      %v3991 = vadd.f32 %v3965, %v3983
      %v3992 = vadd.f32 %v3966, %v3984
      %v3993 = vadd.f32 %v3967, %v3985
      %v3994 = vadd.f32 %v3968, %v3986
      %v3995 = vadd.f32 %v3969, %v3987
      %v3996 = vadd.f32 %v3970, %v3988
      %s3997 = scalar_lea.vmem [#allocation2], 96
      %v3998 = vld [vmem:[%s3997] sm:$0xff]
      %v3999 = vld [vmem:[%s3997 + $0x10] sm:$0xff]
      %v4000 = vld [vmem:[%s3997 + $0x20] sm:$0xff]
      %v4001 = vld [vmem:[%s3997 + $0x30] sm:$0xff]
      %v4002 = vld [vmem:[%s3997 + $0x40] sm:$0xff]
      %v4003 = vld [vmem:[%s3997 + $0x50] sm:$0xff]
      %v4004 = vld [vmem:[%s3997 + $0x60] sm:$0xff]
      %v4005 = vld [vmem:[%s3997 + $0x70] sm:$0xff]
      %v4006 = vld [vmem:[%s8 + $0x2a] sm:$0x1]
      %v4007 = vperm.slane %v4006, 0
      %v4008 = vmul.f32 %v3998, %v4007
      %v4009 = vmul.f32 %v3999, %v4007
      %v4010 = vmul.f32 %v4000, %v4007
      %v4011 = vmul.f32 %v4001, %v4007
      %v4012 = vmul.f32 %v4002, %v4007
      %v4013 = vmul.f32 %v4003, %v4007
      %v4014 = vmul.f32 %v4004, %v4007
      %v4015 = vmul.f32 %v4005, %v4007
      %v4016 = vadd.f32 %v3989, %v4008
      %v4017 = vadd.f32 %v3990, %v4009
      %v4018 = vadd.f32 %v3991, %v4010
      %v4019 = vadd.f32 %v3992, %v4011
      %v4020 = vadd.f32 %v3993, %v4012
      %v4021 = vadd.f32 %v3994, %v4013
      %v4022 = vadd.f32 %v3995, %v4014
      %v4023 = vadd.f32 %v3996, %v4015
      %v4024 = vld [vmem:[%s3997 + $0x1] sm:$0xff]
      %v4025 = vld [vmem:[%s3997 + $0x11] sm:$0xff]
      %v4026 = vld [vmem:[%s3997 + $0x21] sm:$0xff]
      %v4027 = vld [vmem:[%s3997 + $0x31] sm:$0xff]
      %v4028 = vld [vmem:[%s3997 + $0x41] sm:$0xff]
      %v4029 = vld [vmem:[%s3997 + $0x51] sm:$0xff]
      %v4030 = vld [vmem:[%s3997 + $0x61] sm:$0xff]
      %v4031 = vld [vmem:[%s3997 + $0x71] sm:$0xff]
      %v4032 = vld [vmem:[%s8 + $0x2b] sm:$0x1]
      %v4033 = vperm.slane %v4032, 0
      %v4034 = vmul.f32 %v4024, %v4033
      %v4035 = vmul.f32 %v4025, %v4033
      %v4036 = vmul.f32 %v4026, %v4033
      %v4037 = vmul.f32 %v4027, %v4033
      %v4038 = vmul.f32 %v4028, %v4033
      %v4039 = vmul.f32 %v4029, %v4033
      %v4040 = vmul.f32 %v4030, %v4033
      %v4041 = vmul.f32 %v4031, %v4033
      %v4042 = vadd.f32 %v4016, %v4034
      %v4043 = vadd.f32 %v4017, %v4035
      %v4044 = vadd.f32 %v4018, %v4036
      %v4045 = vadd.f32 %v4019, %v4037
      %v4046 = vadd.f32 %v4020, %v4038
      %v4047 = vadd.f32 %v4021, %v4039
      %v4048 = vadd.f32 %v4022, %v4040
      %v4049 = vadd.f32 %v4023, %v4041
      %v4050 = vld [vmem:[%s3997 + $0x2] sm:$0xff]
      %v4051 = vld [vmem:[%s3997 + $0x12] sm:$0xff]
      %v4052 = vld [vmem:[%s3997 + $0x22] sm:$0xff]
      %v4053 = vld [vmem:[%s3997 + $0x32] sm:$0xff]
      %v4054 = vld [vmem:[%s3997 + $0x42] sm:$0xff]
      %v4055 = vld [vmem:[%s3997 + $0x52] sm:$0xff]
      %v4056 = vld [vmem:[%s3997 + $0x62] sm:$0xff]
      %v4057 = vld [vmem:[%s3997 + $0x72] sm:$0xff]
      %v4058 = vld [vmem:[%s8 + $0x2c] sm:$0x1]
      %v4059 = vperm.slane %v4058, 0
      %v4060 = vmul.f32 %v4050, %v4059
      %v4061 = vmul.f32 %v4051, %v4059
      %v4062 = vmul.f32 %v4052, %v4059
      %v4063 = vmul.f32 %v4053, %v4059
      %v4064 = vmul.f32 %v4054, %v4059
      %v4065 = vmul.f32 %v4055, %v4059
      %v4066 = vmul.f32 %v4056, %v4059
      %v4067 = vmul.f32 %v4057, %v4059
      %v4068 = vadd.f32 %v4042, %v4060
      %v4069 = vadd.f32 %v4043, %v4061
      %v4070 = vadd.f32 %v4044, %v4062
      %v4071 = vadd.f32 %v4045, %v4063
      %v4072 = vadd.f32 %v4046, %v4064
      %v4073 = vadd.f32 %v4047, %v4065
      %v4074 = vadd.f32 %v4048, %v4066
      %v4075 = vadd.f32 %v4049, %v4067
      %v4076 = vld [vmem:[%s3997 + $0x3] sm:$0xff]
      %v4077 = vld [vmem:[%s3997 + $0x13] sm:$0xff]
      %v4078 = vld [vmem:[%s3997 + $0x23] sm:$0xff]
      %v4079 = vld [vmem:[%s3997 + $0x33] sm:$0xff]
      %v4080 = vld [vmem:[%s3997 + $0x43] sm:$0xff]
      %v4081 = vld [vmem:[%s3997 + $0x53] sm:$0xff]
      %v4082 = vld [vmem:[%s3997 + $0x63] sm:$0xff]
      %v4083 = vld [vmem:[%s3997 + $0x73] sm:$0xff]
      %v4084 = vld [vmem:[%s8 + $0x2d] sm:$0x1]
      %v4085 = vperm.slane %v4084, 0
      %v4086 = vmul.f32 %v4076, %v4085
      %v4087 = vmul.f32 %v4077, %v4085
      %v4088 = vmul.f32 %v4078, %v4085
      %v4089 = vmul.f32 %v4079, %v4085
      %v4090 = vmul.f32 %v4080, %v4085
      %v4091 = vmul.f32 %v4081, %v4085
      %v4092 = vmul.f32 %v4082, %v4085
      %v4093 = vmul.f32 %v4083, %v4085
      %v4094 = vadd.f32 %v4068, %v4086
      %v4095 = vadd.f32 %v4069, %v4087
      %v4096 = vadd.f32 %v4070, %v4088
      %v4097 = vadd.f32 %v4071, %v4089
      %v4098 = vadd.f32 %v4072, %v4090
      %v4099 = vadd.f32 %v4073, %v4091
      %v4100 = vadd.f32 %v4074, %v4092
      %v4101 = vadd.f32 %v4075, %v4093
      %v4102 = vld [vmem:[%s3997 + $0x4] sm:$0xff]
      %v4103 = vld [vmem:[%s3997 + $0x14] sm:$0xff]
      %v4104 = vld [vmem:[%s3997 + $0x24] sm:$0xff]
      %v4105 = vld [vmem:[%s3997 + $0x34] sm:$0xff]
      %v4106 = vld [vmem:[%s3997 + $0x44] sm:$0xff]
      %v4107 = vld [vmem:[%s3997 + $0x54] sm:$0xff]
      %v4108 = vld [vmem:[%s3997 + $0x64] sm:$0xff]
      %v4109 = vld [vmem:[%s3997 + $0x74] sm:$0xff]
      %v4110 = vld [vmem:[%s8 + $0x2e] sm:$0x1]
      %v4111 = vperm.slane %v4110, 0
      %v4112 = vmul.f32 %v4102, %v4111
      %v4113 = vmul.f32 %v4103, %v4111
      %v4114 = vmul.f32 %v4104, %v4111
      %v4115 = vmul.f32 %v4105, %v4111
      %v4116 = vmul.f32 %v4106, %v4111
      %v4117 = vmul.f32 %v4107, %v4111
      %v4118 = vmul.f32 %v4108, %v4111
      %v4119 = vmul.f32 %v4109, %v4111
      %v4120 = vadd.f32 %v4094, %v4112
      %v4121 = vadd.f32 %v4095, %v4113
      %v4122 = vadd.f32 %v4096, %v4114
      %v4123 = vadd.f32 %v4097, %v4115
      %v4124 = vadd.f32 %v4098, %v4116
      %v4125 = vadd.f32 %v4099, %v4117
      %v4126 = vadd.f32 %v4100, %v4118
      %v4127 = vadd.f32 %v4101, %v4119
      %v4128 = vld [vmem:[%s3997 + $0x5] sm:$0xff]
      %v4129 = vld [vmem:[%s3997 + $0x15] sm:$0xff]
      %v4130 = vld [vmem:[%s3997 + $0x25] sm:$0xff]
      %v4131 = vld [vmem:[%s3997 + $0x35] sm:$0xff]
      %v4132 = vld [vmem:[%s3997 + $0x45] sm:$0xff]
      %v4133 = vld [vmem:[%s3997 + $0x55] sm:$0xff]
      %v4134 = vld [vmem:[%s3997 + $0x65] sm:$0xff]
      %v4135 = vld [vmem:[%s3997 + $0x75] sm:$0xff]
      %v4136 = vld [vmem:[%s8 + $0x2f] sm:$0x1]
      %v4137 = vperm.slane %v4136, 0
      %v4138 = vmul.f32 %v4128, %v4137
      %v4139 = vmul.f32 %v4129, %v4137
      %v4140 = vmul.f32 %v4130, %v4137
      %v4141 = vmul.f32 %v4131, %v4137
      %v4142 = vmul.f32 %v4132, %v4137
      %v4143 = vmul.f32 %v4133, %v4137
      %v4144 = vmul.f32 %v4134, %v4137
      %v4145 = vmul.f32 %v4135, %v4137
      %v4146 = vadd.f32 %v4120, %v4138
      %v4147 = vadd.f32 %v4121, %v4139
      %v4148 = vadd.f32 %v4122, %v4140
      %v4149 = vadd.f32 %v4123, %v4141
      %v4150 = vadd.f32 %v4124, %v4142
      %v4151 = vadd.f32 %v4125, %v4143
      %v4152 = vadd.f32 %v4126, %v4144
      %v4153 = vadd.f32 %v4127, %v4145
      %v4154 = vld [vmem:[%s3997 + $0x6] sm:$0xff]
      %v4155 = vld [vmem:[%s3997 + $0x16] sm:$0xff]
      %v4156 = vld [vmem:[%s3997 + $0x26] sm:$0xff]
      %v4157 = vld [vmem:[%s3997 + $0x36] sm:$0xff]
      %v4158 = vld [vmem:[%s3997 + $0x46] sm:$0xff]
      %v4159 = vld [vmem:[%s3997 + $0x56] sm:$0xff]
      %v4160 = vld [vmem:[%s3997 + $0x66] sm:$0xff]
      %v4161 = vld [vmem:[%s3997 + $0x76] sm:$0xff]
      %v4162 = vld [vmem:[%s8 + $0x30] sm:$0x1]
      %v4163 = vperm.slane %v4162, 0
      %v4164 = vmul.f32 %v4154, %v4163
      %v4165 = vmul.f32 %v4155, %v4163
      %v4166 = vmul.f32 %v4156, %v4163
      %v4167 = vmul.f32 %v4157, %v4163
      %v4168 = vmul.f32 %v4158, %v4163
      %v4169 = vmul.f32 %v4159, %v4163
      %v4170 = vmul.f32 %v4160, %v4163
      %v4171 = vmul.f32 %v4161, %v4163
      %v4172 = vadd.f32 %v4146, %v4164
      %v4173 = vadd.f32 %v4147, %v4165
      %v4174 = vadd.f32 %v4148, %v4166
      %v4175 = vadd.f32 %v4149, %v4167
      %v4176 = vadd.f32 %v4150, %v4168
      %v4177 = vadd.f32 %v4151, %v4169
      %v4178 = vadd.f32 %v4152, %v4170
      %v4179 = vadd.f32 %v4153, %v4171
      %v4180 = vld [vmem:[%s2 + $0x4] sm:$0x1]
      %v4181 = vperm.slane %v4180, 0
      %v4182 = vadd.f32 %v4172, %v4181
      %v4183 = vadd.f32 %v4173, %v4181
      %v4184 = vadd.f32 %v4174, %v4181
      %v4185 = vadd.f32 %v4175, %v4181
      %v4186 = vadd.f32 %v4176, %v4181
      %v4187 = vadd.f32 %v4177, %v4181
      %v4188 = vadd.f32 %v4178, %v4181
      %v4189 = vadd.f32 %v4179, %v4181
      %v4190 = vld [vmem:[%s2 + $0x5] sm:$0x1]
      %v4191 = vperm.slane %v4190, 0
      %v4192 = vmul.f32 %v4182, %v4191
      %v4193 = vmul.f32 %v4183, %v4191
      %v4194 = vmul.f32 %v4184, %v4191
      %v4195 = vmul.f32 %v4185, %v4191
      %v4196 = vmul.f32 %v4186, %v4191
      %v4197 = vmul.f32 %v4187, %v4191
      %v4198 = vmul.f32 %v4188, %v4191
      %v4199 = vmul.f32 %v4189, %v4191
      %v4200 = vld [vmem:[%s2 + $0x6] sm:$0x1]
      %v4201 = vperm.slane %v4200, 0
      %v4202 = vadd.f32 %v4192, %v4201
      %v4203 = vadd.f32 %v4193, %v4201
      %v4204 = vadd.f32 %v4194, %v4201
      %v4205 = vadd.f32 %v4195, %v4201
      %v4206 = vadd.f32 %v4196, %v4201
      %v4207 = vadd.f32 %v4197, %v4201
      %v4208 = vadd.f32 %v4198, %v4201
      %v4209 = vadd.f32 %v4199, %v4201
      %v4210 = vmul.f32 %v4202, 0.5
      %v4211 = vmul.f32 %v4203, 0.5
      %v4212 = vmul.f32 %v4204, 0.5
      %v4213 = vmul.f32 %v4205, 0.5
      %v4214 = vmul.f32 %v4206, 0.5
      %v4215 = vmul.f32 %v4207, 0.5
      %v4216 = vmul.f32 %v4208, 0.5
      %v4217 = vmul.f32 %v4209, 0.5
      %v4218 = vmul.f32 %v4202, 0.044715
      %v4219 = vmul.f32 %v4203, 0.044715
      %v4220 = vmul.f32 %v4204, 0.044715
      %v4221 = vmul.f32 %v4205, 0.044715
      %v4222 = vmul.f32 %v4206, 0.044715
      %v4223 = vmul.f32 %v4207, 0.044715
      %v4224 = vmul.f32 %v4208, 0.044715
      %v4225 = vmul.f32 %v4209, 0.044715
      %v4226 = vmul.f32 %v4218, %v4202
      %v4227 = vmul.f32 %v4219, %v4203
      %v4228 = vmul.f32 %v4220, %v4204
      %v4229 = vmul.f32 %v4221, %v4205
      %v4230 = vmul.f32 %v4222, %v4206
      %v4231 = vmul.f32 %v4223, %v4207
      %v4232 = vmul.f32 %v4224, %v4208
      %v4233 = vmul.f32 %v4225, %v4209
      %v4234 = vmul.f32 %v4226, %v4202
      %v4235 = vmul.f32 %v4227, %v4203
      %v4236 = vmul.f32 %v4228, %v4204
      %v4237 = vmul.f32 %v4229, %v4205
      %v4238 = vmul.f32 %v4230, %v4206
      %v4239 = vmul.f32 %v4231, %v4207
      %v4240 = vmul.f32 %v4232, %v4208
      %v4241 = vmul.f32 %v4233, %v4209
      %v4242 = vadd.f32 %v4202, %v4234
      %v4243 = vadd.f32 %v4203, %v4235
      %v4244 = vadd.f32 %v4204, %v4236
      %v4245 = vadd.f32 %v4205, %v4237
      %v4246 = vadd.f32 %v4206, %v4238
      %v4247 = vadd.f32 %v4207, %v4239
      %v4248 = vadd.f32 %v4208, %v4240
      %v4249 = vadd.f32 %v4209, %v4241
      %v4250 = vmul.f32 %v4242, 0.7978846
      %v4251 = vmul.f32 %v4243, 0.7978846
      %v4252 = vmul.f32 %v4244, 0.7978846
      %v4253 = vmul.f32 %v4245, 0.7978846
      %v4254 = vmul.f32 %v4246, 0.7978846
      %v4255 = vmul.f32 %v4247, 0.7978846
      %v4256 = vmul.f32 %v4248, 0.7978846
      %v4257 = vmul.f32 %v4249, 0.7978846
      %v4258 = vtanh.pop %v4250
      %v4259 = vtanh.pop %v4251
      %v4260 = vtanh.pop %v4252
      %v4261 = vtanh.pop %v4253
      %v4262 = vtanh.pop %v4254
      %v4263 = vtanh.pop %v4255
      %v4264 = vtanh.pop %v4256
      %v4265 = vtanh.pop %v4257
      %v4266 = vadd.f32 %v4258, 1.0
      %v4267 = vadd.f32 %v4259, 1.0
      %v4268 = vadd.f32 %v4260, 1.0
      %v4269 = vadd.f32 %v4261, 1.0
      %v4270 = vadd.f32 %v4262, 1.0
      %v4271 = vadd.f32 %v4263, 1.0
      %v4272 = vadd.f32 %v4264, 1.0
      %v4273 = vadd.f32 %v4265, 1.0
      %v4274 = vmul.f32 %v4210, %v4266
      %v4275 = vmul.f32 %v4211, %v4267
      %v4276 = vmul.f32 %v4212, %v4268
      %v4277 = vmul.f32 %v4213, %v4269
      %v4278 = vmul.f32 %v4214, %v4270
      %v4279 = vmul.f32 %v4215, %v4271
      %v4280 = vmul.f32 %v4216, %v4272
      %v4281 = vmul.f32 %v4217, %v4273
      %v4282 = vpack.c.bf16 %v4275, %v4274
      %v4283 = vpack.c.bf16 %v4277, %v4276
      %v4284 = vpack.c.bf16 %v4279, %v4278
      %v4285 = vpack.c.bf16 %v4281, %v4280
      %v4286 = vld [vmem:[%s9] sm:$0xff]
      %v4287 = vld [vmem:[%s9 + $0x8] sm:$0xff]
      %v4288 = vld [vmem:[%s9 + $0x10] sm:$0xff]
      %v4289 = vld [vmem:[%s9 + $0x18] sm:$0xff]
      %v4290 = vld [vmem:[%s9 + $0x20] sm:$0xff]
      %v4291 = vld [vmem:[%s9 + $0x28] sm:$0xff]
      %v4292 = vld [vmem:[%s9 + $0x30] sm:$0xff]
      %v4293 = vld [vmem:[%s9 + $0x38] sm:$0xff]
      %v4294 = vld [vmem:[%s4] ss:$4 sm:$0x3]
      %v4296 = vperm.slane %v4294, 0
      %v4297 = vperm.slane %v4294, 1
      %v4308 = vunpack.c.l.b16 %v4286
      %v4309 = vunpack.c.h.b16 %v4286
      %v4310 = vunpack.c.l.b16 %v4287
      %v4311 = vunpack.c.h.b16 %v4287
      %v4312 = vunpack.c.l.b16 %v4288
      %v4313 = vunpack.c.h.b16 %v4288
      %v4314 = vunpack.c.l.b16 %v4289
      %v4315 = vunpack.c.h.b16 %v4289
      %v4316 = vunpack.c.l.b16 %v4290
      %v4317 = vunpack.c.h.b16 %v4290
      %v4318 = vunpack.c.l.b16 %v4291
      %v4319 = vunpack.c.h.b16 %v4291
      %v4320 = vunpack.c.l.b16 %v4292
      %v4321 = vunpack.c.h.b16 %v4292
      %v4322 = vunpack.c.l.b16 %v4293
      %v4323 = vunpack.c.h.b16 %v4293
      %v4324 = vpack.c.b16 %v4310, %v4308
      %v4325 = vpack.c.b16 %v4311, %v4309
      %v4326 = vpack.c.b16 %v4314, %v4312
      %v4327 = vpack.c.b16 %v4315, %v4313
      %v4328 = vpack.c.b16 %v4318, %v4316
      %v4329 = vpack.c.b16 %v4319, %v4317
      %v4330 = vpack.c.b16 %v4322, %v4320
      %v4331 = vpack.c.b16 %v4323, %v4321
      %v4341 = vsel %vm454, %v4282, 0
      %v4344 = vsel %vm454, %v4283, 0
      %v4347 = vsel %vm454, %v4284, 0
      %v4350 = vsel %vm454, %v4285, 0
      %4352 = vmatpush.bf16.msra.mxu0 0
      %4353 = vmatpush.bf16.msra.mxu0 0
      %4354 = vmatpush.bf16.msra.mxu0 0
      %4355 = vmatpush.bf16.msra.mxu0 0
      %4356 = vmatpush.bf16.msra.mxu0 %v4330
      %4357 = vmatpush.bf16.msra.mxu0 %v4328
      %4358 = vmatpush.bf16.msra.mxu0 %v4326
      %4359 = vmatpush.bf16.msra.mxu0 %v4324
      %4360 = vmatmul.bf16.gmra.mxu0 %v4341
      %v4361 = vpop.f32.mrf.mxu0
      %v4362 = vadd.f32 %v4296, %v4361
      %v4363 = vpop.f32.mrf.mxu0
      %v4364 = vadd.f32 %v4296, %v4363
      %4365 = vmatmul.bf16.gmra.mxu0 %v4344
      %v4366 = vpop.f32.mrf.mxu0
      %v4367 = vadd.f32 %v4296, %v4366
      %v4368 = vpop.f32.mrf.mxu0
      %v4369 = vadd.f32 %v4296, %v4368
      %4370 = vmatmul.bf16.gmra.mxu0 %v4347
      %v4371 = vpop.f32.mrf.mxu0
      %v4372 = vadd.f32 %v4296, %v4371
      %v4373 = vpop.f32.mrf.mxu0
      %v4374 = vadd.f32 %v4296, %v4373
      %4375 = vmatmul.bf16.gmra.mxu0 %v4350
      %v4376 = vpop.f32.mrf.mxu0
      %v4377 = vadd.f32 %v4296, %v4376
      %v4378 = vpop.f32.mrf.mxu0
      %v4379 = vadd.f32 %v4296, %v4378
      %4380 = vdwg.mxu0
      %4381 = vmatpush.bf16.msra.mxu0 0
      %4382 = vmatpush.bf16.msra.mxu0 0
      %4383 = vmatpush.bf16.msra.mxu0 0
      %4384 = vmatpush.bf16.msra.mxu0 0
      %4385 = vmatpush.bf16.msra.mxu0 %v4331
      %4386 = vmatpush.bf16.msra.mxu0 %v4329
      %4387 = vmatpush.bf16.msra.mxu0 %v4327
      %4388 = vmatpush.bf16.msra.mxu0 %v4325
      %4389 = vmatmul.bf16.gmra.mxu0 %v4341
      %v4390 = vpop.f32.mrf.mxu0
      %v4391 = vadd.f32 %v4297, %v4390
      %v4392 = vpop.f32.mrf.mxu0
      %v4393 = vadd.f32 %v4297, %v4392
      %4394 = vmatmul.bf16.gmra.mxu0 %v4344
      %v4395 = vpop.f32.mrf.mxu0
      %v4396 = vadd.f32 %v4297, %v4395
      %v4397 = vpop.f32.mrf.mxu0
      %v4398 = vadd.f32 %v4297, %v4397
      %4399 = vmatmul.bf16.gmra.mxu0 %v4347
      %v4400 = vpop.f32.mrf.mxu0
      %v4401 = vadd.f32 %v4297, %v4400
      %v4402 = vpop.f32.mrf.mxu0
      %v4403 = vadd.f32 %v4297, %v4402
      %4404 = vmatmul.bf16.gmra.mxu0 %v4350
      %v4405 = vpop.f32.mrf.mxu0
      %v4406 = vadd.f32 %v4297, %v4405
      %v4407 = vpop.f32.mrf.mxu0
      %v4408 = vadd.f32 %v4297, %v4407
      %4409 = vdwg.mxu0
      %s4410 = scalar_lea.vmem %s4, 1
      %v4411 = vld [vmem:[%s4410] ss:$4 sm:$0x3]
      %v4413 = vperm.slane %v4411, 0
      %v4414 = vperm.slane %v4411, 1
      %v4417 = vmul.f32 %v4362, %v4413
      %v4418 = vmul.f32 %v4391, %v4414
      %v4419 = vmul.f32 %v4364, %v4413
      %v4420 = vmul.f32 %v4393, %v4414
      %v4421 = vmul.f32 %v4367, %v4413
      %v4422 = vmul.f32 %v4396, %v4414
      %v4423 = vmul.f32 %v4369, %v4413
      %v4424 = vmul.f32 %v4398, %v4414
      %v4425 = vmul.f32 %v4372, %v4413
      %v4426 = vmul.f32 %v4401, %v4414
      %v4427 = vmul.f32 %v4374, %v4413
      %v4428 = vmul.f32 %v4403, %v4414
      %v4429 = vmul.f32 %v4377, %v4413
      %v4430 = vmul.f32 %v4406, %v4414
      %v4431 = vmul.f32 %v4379, %v4413
      %v4432 = vmul.f32 %v4408, %v4414
      %s4433 = scalar_lea.vmem %s4, 2
      %v4434 = vld [vmem:[%s4433] ss:$4 sm:$0x3]
      %v4436 = vperm.slane %v4434, 0
      %v4437 = vperm.slane %v4434, 1
      %v4440 = vadd.f32 %v4417, %v4436
      %v4441 = vadd.f32 %v4418, %v4437
      %v4442 = vadd.f32 %v4419, %v4436
      %v4443 = vadd.f32 %v4420, %v4437
      %v4444 = vadd.f32 %v4421, %v4436
      %v4445 = vadd.f32 %v4422, %v4437
      %v4446 = vadd.f32 %v4423, %v4436
      %v4447 = vadd.f32 %v4424, %v4437
      %v4448 = vadd.f32 %v4425, %v4436
      %v4449 = vadd.f32 %v4426, %v4437
      %v4450 = vadd.f32 %v4427, %v4436
      %v4451 = vadd.f32 %v4428, %v4437
      %v4452 = vadd.f32 %v4429, %v4436
      %v4453 = vadd.f32 %v4430, %v4437
      %v4454 = vadd.f32 %v4431, %v4436
      %v4455 = vadd.f32 %v4432, %v4437
      %v4456 = vmul.f32 %v4440, 0.5
      %v4457 = vmul.f32 %v4441, 0.5
      %v4458 = vmul.f32 %v4442, 0.5
      %v4459 = vmul.f32 %v4443, 0.5
      %v4460 = vmul.f32 %v4444, 0.5
      %v4461 = vmul.f32 %v4445, 0.5
      %v4462 = vmul.f32 %v4446, 0.5
      %v4463 = vmul.f32 %v4447, 0.5
      %v4464 = vmul.f32 %v4448, 0.5
      %v4465 = vmul.f32 %v4449, 0.5
      %v4466 = vmul.f32 %v4450, 0.5
      %v4467 = vmul.f32 %v4451, 0.5
      %v4468 = vmul.f32 %v4452, 0.5
      %v4469 = vmul.f32 %v4453, 0.5
      %v4470 = vmul.f32 %v4454, 0.5
      %v4471 = vmul.f32 %v4455, 0.5
      %v4472 = vmul.f32 %v4440, 0.044715
      %v4473 = vmul.f32 %v4441, 0.044715
      %v4474 = vmul.f32 %v4442, 0.044715
      %v4475 = vmul.f32 %v4443, 0.044715
      %v4476 = vmul.f32 %v4444, 0.044715
      %v4477 = vmul.f32 %v4445, 0.044715
      %v4478 = vmul.f32 %v4446, 0.044715
      %v4479 = vmul.f32 %v4447, 0.044715
      %v4480 = vmul.f32 %v4448, 0.044715
      %v4481 = vmul.f32 %v4449, 0.044715
      %v4482 = vmul.f32 %v4450, 0.044715
      %v4483 = vmul.f32 %v4451, 0.044715
      %v4484 = vmul.f32 %v4452, 0.044715
      %v4485 = vmul.f32 %v4453, 0.044715
      %v4486 = vmul.f32 %v4454, 0.044715
      %v4487 = vmul.f32 %v4455, 0.044715
      %v4488 = vmul.f32 %v4472, %v4440
      %v4489 = vmul.f32 %v4473, %v4441
      %v4490 = vmul.f32 %v4474, %v4442
      %v4491 = vmul.f32 %v4475, %v4443
      %v4492 = vmul.f32 %v4476, %v4444
      %v4493 = vmul.f32 %v4477, %v4445
      %v4494 = vmul.f32 %v4478, %v4446
      %v4495 = vmul.f32 %v4479, %v4447
      %v4496 = vmul.f32 %v4480, %v4448
      %v4497 = vmul.f32 %v4481, %v4449
      %v4498 = vmul.f32 %v4482, %v4450
      %v4499 = vmul.f32 %v4483, %v4451
      %v4500 = vmul.f32 %v4484, %v4452
      %v4501 = vmul.f32 %v4485, %v4453
      %v4502 = vmul.f32 %v4486, %v4454
      %v4503 = vmul.f32 %v4487, %v4455
      %v4504 = vmul.f32 %v4488, %v4440
      %v4505 = vmul.f32 %v4489, %v4441
      %v4506 = vmul.f32 %v4490, %v4442
      %v4507 = vmul.f32 %v4491, %v4443
      %v4508 = vmul.f32 %v4492, %v4444
      %v4509 = vmul.f32 %v4493, %v4445
      %v4510 = vmul.f32 %v4494, %v4446
      %v4511 = vmul.f32 %v4495, %v4447
      %v4512 = vmul.f32 %v4496, %v4448
      %v4513 = vmul.f32 %v4497, %v4449
      %v4514 = vmul.f32 %v4498, %v4450
      %v4515 = vmul.f32 %v4499, %v4451
      %v4516 = vmul.f32 %v4500, %v4452
      %v4517 = vmul.f32 %v4501, %v4453
      %v4518 = vmul.f32 %v4502, %v4454
      %v4519 = vmul.f32 %v4503, %v4455
      %v4520 = vadd.f32 %v4440, %v4504
      %v4521 = vadd.f32 %v4441, %v4505
      %v4522 = vadd.f32 %v4442, %v4506
      %v4523 = vadd.f32 %v4443, %v4507
      %v4524 = vadd.f32 %v4444, %v4508
      %v4525 = vadd.f32 %v4445, %v4509
      %v4526 = vadd.f32 %v4446, %v4510
      %v4527 = vadd.f32 %v4447, %v4511
      %v4528 = vadd.f32 %v4448, %v4512
      %v4529 = vadd.f32 %v4449, %v4513
      %v4530 = vadd.f32 %v4450, %v4514
      %v4531 = vadd.f32 %v4451, %v4515
      %v4532 = vadd.f32 %v4452, %v4516
      %v4533 = vadd.f32 %v4453, %v4517
      %v4534 = vadd.f32 %v4454, %v4518
      %v4535 = vadd.f32 %v4455, %v4519
      %v4536 = vmul.f32 %v4520, 0.7978846
      %v4537 = vmul.f32 %v4521, 0.7978846
      %v4538 = vmul.f32 %v4522, 0.7978846
      %v4539 = vmul.f32 %v4523, 0.7978846
      %v4540 = vmul.f32 %v4524, 0.7978846
      %v4541 = vmul.f32 %v4525, 0.7978846
      %v4542 = vmul.f32 %v4526, 0.7978846
      %v4543 = vmul.f32 %v4527, 0.7978846
      %v4544 = vmul.f32 %v4528, 0.7978846
      %v4545 = vmul.f32 %v4529, 0.7978846
      %v4546 = vmul.f32 %v4530, 0.7978846
      %v4547 = vmul.f32 %v4531, 0.7978846
      %v4548 = vmul.f32 %v4532, 0.7978846
      %v4549 = vmul.f32 %v4533, 0.7978846
      %v4550 = vmul.f32 %v4534, 0.7978846
      %v4551 = vmul.f32 %v4535, 0.7978846
      %v4552 = vtanh.pop %v4536
      %v4553 = vtanh.pop %v4537
      %v4554 = vtanh.pop %v4538
      %v4555 = vtanh.pop %v4539
      %v4556 = vtanh.pop %v4540
      %v4557 = vtanh.pop %v4541
      %v4558 = vtanh.pop %v4542
      %v4559 = vtanh.pop %v4543
      %v4560 = vtanh.pop %v4544
      %v4561 = vtanh.pop %v4545
      %v4562 = vtanh.pop %v4546
      %v4563 = vtanh.pop %v4547
      %v4564 = vtanh.pop %v4548
      %v4565 = vtanh.pop %v4549
      %v4566 = vtanh.pop %v4550
      %v4567 = vtanh.pop %v4551
      %v4568 = vadd.f32 %v4552, 1.0
      %v4569 = vadd.f32 %v4553, 1.0
      %v4570 = vadd.f32 %v4554, 1.0
      %v4571 = vadd.f32 %v4555, 1.0
      %v4572 = vadd.f32 %v4556, 1.0
      %v4573 = vadd.f32 %v4557, 1.0
      %v4574 = vadd.f32 %v4558, 1.0
      %v4575 = vadd.f32 %v4559, 1.0
      %v4576 = vadd.f32 %v4560, 1.0
      %v4577 = vadd.f32 %v4561, 1.0
      %v4578 = vadd.f32 %v4562, 1.0
      %v4579 = vadd.f32 %v4563, 1.0
      %v4580 = vadd.f32 %v4564, 1.0
      %v4581 = vadd.f32 %v4565, 1.0
      %v4582 = vadd.f32 %v4566, 1.0
      %v4583 = vadd.f32 %v4567, 1.0
      %v4584 = vmul.f32 %v4456, %v4568
      %v4585 = vmul.f32 %v4457, %v4569
      %v4586 = vmul.f32 %v4458, %v4570
      %v4587 = vmul.f32 %v4459, %v4571
      %v4588 = vmul.f32 %v4460, %v4572
      %v4589 = vmul.f32 %v4461, %v4573
      %v4590 = vmul.f32 %v4462, %v4574
      %v4591 = vmul.f32 %v4463, %v4575
      %v4592 = vmul.f32 %v4464, %v4576
      %v4593 = vmul.f32 %v4465, %v4577
      %v4594 = vmul.f32 %v4466, %v4578
      %v4595 = vmul.f32 %v4467, %v4579
      %v4596 = vmul.f32 %v4468, %v4580
      %v4597 = vmul.f32 %v4469, %v4581
      %v4598 = vmul.f32 %v4470, %v4582
      %v4599 = vmul.f32 %v4471, %v4583
      %v4600 = vpack.c.bf16 %v4586, %v4584
      %v4601 = vpack.c.bf16 %v4587, %v4585
      %v4602 = vpack.c.bf16 %v4590, %v4588
      %v4603 = vpack.c.bf16 %v4591, %v4589
      %v4604 = vpack.c.bf16 %v4594, %v4592
      %v4605 = vpack.c.bf16 %v4595, %v4593
      %v4606 = vpack.c.bf16 %v4598, %v4596
      %v4607 = vpack.c.bf16 %v4599, %v4597
      %v4608 = vld [vmem:[%s10] sm:$0xf]
      %v4609 = vld [vmem:[%s10 + $0x4] sm:$0xf]
      %v4610 = vld [vmem:[%s10 + $0x8] sm:$0xf]
      %v4611 = vld [vmem:[%s10 + $0xc] sm:$0xf]
      %v4612 = vld [vmem:[%s10 + $0x10] sm:$0xf]
      %v4613 = vld [vmem:[%s10 + $0x14] sm:$0xf]
      %v4614 = vld [vmem:[%s10 + $0x18] sm:$0xf]
      %v4615 = vld [vmem:[%s10 + $0x1c] sm:$0xf]
      %v4616 = vld [vmem:[%s10 + $0x20] sm:$0xf]
      %v4617 = vld [vmem:[%s10 + $0x24] sm:$0xf]
      %v4618 = vld [vmem:[%s10 + $0x28] sm:$0xf]
      %v4619 = vld [vmem:[%s10 + $0x2c] sm:$0xf]
      %v4620 = vld [vmem:[%s10 + $0x30] sm:$0xf]
      %v4621 = vld [vmem:[%s10 + $0x34] sm:$0xf]
      %v4622 = vld [vmem:[%s10 + $0x38] sm:$0xf]
      %v4623 = vld [vmem:[%s10 + $0x3c] sm:$0xf]
      %v4624 = vld [vmem:[%s10 + $0x40] sm:$0xf]
      %v4625 = vld [vmem:[%s10 + $0x44] sm:$0xf]
      %v4626 = vld [vmem:[%s10 + $0x48] sm:$0xf]
      %v4627 = vld [vmem:[%s10 + $0x4c] sm:$0xf]
      %v4628 = vld [vmem:[%s10 + $0x50] sm:$0xf]
      %v4629 = vld [vmem:[%s10 + $0x54] sm:$0xf]
      %v4630 = vld [vmem:[%s10 + $0x58] sm:$0xf]
      %v4631 = vld [vmem:[%s10 + $0x5c] sm:$0xf]
      %v4632 = vld [vmem:[%s10 + $0x60] sm:$0xf]
      %v4633 = vld [vmem:[%s10 + $0x64] sm:$0xf]
      %v4634 = vld [vmem:[%s10 + $0x68] sm:$0xf]
      %v4635 = vld [vmem:[%s10 + $0x6c] sm:$0xf]
      %v4636 = vld [vmem:[%s10 + $0x70] sm:$0xf]
      %v4637 = vld [vmem:[%s10 + $0x74] sm:$0xf]
      %v4638 = vld [vmem:[%s10 + $0x78] sm:$0xf]
      %v4639 = vld [vmem:[%s10 + $0x7c] sm:$0xf]
      %v4640 = vld [vmem:[%s2 + $0x7] sm:$0x1]
      %v4641 = vperm.slane %v4640, 0
      %v4674 = vunpack.c.l.b16 %v4608
      %v4675 = vunpack.c.l.b16 %v4609
      %v4676 = vunpack.c.l.b16 %v4610
      %v4677 = vunpack.c.l.b16 %v4611
      %v4678 = vunpack.c.l.b16 %v4612
      %v4679 = vunpack.c.l.b16 %v4613
      %v4680 = vunpack.c.l.b16 %v4614
      %v4681 = vunpack.c.l.b16 %v4615
      %v4682 = vunpack.c.l.b16 %v4616
      %v4683 = vunpack.c.l.b16 %v4617
      %v4684 = vunpack.c.l.b16 %v4618
      %v4685 = vunpack.c.l.b16 %v4619
      %v4686 = vunpack.c.l.b16 %v4620
      %v4687 = vunpack.c.l.b16 %v4621
      %v4688 = vunpack.c.l.b16 %v4622
      %v4689 = vunpack.c.l.b16 %v4623
      %v4690 = vunpack.c.l.b16 %v4624
      %v4691 = vunpack.c.l.b16 %v4625
      %v4692 = vunpack.c.l.b16 %v4626
      %v4693 = vunpack.c.l.b16 %v4627
      %v4694 = vunpack.c.l.b16 %v4628
      %v4695 = vunpack.c.l.b16 %v4629
      %v4696 = vunpack.c.l.b16 %v4630
      %v4697 = vunpack.c.l.b16 %v4631
      %v4698 = vunpack.c.l.b16 %v4632
      %v4699 = vunpack.c.l.b16 %v4633
      %v4700 = vunpack.c.l.b16 %v4634
      %v4701 = vunpack.c.l.b16 %v4635
      %v4702 = vunpack.c.l.b16 %v4636
      %v4703 = vunpack.c.l.b16 %v4637
      %v4704 = vunpack.c.l.b16 %v4638
      %v4705 = vunpack.c.l.b16 %v4639
      %v4706 = vpack.c.b16 %v4675, %v4674
      %v4707 = vpack.c.b16 %v4677, %v4676
      %v4708 = vpack.c.b16 %v4679, %v4678
      %v4709 = vpack.c.b16 %v4681, %v4680
      %v4710 = vpack.c.b16 %v4683, %v4682
      %v4711 = vpack.c.b16 %v4685, %v4684
      %v4712 = vpack.c.b16 %v4687, %v4686
      %v4713 = vpack.c.b16 %v4689, %v4688
      %v4714 = vpack.c.b16 %v4691, %v4690
      %v4715 = vpack.c.b16 %v4693, %v4692
      %v4716 = vpack.c.b16 %v4695, %v4694
      %v4717 = vpack.c.b16 %v4697, %v4696
      %v4718 = vpack.c.b16 %v4699, %v4698
      %v4719 = vpack.c.b16 %v4701, %v4700
      %v4720 = vpack.c.b16 %v4703, %v4702
      %v4721 = vpack.c.b16 %v4705, %v4704
      %4738 = vmatpush.bf16.msra.mxu0 %v4713
      %4739 = vmatpush.bf16.msra.mxu0 %v4712
      %4740 = vmatpush.bf16.msra.mxu0 %v4711
      %4741 = vmatpush.bf16.msra.mxu0 %v4710
      %4742 = vmatpush.bf16.msra.mxu0 %v4709
      %4743 = vmatpush.bf16.msra.mxu0 %v4708
      %4744 = vmatpush.bf16.msra.mxu0 %v4707
      %4745 = vmatpush.bf16.msra.mxu0 %v4706
      %4746 = vmatmul.bf16.gmra.mxu0 %v4600
      %v4747 = vpop.f32.mrf.mxu0
      %v4748 = vadd.f32 %v4641, %v4747
      %v4749 = vpop.f32.mrf.mxu0
      %v4750 = vadd.f32 %v4641, %v4749
      %4751 = vmatmul.bf16.gmra.mxu0 %v4602
      %v4752 = vpop.f32.mrf.mxu0
      %v4753 = vadd.f32 %v4641, %v4752
      %v4754 = vpop.f32.mrf.mxu0
      %v4755 = vadd.f32 %v4641, %v4754
      %4756 = vmatmul.bf16.gmra.mxu0 %v4604
      %v4757 = vpop.f32.mrf.mxu0
      %v4758 = vadd.f32 %v4641, %v4757
      %v4759 = vpop.f32.mrf.mxu0
      %v4760 = vadd.f32 %v4641, %v4759
      %4761 = vmatmul.bf16.gmra.mxu0 %v4606
      %v4762 = vpop.f32.mrf.mxu0
      %v4763 = vadd.f32 %v4641, %v4762
      %v4764 = vpop.f32.mrf.mxu0
      %v4765 = vadd.f32 %v4641, %v4764
      %4766 = vdwg.mxu0
      %4767 = vmatpush.bf16.msra.mxu0 %v4721
      %4768 = vmatpush.bf16.msra.mxu0 %v4720
      %4769 = vmatpush.bf16.msra.mxu0 %v4719
      %4770 = vmatpush.bf16.msra.mxu0 %v4718
      %4771 = vmatpush.bf16.msra.mxu0 %v4717
      %4772 = vmatpush.bf16.msra.mxu0 %v4716
      %4773 = vmatpush.bf16.msra.mxu0 %v4715
      %4774 = vmatpush.bf16.msra.mxu0 %v4714
      %4775 = vmatmul.bf16.gmra.mxu0 %v4601
      %v4776 = vpop.f32.mrf.mxu0
      %v4777 = vadd.f32 %v4748, %v4776
      %v4778 = vpop.f32.mrf.mxu0
      %v4779 = vadd.f32 %v4750, %v4778
      %4780 = vmatmul.bf16.gmra.mxu0 %v4603
      %v4781 = vpop.f32.mrf.mxu0
      %v4782 = vadd.f32 %v4753, %v4781
      %v4783 = vpop.f32.mrf.mxu0
      %v4784 = vadd.f32 %v4755, %v4783
      %4785 = vmatmul.bf16.gmra.mxu0 %v4605
      %v4786 = vpop.f32.mrf.mxu0
      %v4787 = vadd.f32 %v4758, %v4786
      %v4788 = vpop.f32.mrf.mxu0
      %v4789 = vadd.f32 %v4760, %v4788
      %4790 = vmatmul.bf16.gmra.mxu0 %v4607
      %v4791 = vpop.f32.mrf.mxu0
      %v4792 = vadd.f32 %v4763, %v4791
      %v4793 = vpop.f32.mrf.mxu0
      %v4794 = vadd.f32 %v4765, %v4793
      %4795 = vdwg.mxu0
      %v4796 = vld [vmem:[%s2 + $0x8] sm:$0x1]
      %v4797 = vperm.slane %v4796, 0
      %v4798 = vmul.f32 %v4777, %v4797
      %v4799 = vmul.f32 %v4779, %v4797
      %v4800 = vmul.f32 %v4782, %v4797
      %v4801 = vmul.f32 %v4784, %v4797
      %v4802 = vmul.f32 %v4787, %v4797
      %v4803 = vmul.f32 %v4789, %v4797
      %v4804 = vmul.f32 %v4792, %v4797
      %v4805 = vmul.f32 %v4794, %v4797
      %v4806 = vld [vmem:[%s2 + $0x9] sm:$0x1]
      %v4807 = vperm.slane %v4806, 0
      %v4808 = vadd.f32 %v4798, %v4807
      %v4809 = vadd.f32 %v4799, %v4807
      %v4810 = vadd.f32 %v4800, %v4807
      %v4811 = vadd.f32 %v4801, %v4807
      %v4812 = vadd.f32 %v4802, %v4807
      %v4813 = vadd.f32 %v4803, %v4807
      %v4814 = vadd.f32 %v4804, %v4807
      %v4815 = vadd.f32 %v4805, %v4807
      %v4816 = vmul.f32 %v4808, 0.5
      %v4817 = vmul.f32 %v4809, 0.5
      %v4818 = vmul.f32 %v4810, 0.5
      %v4819 = vmul.f32 %v4811, 0.5
      %v4820 = vmul.f32 %v4812, 0.5
      %v4821 = vmul.f32 %v4813, 0.5
      %v4822 = vmul.f32 %v4814, 0.5
      %v4823 = vmul.f32 %v4815, 0.5
      %v4824 = vmul.f32 %v4808, 0.044715
      %v4825 = vmul.f32 %v4809, 0.044715
      %v4826 = vmul.f32 %v4810, 0.044715
      %v4827 = vmul.f32 %v4811, 0.044715
      %v4828 = vmul.f32 %v4812, 0.044715
      %v4829 = vmul.f32 %v4813, 0.044715
      %v4830 = vmul.f32 %v4814, 0.044715
      %v4831 = vmul.f32 %v4815, 0.044715
      %v4832 = vmul.f32 %v4824, %v4808
      %v4833 = vmul.f32 %v4825, %v4809
      %v4834 = vmul.f32 %v4826, %v4810
      %v4835 = vmul.f32 %v4827, %v4811
      %v4836 = vmul.f32 %v4828, %v4812
      %v4837 = vmul.f32 %v4829, %v4813
      %v4838 = vmul.f32 %v4830, %v4814
      %v4839 = vmul.f32 %v4831, %v4815
      %v4840 = vmul.f32 %v4832, %v4808
      %v4841 = vmul.f32 %v4833, %v4809
      %v4842 = vmul.f32 %v4834, %v4810
      %v4843 = vmul.f32 %v4835, %v4811
      %v4844 = vmul.f32 %v4836, %v4812
      %v4845 = vmul.f32 %v4837, %v4813
      %v4846 = vmul.f32 %v4838, %v4814
      %v4847 = vmul.f32 %v4839, %v4815
      %v4848 = vadd.f32 %v4808, %v4840
      %v4849 = vadd.f32 %v4809, %v4841
      %v4850 = vadd.f32 %v4810, %v4842
      %v4851 = vadd.f32 %v4811, %v4843
      %v4852 = vadd.f32 %v4812, %v4844
      %v4853 = vadd.f32 %v4813, %v4845
      %v4854 = vadd.f32 %v4814, %v4846
      %v4855 = vadd.f32 %v4815, %v4847
      %v4856 = vmul.f32 %v4848, 0.7978846
      %v4857 = vmul.f32 %v4849, 0.7978846
      %v4858 = vmul.f32 %v4850, 0.7978846
      %v4859 = vmul.f32 %v4851, 0.7978846
      %v4860 = vmul.f32 %v4852, 0.7978846
      %v4861 = vmul.f32 %v4853, 0.7978846
      %v4862 = vmul.f32 %v4854, 0.7978846
      %v4863 = vmul.f32 %v4855, 0.7978846
      %v4864 = vtanh.pop %v4856
      %v4865 = vtanh.pop %v4857
      %v4866 = vtanh.pop %v4858
      %v4867 = vtanh.pop %v4859
      %v4868 = vtanh.pop %v4860
      %v4869 = vtanh.pop %v4861
      %v4870 = vtanh.pop %v4862
      %v4871 = vtanh.pop %v4863
      %v4872 = vadd.f32 %v4864, 1.0
      %v4873 = vadd.f32 %v4865, 1.0
      %v4874 = vadd.f32 %v4866, 1.0
      %v4875 = vadd.f32 %v4867, 1.0
      %v4876 = vadd.f32 %v4868, 1.0
      %v4877 = vadd.f32 %v4869, 1.0
      %v4878 = vadd.f32 %v4870, 1.0
      %v4879 = vadd.f32 %v4871, 1.0
      %v4880 = vmul.f32 %v4816, %v4872
      %v4881 = vmul.f32 %v4817, %v4873
      %v4882 = vmul.f32 %v4818, %v4874
      %v4883 = vmul.f32 %v4819, %v4875
      %v4884 = vmul.f32 %v4820, %v4876
      %v4885 = vmul.f32 %v4821, %v4877
      %v4886 = vmul.f32 %v4822, %v4878
      %v4887 = vmul.f32 %v4823, %v4879
      %v4888 = vadd.f32 %v2659, %v4880
      %v4889 = vadd.f32 %v2660, %v4881
      %v4890 = vadd.f32 %v2661, %v4882
      %v4891 = vadd.f32 %v2662, %v4883
      %v4892 = vadd.f32 %v2663, %v4884
      %v4893 = vadd.f32 %v2664, %v4885
      %v4894 = vadd.f32 %v2665, %v4886
      %v4895 = vadd.f32 %v2666, %v4887
      %4896 = vxpose.xlu0.b32.start [1/16] %v4888, 128
      %4897 = vxpose.xlu0.b32.cont [2/16] %v4889, 128
      %4898 = vxpose.xlu0.b32.cont [3/16] %v4890, 128
      %4899 = vxpose.xlu0.b32.cont [4/16] %v4891, 128
      %4900 = vxpose.xlu0.b32.cont [5/16] %v4892, 128
      %4901 = vxpose.xlu0.b32.cont [6/16] %v4893, 128
      %4902 = vxpose.xlu0.b32.cont [7/16] %v4894, 128
      %4903 = vxpose.xlu0.b32.cont [8/16] %v4895, 128
      %4904 = vxpose.xlu0.b32.cont [9/16] 0.0, 128
      %4905 = vxpose.xlu0.b32.cont [10/16] 0.0, 128
      %4906 = vxpose.xlu0.b32.cont [11/16] 0.0, 128
      %4907 = vxpose.xlu0.b32.cont [12/16] 0.0, 128
      %4908 = vxpose.xlu0.b32.cont [13/16] 0.0, 128
      %4909 = vxpose.xlu0.b32.cont [14/16] 0.0, 128
      %4910 = vxpose.xlu0.b32.cont [15/16] 0.0, 128
      %4911 = vxpose.xlu0.b32.end [16/16] 0.0, 128
      %v4912 = vpop.trf.xlu0
      %v4913 = vpop.trf.xlu0
      %v4914 = vpop.trf.xlu0
      %v4915 = vpop.trf.xlu0
      %v4916 = vpop.trf.xlu0
      %v4917 = vpop.trf.xlu0
      %v4918 = vpop.trf.xlu0
      %v4919 = vpop.trf.xlu0
      %v4920 = vpop.trf.xlu0
      %v4921 = vpop.trf.xlu0
      %v4922 = vpop.trf.xlu0
      %v4923 = vpop.trf.xlu0
      %v4924 = vpop.trf.xlu0
      %v4925 = vpop.trf.xlu0
      %v4926 = vpop.trf.xlu0
      %v4927 = vpop.trf.xlu0
      %4928 = vst.msk [vmem:[%s406] sm:$0xff] %vm454, %v4912
      %4929 = vst.msk [vmem:[%s406 + $0x8] sm:$0xff] %vm454, %v4913
      %4930 = vst.msk [vmem:[%s406 + $0x10] sm:$0xff] %vm454, %v4914
      %4931 = vst.msk [vmem:[%s406 + $0x18] sm:$0xff] %vm454, %v4915
      %4932 = vst.msk [vmem:[%s406 + $0x20] sm:$0xff] %vm454, %v4916
      %4933 = vst.msk [vmem:[%s406 + $0x28] sm:$0xff] %vm454, %v4917
      %4934 = vst.msk [vmem:[%s406 + $0x30] sm:$0xff] %vm454, %v4918
      %4935 = vst.msk [vmem:[%s406 + $0x38] sm:$0xff] %vm454, %v4919
      %p4936 = scmp.lt.s32.totalorder %s22, 1
      %s4937 = scalar_select %p4936, %s22, 1
      %s4938 = smul.addr %s4937, 8
      %s4939 = smul.addr %s4938, 8
      %s4940 = scalar_lea.vmem %s11, %s4939
      // Predicated region
      $region65: #{newde_block_forward.1} parent=63 // pred_check
        %p4941 = pneg %p281
      $region66: #{newde_block_forward.1} parent=63 // pred_check_branch
        %4943 = sbr.rel (%p4941) target = $region68
      $region67: #{newde_block_forward.1} parent=63 // pred_region
        _
      $region68: #{newde_block_forward.1} parent=63 // pred_fallthru
        _
    $region64: #{newde_block_forward.1} parent=5 // pred_fallthru
      _
    %p4944 = scmp.le.s32.totalorder 2, %s17
    // Predicated region
    $region69: #{newde_block_forward.1} parent=5 // pred_check
      %p4945 = pneg %p4944
    $region70: #{newde_block_forward.1} parent=5 // pred_check_branch
      %4947 = sbr.rel (%p4945) target = $region72
    $region71: #{newde_block_forward.1} parent=5 // pred_region
      %s4948 = ssub.s32 %s17, 2
      // Predicated region
      $region73: #{newde_block_forward.1} parent=71 // pred_check
        %p4949 = pneg %p287
      $region74: #{newde_block_forward.1} parent=71 // pred_check_branch
        %4951 = sbr.rel (%p4949) target = $region76
      $region75: #{newde_block_forward.1} parent=71 // pred_region
        %p4952 = scmp.lt.s32.totalorder %s23, 1
        %s4953 = scalar_select %p4952, %s23, 1
        %s4954 = smul.addr %s4953, 8
        %s4955 = smul.addr %s4954, 8
        %s4956 = scalar_lea.vmem %s11, %s4955
      $region76: #{newde_block_forward.1} parent=71 // pred_fallthru
        _
    $region72: #{newde_block_forward.1} parent=5 // pred_fallthru
      _
  $region6: #{newde_block_forward.1} parent=0 // loop_footer
    %s21 = sadd.s32 1, %s17
  $region7: #{newde_block_forward.1} parent=0 // loop_footer_branch
    %16 = sbr.rel target = $region3
  $region8: #{newde_block_forward.1} parent=0 // loop_exit
    _

</llo_original>
